<compile_context>
chip_gen: v7x
topology: tpu7x:2x2x1
jax: 0.10.0
libtpu: 0.0.40
codegen_flags: <defaults>
</compile_context>

<pallas_src>
import functools

import jax
import jax.numpy as jnp
from jax import lax
from jax.experimental import pallas as pl
from jax.experimental.pallas import tpu as pltpu

EXPANSION = 4
BN_EPS = 1e-5
LANE = 128                      # channel (lane) alignment


def _hw_config():
    """Generation-aware row-tile target and scoped-VMEM budget."""
    row_tile, vmem_limit = 512, 48 * 1024 * 1024          # safe everywhere
    try:
        cap = pltpu.get_tpu_info().vmem_capacity_bytes
        if cap >= 100 * 1024 * 1024:                       # v5e / v6e: 128 MiB
            row_tile, vmem_limit = 1024, 96 * 1024 * 1024
        else:                                              # v7x: 64 MiB per TC
            row_tile, vmem_limit = 512, 48 * 1024 * 1024
    except Exception:
        pass
    return row_tile, vmem_limit


ROW_TILE, VMEM_LIMIT = _hw_config()


# ---------------------------------------------------------------------------
# small helpers
# ---------------------------------------------------------------------------
def _round_up(x, m):
    return (x + m - 1) // m * m


def _cparams(sem):
    return pltpu.CompilerParams(dimension_semantics=sem,
                                vmem_limit_bytes=VMEM_LIMIT)


def _pad_axis(a, axis, size):
    if a.shape[axis] == size:
        return a
    pads = [(0, 0)] * a.ndim
    pads[axis] = (0, size - a.shape[axis])
    return jnp.pad(a, pads)


def _choose_tile(m, target=None):
    """Prefer a row tile that divides M exactly (multiple of 8) so no M
    padding / re-slicing glue is needed between kernels."""
    if target is None:
        target = ROW_TILE
    if m % 8 == 0:
        best = 0
        for tm in range(8, min(m, target) + 1, 8):
            if m % tm == 0:
                best = tm
        if best:
            return best, m
    tm = target if m >= target else _round_up(m, 8)
    return tm, _round_up(m, tm)


def _pick_th(ho, wo, cap=256):
    """Largest th dividing Ho with th*wo % 8 == 0 (sublane-dense 2-D store)
    and th*wo <= cap (keeps the in-kernel f32 accumulator modest)."""
    best = 0
    for d in range(1, ho + 1):
        if ho % d == 0 and d * wo <= cap and (d * wo) % 8 == 0:
            best = d
    if best == 0:
        for d in range(1, ho + 1):
            if ho % d == 0 and (d * wo) % 8 == 0:
                best = d
                break
    if best == 0:
        # TODO(synk): shapes with no sublane-alignable (th*wo, C) block would
        # need a masked store path; not required for these configurations.
        raise NotImplementedError("no sublane-aligned 3x3 output tile")
    return best


def _pack_stats(acc):
    """Per-tile (sum, sumsq) packed into a single dense (8, C) block."""
    c = acc.shape[-1]
    s = jnp.sum(acc, axis=0, keepdims=True)
    s2 = jnp.sum(acc * acc, axis=0, keepdims=True)
    rows = lax.broadcasted_iota(jnp.int32, (8, c), 0)
    return jnp.where(rows == 0, s, jnp.where(rows == 1, s2, 0.0))


def _reduce_stats(partials, c):
    p = partials.reshape(-1, 8, c)
    return p[:, 0, :].sum(axis=0), p[:, 1, :].sum(axis=0)     # sum, sumsq


def _bn_scale_shift(s, s2, gamma, beta, count, eps=BN_EPS):
    """Training-mode BatchNorm (batch mean, biased variance) -> scale, shift."""
    mean = s / count
    var = jnp.maximum(s2 / count - mean * mean, 0.0)
    scale = gamma.astype(jnp.float32) * lax.rsqrt(var + eps)
    shift = beta.astype(jnp.float32) - mean * scale
    return scale.reshape(1, -1), shift.reshape(1, -1)


# ---------------------------------------------------------------------------
# Pass-1 kernels: matmuls / 3x3 conv emitting bf16 activations + per-tile
# partial per-channel (sum, sumsq) — all grid axes "parallel".
# ---------------------------------------------------------------------------
def _mm_stats_kernel(x_ref, w_ref, y_ref, s_ref):
    acc = jnp.dot(x_ref[...], w_ref[...], preferred_element_type=jnp.float32)
    y_ref[...] = acc.astype(y_ref.dtype)
    s_ref[...] = _pack_stats(acc)


def _bn_mm_stats_kernel(x_ref, sc_ref, sh_ref, w_ref, y_ref, s_ref, *,
                        mask_rows):
    # fused BN+ReLU of the *previous* layer applied to the input tile (f32)
    x = x_ref[...].astype(jnp.float32) * sc_ref[...] + sh_ref[...]
    x = jnp.maximum(x, 0.0)
    if mask_rows is not None:
        row = (pl.program_id(0) * x_ref.shape[0]
               + lax.broadcasted_iota(jnp.int32, x.shape, 0))
        x = jnp.where(row < mask_rows, x, 0.0)     # keep padded rows out of stats
    acc = jnp.dot(x.astype(jnp.bfloat16), w_ref[...],
                  preferred_element_type=jnp.float32)
    y_ref[...] = acc.astype(y_ref.dtype)
    s_ref[...] = _pack_stats(acc)


def matmul_stats(x, w, *, tm, in_scale=None, in_shift=None, mask_rows=None):
    m, k = x.shape
    c = w.shape[1]
    nt = m // tm
    row = pl.BlockSpec((tm, k), lambda i: (i, 0))
    wspec = pl.BlockSpec((k, c), lambda i: (0, 0))            # weight resident
    out_row = pl.BlockSpec((tm, c), lambda i: (i, 0))
    st = pl.BlockSpec((8, c), lambda i: (i, 0))               # per-tile stats
    out_shape = (jax.ShapeDtypeStruct((m, c), jnp.bfloat16),
                 jax.ShapeDtypeStruct((nt * 8, c), jnp.float32))
    if in_scale is None:
        return pl.pallas_call(
            _mm_stats_kernel, out_shape=out_shape, grid=(nt,),
            in_specs=[row, wspec], out_specs=(out_row, st),
            compiler_params=_cparams(("parallel",)),
        )(x, w)
    vec = pl.BlockSpec((1, k), lambda i: (0, 0))
    kernel = functools.partial(_bn_mm_stats_kernel, mask_rows=mask_rows)
    return pl.pallas_call(
        kernel, out_shape=out_shape, grid=(nt,),
        in_specs=[row, vec, vec, wspec], out_specs=(out_row, st),
        compiler_params=_cparams(("parallel",)),
    )(x, in_scale, in_shift, w)


def _conv3x3_kernel(x_ref, sc_ref, sh_ref, w_ref, y_ref, s_ref, *,
                    stride, th, wo, cin, h, w):
    t = pl.program_id(1)
    ho0 = t * th
    cout = w_ref.shape[-1]
    scale = sc_ref[...].reshape(1, 1, cin)
    shift = sh_ref[...].reshape(1, 1, cin)
    oh = ho0 + lax.broadcasted_iota(jnp.int32, (th, wo, 1), 0)
    ow = lax.broadcasted_iota(jnp.int32, (th, wo, 1), 1)
    acc = jnp.zeros((th * wo, cout), jnp.float32)
    # 9-tap in-kernel accumulation; BN1+ReLU fused onto each input patch and
    # conv zero-padding positions re-masked to zero after the affine.
    for ki in range(3):
        for kj in range(3):
            pi, oi = ki % stride, ki // stride
            pj, oj = kj % stride, kj // stride
            ph = pi * stride + pj
            patch = x_ref[0, pl.ds(ho0 + oi, th), oj:oj + wo,
                          ph * cin:(ph + 1) * cin].astype(jnp.float32)
            patch = jnp.maximum(patch * scale + shift, 0.0)
            rc = oh * stride + ki                       # padded-row coordinate
            cc = ow * stride + kj                       # padded-col coordinate
            valid = (rc >= 1) & (rc <= h) & (cc >= 1) & (cc <= w)
            patch = jnp.where(valid, patch, 0.0)
            acc = acc + jnp.dot(
                patch.astype(jnp.bfloat16).reshape(th * wo, cin),
                w_ref[ki, kj], preferred_element_type=jnp.float32)
    y_ref[...] = acc.astype(y_ref.dtype)                # dense 2-D store
    s_ref[...] = _pack_stats(acc)


def conv3x3_bn_stats(x_phases, scale1, shift1, w2, *, stride, ho, wo, th, h, w):
    n, hq, wq, cph = x_phases.shape
    cin, cout = w2.shape[2], w2.shape[3]
    nt_h = ho // th
    m2 = n * ho * wo
    kernel = functools.partial(_conv3x3_kernel, stride=stride, th=th, wo=wo,
                               cin=cin, h=h, w=w)
    return pl.pallas_call(
        kernel,
        out_shape=(jax.ShapeDtypeStruct((m2, cout), jnp.bfloat16),
                   jax.ShapeDtypeStruct((n * nt_h * 8, cout), jnp.float32)),
        grid=(n, nt_h),
        in_specs=[pl.BlockSpec((1, hq, wq, cph), lambda i, t: (i, 0, 0, 0)),
                  pl.BlockSpec((1, cin), lambda i, t: (0, 0)),
                  pl.BlockSpec((1, cin), lambda i, t: (0, 0)),
                  pl.BlockSpec((3, 3, cin, cout), lambda i, t: (0, 0, 0, 0))],
        out_specs=(pl.BlockSpec((th * wo, cout),
                                lambda i, t: (i * nt_h + t, 0)),
                   pl.BlockSpec((8, cout), lambda i, t: (i * nt_h + t, 0))),
        compiler_params=_cparams(("parallel", "parallel")),
    )(x_phases, scale1, shift1, w2)


# ---------------------------------------------------------------------------
# Epilogue: BN3 (+ shortcut BN) + residual add + ReLU, one FMA each in f32.
# ---------------------------------------------------------------------------
def _bn_add_bn_relu_kernel(y_ref, sc3_ref, sh3_ref, r_ref, scs_ref, shs_ref,
                           o_ref):
    y = y_ref[...].astype(jnp.float32) * sc3_ref[...] + sh3_ref[...]
    r = r_ref[...].astype(jnp.float32) * scs_ref[...] + shs_ref[...]
    o_ref[...] = jnp.maximum(y + r, 0.0).astype(o_ref.dtype)


def bn_add_bn_relu(y_raw, sc3, sh3, r_raw, scs, shs, *, tm):
    m, c = y_raw.shape
    tile = pl.BlockSpec((tm, c), lambda i: (i, 0))
    vec = pl.BlockSpec((1, c), lambda i: (0, 0))
    return pl.pallas_call(
        _bn_add_bn_relu_kernel,
        out_shape=jax.ShapeDtypeStruct((m, c), jnp.float32),
        grid=(m // tm,),
        in_specs=[tile, vec, vec, tile, vec, vec],
        out_specs=tile,
        compiler_params=_cparams(("parallel",)),
    )(y_raw, sc3, sh3, r_raw, scs, shs)


def _bn_addid_relu_kernel(y_ref, sc3_ref, sh3_ref, r_ref, o_ref):
    y = y_ref[...].astype(jnp.float32) * sc3_ref[...] + sh3_ref[...]
    o_ref[...] = jnp.maximum(y + r_ref[...].astype(jnp.float32),
                             0.0).astype(o_ref.dtype)


def bn_add_identity_relu(y_raw, sc3, sh3, res, *, tm):
    m, c = y_raw.shape
    tile = pl.BlockSpec((tm, c), lambda i: (i, 0))
    vec = pl.BlockSpec((1, c), lambda i: (0, 0))
    return pl.pallas_call(
        _bn_addid_relu_kernel,
        out_shape=jax.ShapeDtypeStruct((m, c), jnp.float32),
        grid=(m // tm,),
        in_specs=[tile, vec, vec, tile],
        out_specs=tile,
        compiler_params=_cparams(("parallel",)),
    )(y_raw, sc3, sh3, res)


# ---------------------------------------------------------------------------
# Glue (layout / padding / stride-phase packing) in plain JAX
# ---------------------------------------------------------------------------
def _phase_pack(x_nhwc, stride):
    """Zero-pad H/W by 1 and pack the stride*stride sampling phases along the
    channel axis so the 3x3 kernel only ever takes contiguous slices."""
    n, h, w, c = x_nhwc.shape
    xp = jnp.pad(x_nhwc, ((0, 0), (1, 1), (1, 1), (0, 0)))
    hq = -(-(h + 2) // stride)
    wq = -(-(w + 2) // stride)
    phases = []
    for pi in range(stride):
        for pj in range(stride):
            ph = xp[:, pi::stride, pj::stride, :]
            ph = _pad_axis(_pad_axis(ph, 1, hq), 2, wq)
            phases.append(ph)
    return jnp.concatenate(phases, axis=-1) if len(phases) > 1 else phases[0]


def init_params(key, in_planes, planes, stride):
    out_planes = EXPANSION * planes
    ks = jax.random.split(key, 12)
    params = {
        "w1": 0.1 * jax.random.normal(ks[0], (in_planes, planes), jnp.float32),
        "g1": 1.0 + 0.1 * jax.random.normal(ks[1], (planes,), jnp.float32),
        "b1": 0.1 * jax.random.normal(ks[2], (planes,), jnp.float32),
        # conv2 weight stored (kh, kw, Cin, Cout)
        "w2": 0.1 * jax.random.normal(ks[3], (3, 3, planes, planes), jnp.float32),
        "g2": 1.0 + 0.1 * jax.random.normal(ks[4], (planes,), jnp.float32),
        "b2": 0.1 * jax.random.normal(ks[5], (planes,), jnp.float32),
        "w3": 0.1 * jax.random.normal(ks[6], (planes, out_planes), jnp.float32),
        "g3": 1.0 + 0.1 * jax.random.normal(ks[7], (out_planes,), jnp.float32),
        "b3": 0.1 * jax.random.normal(ks[8], (out_planes,), jnp.float32),
    }
    if stride != 1 or in_planes != out_planes:
        params["ws"] = 0.1 * jax.random.normal(ks[9], (in_planes, out_planes),
                                               jnp.float32)
        params["gs"] = 1.0 + 0.1 * jax.random.normal(ks[10], (out_planes,),
                                                     jnp.float32)
        params["bs"] = 0.1 * jax.random.normal(ks[11], (out_planes,),
                                               jnp.float32)
    return params


def bottleneck_forward(x_nchw, params, stride):
    x = jnp.transpose(x_nchw, (0, 2, 3, 1)).astype(jnp.float32)   # NHWC
    n, h, w, cin = x.shape
    planes = params["w1"].shape[1]
    cout = EXPANSION * planes
    downsample = (stride != 1) or (cin != cout)

    cp_in = _round_up(cin, LANE)
    cp_mid = _round_up(planes, LANE)
    cp_out = _round_up(cout, LANE)

    # lane-padded bf16 weights, f32 BN params (padding is zero by design)
    w1 = _pad_axis(_pad_axis(params["w1"], 0, cp_in), 1, cp_mid).astype(jnp.bfloat16)
    w2 = _pad_axis(_pad_axis(params["w2"], 2, cp_mid), 3, cp_mid).astype(jnp.bfloat16)
    w3 = _pad_axis(_pad_axis(params["w3"], 0, cp_mid), 1, cp_out).astype(jnp.bfloat16)
    g1 = _pad_axis(params["g1"], 0, cp_mid); b1 = _pad_axis(params["b1"], 0, cp_mid)
    g2 = _pad_axis(params["g2"], 0, cp_mid); b2 = _pad_axis(params["b2"], 0, cp_mid)
    g3 = _pad_axis(params["g3"], 0, cp_out); b3 = _pad_axis(params["b3"], 0, cp_out)

    xq = _pad_axis(x, 3, cp_in).astype(jnp.bfloat16)              # (N,H,W,cp_in)

    # ---- conv1 (1x1) + batch stats --------------------------------------
    m1 = n * h * w
    tm1, m1p = _choose_tile(m1)
    x1 = _pad_axis(xq.reshape(m1, cp_in), 0, m1p)
    y1_raw, p1 = matmul_stats(x1, w1, tm=tm1)                     # bf16 + stats
    s1, s1q = _reduce_stats(p1, cp_mid)
    scale1, shift1 = _bn_scale_shift(s1, s1q, g1, b1, m1)

    # ---- conv2 (3x3, stride, pad=1) with fused BN1+ReLU + stats ----------
    ho = (h - 1) // stride + 1
    wo = (w - 1) // stride + 1
    th = _pick_th(ho, wo)
    m2 = n * ho * wo
    xph = _phase_pack(y1_raw[:m1].reshape(n, h, w, cp_mid), stride)
    y2_raw, p2 = conv3x3_bn_stats(xph, scale1, shift1, w2, stride=stride,
                                  ho=ho, wo=wo, th=th, h=h, w=w)   # (m2, cp_mid)
    s2, s2q = _reduce_stats(p2, cp_mid)
    scale2, shift2 = _bn_scale_shift(s2, s2q, g2, b2, m2)

    # ---- conv3 (1x1) with fused BN2+ReLU on its input + stats ------------
    tm2, m2p = _choose_tile(m2)
    y2_in = _pad_axis(y2_raw, 0, m2p)
    mask_rows = m2 if m2p != m2 else None       # keep padded rows out of s3
    y3_raw, p3 = matmul_stats(y2_in, w3, tm=tm2,
                              in_scale=scale2, in_shift=shift2,
                              mask_rows=mask_rows)
    s3, s3q = _reduce_stats(p3, cp_out)
    scale3, shift3 = _bn_scale_shift(s3, s3q, g3, b3, m2)

    # ---- shortcut + residual add + ReLU epilogue -------------------------
    if downsample:
        ws = _pad_axis(_pad_axis(params["ws"], 0, cp_in),
                       1, cp_out).astype(jnp.bfloat16)
        gs = _pad_axis(params["gs"], 0, cp_out)
        bs = _pad_axis(params["bs"], 0, cp_out)
        xs = _pad_axis(xq[:, ::stride, ::stride, :].reshape(m2, cp_in), 0, m2p)
        sc_raw, ps = matmul_stats(xs, ws, tm=tm2)
        ss, ssq = _reduce_stats(ps, cp_out)
        scales, shifts = _bn_scale_shift(ss, ssq, gs, bs, m2)
        out = bn_add_bn_relu(y3_raw, scale3, shift3, sc_raw, scales, shifts,
                             tm=tm2)
    else:
        # identity shortcut: stride == 1 and cin == cout, so the lane-padded
        # bf16 conv1 input tensor is reusable as the residual directly.
        out = bn_add_identity_relu(y3_raw, scale3, shift3, x1, tm=tm2)

    out = out[:m2, :cout].reshape(n, ho, wo, cout)
    return jnp.transpose(out, (0, 3, 1, 2))                       # NCHW f32


# ---------------------------------------------------------------------------
# Pure-JAX reference (mirrors the kernel's bf16 cast points, no Pallas)
# ---------------------------------------------------------------------------
def _ref_forward(x_nchw, params, stride):
    bf = jnp.bfloat16
    x = jnp.transpose(x_nchw, (0, 2, 3, 1)).astype(jnp.float32)
    n, h, w, cin = x.shape
    planes = params["w1"].shape[1]
    cout = EXPANSION * planes

    def scale_shift(y, g, b):
        mean = jnp.mean(y, axis=0)
        var = jnp.maximum(jnp.mean(y * y, axis=0) - mean * mean, 0.0)
        scale = g * lax.rsqrt(var + BN_EPS)
        shift = b - mean * scale
        return scale, shift

    x_bf = x.astype(bf)
    m1 = n * h * w
    y1 = jnp.dot(x_bf.reshape(m1, cin), params["w1"].astype(bf),
                 preferred_element_type=jnp.float32)
    sc1, sh1 = scale_shift(y1, params["g1"], params["b1"])
    y1n = jnp.maximum(y1.astype(bf).astype(jnp.float32) * sc1 + sh1, 0.0)
    y1n = y1n.astype(bf).reshape(n, h, w, planes)

    ho = (h - 1) // stride + 1
    wo = (w - 1) // stride + 1
    m2 = n * ho * wo
    xp = jnp.pad(y1n, ((0, 0), (1, 1), (1, 1), (0, 0)))
    y2 = jnp.zeros((m2, planes), jnp.float32)
    for ki in range(3):
        for kj in range(3):
            patch = xp[:, ki:ki + (ho - 1) * stride + 1:stride,
                       kj:kj + (wo - 1) * stride + 1:stride, :]
            y2 = y2 + jnp.dot(patch.reshape(m2, planes),
                              params["w2"][ki, kj].astype(bf),
                              preferred_element_type=jnp.float32)
    sc2, sh2 = scale_shift(y2, params["g2"], params["b2"])
    y2n = jnp.maximum(y2.astype(bf).astype(jnp.float32) * sc2 + sh2, 0.0)
    y2n = y2n.astype(bf)

    y3 = jnp.dot(y2n, params["w3"].astype(bf),
                 preferred_element_type=jnp.float32)
    sc3, sh3 = scale_shift(y3, params["g3"], params["b3"])
    y3n = y3.astype(bf).astype(jnp.float32) * sc3 + sh3

    if stride != 1 or cin != cout:
        xs = x_bf[:, ::stride, ::stride, :].reshape(m2, cin)
        sv = jnp.dot(xs, params["ws"].astype(bf),
                     preferred_element_type=jnp.float32)
        scs, shs = scale_shift(sv, params["gs"], params["bs"])
        resid = sv.astype(bf).astype(jnp.float32) * scs + shs
    else:
        resid = x_bf.astype(jnp.float32).reshape(m2, cin)
    out = jnp.maximum(y3n + resid, 0.0)
    return jnp.transpose(out.reshape(n, ho, wo, cout), (0, 3, 1, 2))


if __name__ == "__main__":
    configs = [
        # (in_planes, planes, stride, N, H, W)
        (8, 4, 2, 2, 16, 16),    # projection shortcut (stride-2 downsample)
        (16, 4, 1, 2, 16, 16),   # identity shortcut
    ]
    key = jax.random.PRNGKey(0)
    for in_planes, planes, stride, n, h, w in configs:
        key, kx, kp = jax.random.split(key, 3)
        x = jax.random.normal(kx, (n, in_planes, h, w), jnp.float32)  # NCHW
        params = init_params(kp, in_planes, planes, stride)

        fwd = jax.jit(functools.partial(bottleneck_forward, stride=stride))
        out = jax.block_until_ready(fwd(x, params))
        ref = jax.block_until_ready(_ref_forward(x, params, stride))

        ho = (h - 1) // stride + 1
        wo = (w - 1) // stride + 1
        assert out.shape == (n, EXPANSION * planes, ho, wo), out.shape
        assert bool(jnp.all(jnp.isfinite(out)))
        assert bool(jnp.allclose(out, ref, atol=2e-2, rtol=2e-2)), \
            float(jnp.max(jnp.abs(out - ref)))

    print("KERNEL_OK")
</pallas_src>

<mosaic_0001>
module attributes {stable_mosaic.version = 11 : i64} {
  func.func @_mm_stats_kernel(%arg0: i32, %arg1: memref<512x128xbf16, #tpu.memory_space<vmem>>, %arg2: memref<128x128xbf16, #tpu.memory_space<vmem>>, %arg3: memref<512x128xbf16, #tpu.memory_space<vmem>>, %arg4: memref<8x128xf32, #tpu.memory_space<vmem>>) attributes {dimension_semantics = [#tpu.dimension_semantics<parallel>], iteration_bounds = array<i64: 1>, scalar_prefetch = 0 : i64, scratch_operands = 0 : i64, tpu.core_type = #tpu.core_type<tc>, window_params = [{transform_indices = @transform_0, window_bounds = array<i64: 512, 128>}, {pipeline_mode = #tpu.pipeline_mode<synchronous>, transform_indices = @transform_1, window_bounds = array<i64: 128, 128>}, {transform_indices = @transform_2, window_bounds = array<i64: 512, 128>}, {transform_indices = @transform_3, window_bounds = array<i64: 8, 128>}]} {
    %c0 = arith.constant 0 : index
    %c0_0 = arith.constant 0 : index
    %0 = vector.load %arg1[%c0, %c0_0] : memref<512x128xbf16, #tpu.memory_space<vmem>>, vector<512x128xbf16>
    %c0_1 = arith.constant 0 : index
    %c0_2 = arith.constant 0 : index
    %1 = vector.load %arg2[%c0_1, %c0_2] : memref<128x128xbf16, #tpu.memory_space<vmem>>, vector<128x128xbf16>
    %cst = arith.constant dense<0.000000e+00> : vector<512x128xf32>
    %2 = tpu.matmul %0, %1, %cst {dimension_numbers = #tpu.dot_dimension_numbers<[1], [0], [0], [1], [0, 0, 1, 1], [], []>} : vector<512x128xbf16>, vector<128x128xbf16>, vector<512x128xf32> -> vector<512x128xf32>
    %3 = arith.truncf %2 : vector<512x128xf32> to vector<512x128xbf16>
    %c0_3 = arith.constant 0 : index
    %c0_4 = arith.constant 0 : index
    %4 = vector.load %arg3[%c0_3, %c0_4] : memref<512x128xbf16, #tpu.memory_space<vmem>>, vector<512x128xbf16>
    tpu.vector_store %arg3[%c0_3, %c0_4], %3 {strides = array<i32>} : memref<512x128xbf16, #tpu.memory_space<vmem>>, vector<512x128xbf16>,
    %cst_5 = arith.constant dense<0.000000e+00> : vector<128xf32>
    %5 = vector.multi_reduction <add>, %2, %cst_5 [0] : vector<512x128xf32> to vector<128xf32>
    %6 = vector.shape_cast %5 : vector<128xf32> to vector<1x128xf32>
    %7 = arith.mulf %2, %2 : vector<512x128xf32>
    %cst_6 = arith.constant dense<0.000000e+00> : vector<128xf32>
    %8 = vector.multi_reduction <add>, %7, %cst_6 [0] : vector<512x128xf32> to vector<128xf32>
    %9 = vector.shape_cast %8 : vector<128xf32> to vector<1x128xf32>
    %10 = tpu.iota {dimensions = array<i32: 0>} : vector<8x128xi32>
    %c0_i32 = arith.constant 0 : i32
    %11 = vector.broadcast %c0_i32 : i32 to vector<8x128xi32>
    %12 = arith.cmpi eq, %10, %11 : vector<8x128xi32>
    %c1_i32 = arith.constant 1 : i32
    %13 = vector.broadcast %c1_i32 : i32 to vector<8x128xi32>
    %14 = arith.cmpi eq, %10, %13 : vector<8x128xi32>
    %cst_7 = arith.constant 0.000000e+00 : f32
    %15 = vector.shape_cast %9 : vector<1x128xf32> to vector<1x128xf32>
    %16 = vector.broadcast %15 : vector<1x128xf32> to vector<8x128xf32>
    %17 = vector.broadcast %cst_7 : f32 to vector<8x128xf32>
    %18 = arith.select %14, %16, %17 : vector<8x128xi1>, vector<8x128xf32>
    %19 = vector.shape_cast %6 : vector<1x128xf32> to vector<1x128xf32>
    %20 = vector.broadcast %19 : vector<1x128xf32> to vector<8x128xf32>
    %21 = arith.select %12, %20, %18 : vector<8x128xi1>, vector<8x128xf32>
    %c0_8 = arith.constant 0 : index
    %c0_9 = arith.constant 0 : index
    %22 = vector.load %arg4[%c0_8, %c0_9] : memref<8x128xf32, #tpu.memory_space<vmem>>, vector<8x128xf32>
    tpu.vector_store %arg4[%c0_8, %c0_9], %21 {strides = array<i32>} : memref<8x128xf32, #tpu.memory_space<vmem>>, vector<8x128xf32>,
    return
  }
  func.func @transform_0(%arg0: i32) -> (i32, i32) {
    %c0_i32 = arith.constant 0 : i32
    %c0_i32_0 = arith.constant 0 : i32
    return %arg0, %c0_i32 : i32, i32
  }
  func.func @transform_1(%arg0: i32) -> (i32, i32) {
    %c0_i32 = arith.constant 0 : i32
    %c0_i32_0 = arith.constant 0 : i32
    %c0_i32_1 = arith.constant 0 : i32
    return %c0_i32, %c0_i32_0 : i32, i32
  }
  func.func @transform_2(%arg0: i32) -> (i32, i32) {
    %c0_i32 = arith.constant 0 : i32
    %c0_i32_0 = arith.constant 0 : i32
    return %arg0, %c0_i32 : i32, i32
  }
  func.func @transform_3(%arg0: i32) -> (i32, i32) {
    %c0_i32 = arith.constant 0 : i32
    %c0_i32_0 = arith.constant 0 : i32
    return %arg0, %c0_i32 : i32, i32
  }
}

module attributes {stable_mosaic.version = 11 : i64} {
  func.func @_conv3x3_kernel(%arg0: i32, %arg1: i32, %arg2: memref<1x9x9x512xbf16, #tpu.memory_space<vmem>>, %arg3: memref<1x128xf32, #tpu.memory_space<vmem>>, %arg4: memref<1x128xf32, #tpu.memory_space<vmem>>, %arg5: memref<3x3x128x128xbf16, #tpu.memory_space<vmem>>, %arg6: memref<64x128xbf16, #tpu.memory_space<vmem>>, %arg7: memref<8x128xf32, #tpu.memory_space<vmem>>) attributes {dimension_semantics = [#tpu.dimension_semantics<parallel>, #tpu.dimension_semantics<parallel>], iteration_bounds = array<i64: 2, 1>, scalar_prefetch = 0 : i64, scratch_operands = 0 : i64, tpu.core_type = #tpu.core_type<tc>, window_params = [{transform_indices = @transform_0, window_bounds = array<i64: 1, 9, 9, 512>}, {pipeline_mode = #tpu.pipeline_mode<synchronous>, transform_indices = @transform_1, window_bounds = array<i64: 1, 128>}, {pipeline_mode = #tpu.pipeline_mode<synchronous>, transform_indices = @transform_2, window_bounds = array<i64: 1, 128>}, {pipeline_mode = #tpu.pipeline_mode<synchronous>, transform_indices = @transform_3, window_bounds = array<i64: 3, 3, 128, 128>}, {transform_indices = @transform_4, window_bounds = array<i64: 64, 128>}, {transform_indices = @transform_5, window_bounds = array<i64: 8, 128>}]} {
    %c8_i32 = arith.constant 8 : i32
    %0 = arith.muli %arg1, %c8_i32 : i32
    %c0 = arith.constant 0 : index
    %c0_0 = arith.constant 0 : index
    %1 = vector.load %arg3[%c0, %c0_0] : memref<1x128xf32, #tpu.memory_space<vmem>>, vector<1x128xf32>
    %2 = vector.shape_cast %1 : vector<1x128xf32> to vector<1x1x128xf32>
    %c0_1 = arith.constant 0 : index
    %c0_2 = arith.constant 0 : index
    %3 = vector.load %arg4[%c0_1, %c0_2] : memref<1x128xf32, #tpu.memory_space<vmem>>, vector<1x128xf32>
    %4 = vector.shape_cast %3 : vector<1x128xf32> to vector<1x1x128xf32>
    %5 = tpu.iota {dimensions = array<i32: 0>} : vector<8x8x1xi32>
    %6 = vector.broadcast %0 : i32 to vector<8x8x1xi32>
    %7 = arith.addi %6, %5 : vector<8x8x1xi32>
    %8 = tpu.iota {dimensions = array<i32: 1>} : vector<8x8x1xi32>
    %cst = arith.constant 0.000000e+00 : f32
    %9 = vector.broadcast %cst : f32 to vector<64x128xf32>
    %c0_i32 = arith.constant 0 : i32
    %10 = arith.addi %0, %c0_i32 : i32
    %c0_3 = arith.constant 0 : index
    %11 = arith.index_cast %10 : i32 to index
    %c0_4 = arith.constant 0 : index
    %c0_5 = arith.constant 0 : index
    %12 = vector.load %arg2[%c0_3, %11, %c0_4, %c0_5] : memref<1x9x9x512xbf16, #tpu.memory_space<vmem>>, vector<1x8x8x128xbf16>
    %13 = vector.shape_cast %12 : vector<1x8x8x128xbf16> to vector<8x8x128xbf16>
    %14 = arith.extf %13 : vector<8x8x128xbf16> to vector<8x8x128xf32>
    %15 = vector.broadcast %2 : vector<1x1x128xf32> to vector<8x8x128xf32>
    %16 = arith.mulf %14, %15 : vector<8x8x128xf32>
    %17 = vector.broadcast %4 : vector<1x1x128xf32> to vector<8x8x128xf32>
    %18 = arith.addf %16, %17 : vector<8x8x128xf32>
    %cst_6 = arith.constant 0.000000e+00 : f32
    %19 = vector.broadcast %cst_6 : f32 to vector<8x8x128xf32>
    %20 = arith.maximumf %18, %19 : vector<8x8x128xf32>
    %c2_i32 = arith.constant 2 : i32
    %21 = vector.broadcast %c2_i32 : i32 to vector<8x8x1xi32>
    %22 = arith.muli %7, %21 : vector<8x8x1xi32>
    %c0_i32_7 = arith.constant 0 : i32
    %23 = vector.broadcast %c0_i32_7 : i32 to vector<8x8x1xi32>
    %24 = arith.addi %22, %23 : vector<8x8x1xi32>
    %c2_i32_8 = arith.constant 2 : i32
    %25 = vector.broadcast %c2_i32_8 : i32 to vector<8x8x1xi32>
    %26 = arith.muli %8, %25 : vector<8x8x1xi32>
    %c0_i32_9 = arith.constant 0 : i32
    %27 = vector.broadcast %c0_i32_9 : i32 to vector<8x8x1xi32>
    %28 = arith.addi %26, %27 : vector<8x8x1xi32>
    %c1_i32 = arith.constant 1 : i32
    %29 = vector.broadcast %c1_i32 : i32 to vector<8x8x1xi32>
    %30 = arith.cmpi sge, %24, %29 : vector<8x8x1xi32>
    %c16_i32 = arith.constant 16 : i32
    %31 = vector.broadcast %c16_i32 : i32 to vector<8x8x1xi32>
    %32 = arith.cmpi sle, %24, %31 : vector<8x8x1xi32>
    %33 = arith.andi %30, %32 : vector<8x8x1xi1>
    %c1_i32_10 = arith.constant 1 : i32
    %34 = vector.broadcast %c1_i32_10 : i32 to vector<8x8x1xi32>
    %35 = arith.cmpi sge, %28, %34 : vector<8x8x1xi32>
    %36 = arith.andi %33, %35 : vector<8x8x1xi1>
    %c16_i32_11 = arith.constant 16 : i32
    %37 = vector.broadcast %c16_i32_11 : i32 to vector<8x8x1xi32>
    %38 = arith.cmpi sle, %28, %37 : vector<8x8x1xi32>
    %39 = arith.andi %36, %38 : vector<8x8x1xi1>
    %cst_12 = arith.constant 0.000000e+00 : f32
    %40 = vector.shape_cast %39 : vector<8x8x1xi1> to vector<8x8x1xi1>
    %41 = vector.broadcast %40 : vector<8x8x1xi1> to vector<8x8x128xi1>
    %42 = vector.broadcast %cst_12 : f32 to vector<8x8x128xf32>
    %43 = arith.select %41, %20, %42 : vector<8x8x128xi1>, vector<8x8x128xf32>
    %44 = arith.truncf %43 : vector<8x8x128xf32> to vector<8x8x128xbf16>
    %45 = vector.shape_cast %44 : vector<8x8x128xbf16> to vector<64x128xbf16>
    %c0_13 = arith.constant 0 : index
    %c0_14 = arith.constant 0 : index
    %c0_15 = arith.constant 0 : index
    %c0_16 = arith.constant 0 : index
    %46 = vector.load %arg5[%c0_13, %c0_14, %c0_15, %c0_16] : memref<3x3x128x128xbf16, #tpu.memory_space<vmem>>, vector<1x1x128x128xbf16>
    %47 = vector.shape_cast %46 : vector<1x1x128x128xbf16> to vector<128x128xbf16>
    %cst_17 = arith.constant dense<0.000000e+00> : vector<64x128xf32>
    %48 = tpu.matmul %45, %47, %cst_17 {dimension_numbers = #tpu.dot_dimension_numbers<[1], [0], [0], [1], [0, 0, 1, 1], [], []>} : vector<64x128xbf16>, vector<128x128xbf16>, vector<64x128xf32> -> vector<64x128xf32>
    %49 = arith.addf %9, %48 : vector<64x128xf32>
    %c0_i32_18 = arith.constant 0 : i32
    %50 = arith.addi %0, %c0_i32_18 : i32
    %c0_19 = arith.constant 0 : index
    %51 = arith.index_cast %50 : i32 to index
    %c0_20 = arith.constant 0 : index
    %c128 = arith.constant 128 : index
    %52 = vector.load %arg2[%c0_19, %51, %c0_20, %c128] : memref<1x9x9x512xbf16, #tpu.memory_space<vmem>>, vector<1x8x8x128xbf16>
    %53 = vector.shape_cast %52 : vector<1x8x8x128xbf16> to vector<8x8x128xbf16>
    %54 = arith.extf %53 : vector<8x8x128xbf16> to vector<8x8x128xf32>
    %55 = vector.broadcast %2 : vector<1x1x128xf32> to vector<8x8x128xf32>
    %56 = arith.mulf %54, %55 : vector<8x8x128xf32>
    %57 = vector.broadcast %4 : vector<1x1x128xf32> to vector<8x8x128xf32>
    %58 = arith.addf %56, %57 : vector<8x8x128xf32>
    %cst_21 = arith.constant 0.000000e+00 : f32
    %59 = vector.broadcast %cst_21 : f32 to vector<8x8x128xf32>
    %60 = arith.maximumf %58, %59 : vector<8x8x128xf32>
    %c2_i32_22 = arith.constant 2 : i32
    %61 = vector.broadcast %c2_i32_22 : i32 to vector<8x8x1xi32>
    %62 = arith.muli %7, %61 : vector<8x8x1xi32>
    %c0_i32_23 = arith.constant 0 : i32
    %63 = vector.broadcast %c0_i32_23 : i32 to vector<8x8x1xi32>
    %64 = arith.addi %62, %63 : vector<8x8x1xi32>
    %c2_i32_24 = arith.constant 2 : i32
    %65 = vector.broadcast %c2_i32_24 : i32 to vector<8x8x1xi32>
    %66 = arith.muli %8, %65 : vector<8x8x1xi32>
    %c1_i32_25 = arith.constant 1 : i32
    %67 = vector.broadcast %c1_i32_25 : i32 to vector<8x8x1xi32>
    %68 = arith.addi %66, %67 : vector<8x8x1xi32>
    %c1_i32_26 = arith.constant 1 : i32
    %69 = vector.broadcast %c1_i32_26 : i32 to vector<8x8x1xi32>
    %70 = arith.cmpi sge, %64, %69 : vector<8x8x1xi32>
    %c16_i32_27 = arith.constant 16 : i32
    %71 = vector.broadcast %c16_i32_27 : i32 to vector<8x8x1xi32>
    %72 = arith.cmpi sle, %64, %71 : vector<8x8x1xi32>
    %73 = arith.andi %70, %72 : vector<8x8x1xi1>
    %c1_i32_28 = arith.constant 1 : i32
    %74 = vector.broadcast %c1_i32_28 : i32 to vector<8x8x1xi32>
    %75 = arith.cmpi sge, %68, %74 : vector<8x8x1xi32>
    %76 = arith.andi %73, %75 : vector<8x8x1xi1>
    %c16_i32_29 = arith.constant 16 : i32
    %77 = vector.broadcast %c16_i32_29 : i32 to vector<8x8x1xi32>
    %78 = arith.cmpi sle, %68, %77 : vector<8x8x1xi32>
    %79 = arith.andi %76, %78 : vector<8x8x1xi1>
    %cst_30 = arith.constant 0.000000e+00 : f32
    %80 = vector.shape_cast %79 : vector<8x8x1xi1> to vector<8x8x1xi1>
    %81 = vector.broadcast %80 : vector<8x8x1xi1> to vector<8x8x128xi1>
    %82 = vector.broadcast %cst_30 : f32 to vector<8x8x128xf32>
    %83 = arith.select %81, %60, %82 : vector<8x8x128xi1>, vector<8x8x128xf32>
    %84 = arith.truncf %83 : vector<8x8x128xf32> to vector<8x8x128xbf16>
    %85 = vector.shape_cast %84 : vector<8x8x128xbf16> to vector<64x128xbf16>
    %c0_31 = arith.constant 0 : index
    %c1 = arith.constant 1 : index
    %c0_32 = arith.constant 0 : index
    %c0_33 = arith.constant 0 : index
    %86 = vector.load %arg5[%c0_31, %c1, %c0_32, %c0_33] : memref<3x3x128x128xbf16, #tpu.memory_space<vmem>>, vector<1x1x128x128xbf16>
    %87 = vector.shape_cast %86 : vector<1x1x128x128xbf16> to vector<128x128xbf16>
    %cst_34 = arith.constant dense<0.000000e+00> : vector<64x128xf32>
    %88 = tpu.matmul %85, %87, %cst_34 {dimension_numbers = #tpu.dot_dimension_numbers<[1], [0], [0], [1], [0, 0, 1, 1], [], []>} : vector<64x128xbf16>, vector<128x128xbf16>, vector<64x128xf32> -> vector<64x128xf32>
    %89 = arith.addf %49, %88 : vector<64x128xf32>
    %c0_i32_35 = arith.constant 0 : i32
    %90 = arith.addi %0, %c0_i32_35 : i32
    %c0_36 = arith.constant 0 : index
    %91 = arith.index_cast %90 : i32 to index
    %c1_37 = arith.constant 1 : index
    %c0_38 = arith.constant 0 : index
    %92 = vector.load %arg2[%c0_36, %91, %c1_37, %c0_38] : memref<1x9x9x512xbf16, #tpu.memory_space<vmem>>, vector<1x8x8x128xbf16>
    %93 = vector.shape_cast %92 : vector<1x8x8x128xbf16> to vector<8x8x128xbf16>
    %94 = arith.extf %93 : vector<8x8x128xbf16> to vector<8x8x128xf32>
    %95 = vector.broadcast %2 : vector<1x1x128xf32> to vector<8x8x128xf32>
    %96 = arith.mulf %94, %95 : vector<8x8x128xf32>
    %97 = vector.broadcast %4 : vector<1x1x128xf32> to vector<8x8x128xf32>
    %98 = arith.addf %96, %97 : vector<8x8x128xf32>
    %cst_39 = arith.constant 0.000000e+00 : f32
    %99 = vector.broadcast %cst_39 : f32 to vector<8x8x128xf32>
    %100 = arith.maximumf %98, %99 : vector<8x8x128xf32>
    %c2_i32_40 = arith.constant 2 : i32
    %101 = vector.broadcast %c2_i32_40 : i32 to vector<8x8x1xi32>
    %102 = arith.muli %7, %101 : vector<8x8x1xi32>
    %c0_i32_41 = arith.constant 0 : i32
    %103 = vector.broadcast %c0_i32_41 : i32 to vector<8x8x1xi32>
    %104 = arith.addi %102, %103 : vector<8x8x1xi32>
    %c2_i32_42 = arith.constant 2 : i32
    %105 = vector.broadcast %c2_i32_42 : i32 to vector<8x8x1xi32>
    %106 = arith.muli %8, %105 : vector<8x8x1xi32>
    %c2_i32_43 = arith.constant 2 : i32
    %107 = vector.broadcast %c2_i32_43 : i32 to vector<8x8x1xi32>
    %108 = arith.addi %106, %107 : vector<8x8x1xi32>
    %c1_i32_44 = arith.constant 1 : i32
    %109 = vector.broadcast %c1_i32_44 : i32 to vector<8x8x1xi32>
    %110 = arith.cmpi sge, %104, %109 : vector<8x8x1xi32>
    %c16_i32_45 = arith.constant 16 : i32
    %111 = vector.broadcast %c16_i32_45 : i32 to vector<8x8x1xi32>
    %112 = arith.cmpi sle, %104, %111 : vector<8x8x1xi32>
    %113 = arith.andi %110, %112 : vector<8x8x1xi1>
    %c1_i32_46 = arith.constant 1 : i32
    %114 = vector.broadcast %c1_i32_46 : i32 to vector<8x8x1xi32>
    %115 = arith.cmpi sge, %108, %114 : vector<8x8x1xi32>
    %116 = arith.andi %113, %115 : vector<8x8x1xi1>
    %c16_i32_47 = arith.constant 16 : i32
    %117 = vector.broadcast %c16_i32_47 : i32 to vector<8x8x1xi32>
    %118 = arith.cmpi sle, %108, %117 : vector<8x8x1xi32>
    %119 = arith.andi %116, %118 : vector<8x8x1xi1>
    %cst_48 = arith.constant 0.000000e+00 : f32
    %120 = vector.shape_cast %119 : vector<8x8x1xi1> to vector<8x8x1xi1>
    %121 = vector.broadcast %120 : vector<8x8x1xi1> to vector<8x8x128xi1>
    %122 = vector.broadcast %cst_48 : f32 to vector<8x8x128xf32>
    %123 = arith.select %121, %100, %122 : vector<8x8x128xi1>, vector<8x8x128xf32>
    %124 = arith.truncf %123 : vector<8x8x128xf32> to vector<8x8x128xbf16>
    %125 = vector.shape_cast %124 : vector<8x8x128xbf16> to vector<64x128xbf16>
    %c0_49 = arith.constant 0 : index
    %c2 = arith.constant 2 : index
    %c0_50 = arith.constant 0 : index
    %c0_51 = arith.constant 0 : index
    %126 = vector.load %arg5[%c0_49, %c2, %c0_50, %c0_51] : memref<3x3x128x128xbf16, #tpu.memory_space<vmem>>, vector<1x1x128x128xbf16>
    %127 = vector.shape_cast %126 : vector<1x1x128x128xbf16> to vector<128x128xbf16>
    %cst_52 = arith.constant dense<0.000000e+00> : vector<64x128xf32>
    %128 = tpu.matmul %125, %127, %cst_52 {dimension_numbers = #tpu.dot_dimension_numbers<[1], [0], [0], [1], [0, 0, 1, 1], [], []>} : vector<64x128xbf16>, vector<128x128xbf16>, vector<64x128xf32> -> vector<64x128xf32>
    %129 = arith.addf %89, %128 : vector<64x128xf32>
    %c0_i32_53 = arith.constant 0 : i32
    %130 = arith.addi %0, %c0_i32_53 : i32
    %c0_54 = arith.constant 0 : index
    %131 = arith.index_cast %130 : i32 to index
    %c0_55 = arith.constant 0 : index
    %c256 = arith.constant 256 : index
    %132 = vector.load %arg2[%c0_54, %131, %c0_55, %c256] : memref<1x9x9x512xbf16, #tpu.memory_space<vmem>>, vector<1x8x8x128xbf16>
    %133 = vector.shape_cast %132 : vector<1x8x8x128xbf16> to vector<8x8x128xbf16>
    %134 = arith.extf %133 : vector<8x8x128xbf16> to vector<8x8x128xf32>
    %135 = vector.broadcast %2 : vector<1x1x128xf32> to vector<8x8x128xf32>
    %136 = arith.mulf %134, %135 : vector<8x8x128xf32>
    %137 = vector.broadcast %4 : vector<1x1x128xf32> to vector<8x8x128xf32>
    %138 = arith.addf %136, %137 : vector<8x8x128xf32>
    %cst_56 = arith.constant 0.000000e+00 : f32
    %139 = vector.broadcast %cst_56 : f32 to vector<8x8x128xf32>
    %140 = arith.maximumf %138, %139 : vector<8x8x128xf32>
    %c2_i32_57 = arith.constant 2 : i32
    %141 = vector.broadcast %c2_i32_57 : i32 to vector<8x8x1xi32>
    %142 = arith.muli %7, %141 : vector<8x8x1xi32>
    %c1_i32_58 = arith.constant 1 : i32
    %143 = vector.broadcast %c1_i32_58 : i32 to vector<8x8x1xi32>
    %144 = arith.addi %142, %143 : vector<8x8x1xi32>
    %c2_i32_59 = arith.constant 2 : i32
    %145 = vector.broadcast %c2_i32_59 : i32 to vector<8x8x1xi32>
    %146 = arith.muli %8, %145 : vector<8x8x1xi32>
    %c0_i32_60 = arith.constant 0 : i32
    %147 = vector.broadcast %c0_i32_60 : i32 to vector<8x8x1xi32>
    %148 = arith.addi %146, %147 : vector<8x8x1xi32>
    %c1_i32_61 = arith.constant 1 : i32
    %149 = vector.broadcast %c1_i32_61 : i32 to vector<8x8x1xi32>
    %150 = arith.cmpi sge, %144, %149 : vector<8x8x1xi32>
    %c16_i32_62 = arith.constant 16 : i32
    %151 = vector.broadcast %c16_i32_62 : i32 to vector<8x8x1xi32>
    %152 = arith.cmpi sle, %144, %151 : vector<8x8x1xi32>
    %153 = arith.andi %150, %152 : vector<8x8x1xi1>
    %c1_i32_63 = arith.constant 1 : i32
    %154 = vector.broadcast %c1_i32_63 : i32 to vector<8x8x1xi32>
    %155 = arith.cmpi sge, %148, %154 : vector<8x8x1xi32>
    %156 = arith.andi %153, %155 : vector<8x8x1xi1>
    %c16_i32_64 = arith.constant 16 : i32
    %157 = vector.broadcast %c16_i32_64 : i32 to vector<8x8x1xi32>
    %158 = arith.cmpi sle, %148, %157 : vector<8x8x1xi32>
    %159 = arith.andi %156, %158 : vector<8x8x1xi1>
    %cst_65 = arith.constant 0.000000e+00 : f32
    %160 = vector.shape_cast %159 : vector<8x8x1xi1> to vector<8x8x1xi1>
    %161 = vector.broadcast %160 : vector<8x8x1xi1> to vector<8x8x128xi1>
    %162 = vector.broadcast %cst_65 : f32 to vector<8x8x128xf32>
    %163 = arith.select %161, %140, %162 : vector<8x8x128xi1>, vector<8x8x128xf32>
    %164 = arith.truncf %163 : vector<8x8x128xf32> to vector<8x8x128xbf16>
    %165 = vector.shape_cast %164 : vector<8x8x128xbf16> to vector<64x128xbf16>
    %c1_66 = arith.constant 1 : index
    %c0_67 = arith.constant 0 : index
    %c0_68 = arith.constant 0 : index
    %c0_69 = arith.constant 0 : index
    %166 = vector.load %arg5[%c1_66, %c0_67, %c0_68, %c0_69] : memref<3x3x128x128xbf16, #tpu.memory_space<vmem>>, vector<1x1x128x128xbf16>
    %167 = vector.shape_cast %166 : vector<1x1x128x128xbf16> to vector<128x128xbf16>
    %cst_70 = arith.constant dense<0.000000e+00> : vector<64x128xf32>
    %168 = tpu.matmul %165, %167, %cst_70 {dimension_numbers = #tpu.dot_dimension_numbers<[1], [0], [0], [1], [0, 0, 1, 1], [], []>} : vector<64x128xbf16>, vector<128x128xbf16>, vector<64x128xf32> -> vector<64x128xf32>
    %169 = arith.addf %129, %168 : vector<64x128xf32>
    %c0_i32_71 = arith.constant 0 : i32
    %170 = arith.addi %0, %c0_i32_71 : i32
    %c0_72 = arith.constant 0 : index
    %171 = arith.index_cast %170 : i32 to index
    %c0_73 = arith.constant 0 : index
    %c384 = arith.constant 384 : index
    %172 = vector.load %arg2[%c0_72, %171, %c0_73, %c384] : memref<1x9x9x512xbf16, #tpu.memory_space<vmem>>, vector<1x8x8x128xbf16>
    %173 = vector.shape_cast %172 : vector<1x8x8x128xbf16> to vector<8x8x128xbf16>
    %174 = arith.extf %173 : vector<8x8x128xbf16> to vector<8x8x128xf32>
    %175 = vector.broadcast %2 : vector<1x1x128xf32> to vector<8x8x128xf32>
    %176 = arith.mulf %174, %175 : vector<8x8x128xf32>
    %177 = vector.broadcast %4 : vector<1x1x128xf32> to vector<8x8x128xf32>
    %178 = arith.addf %176, %177 : vector<8x8x128xf32>
    %cst_74 = arith.constant 0.000000e+00 : f32
    %179 = vector.broadcast %cst_74 : f32 to vector<8x8x128xf32>
    %180 = arith.maximumf %178, %179 : vector<8x8x128xf32>
    %c2_i32_75 = arith.constant 2 : i32
    %181 = vector.broadcast %c2_i32_75 : i32 to vector<8x8x1xi32>
    %182 = arith.muli %7, %181 : vector<8x8x1xi32>
    %c1_i32_76 = arith.constant 1 : i32
    %183 = vector.broadcast %c1_i32_76 : i32 to vector<8x8x1xi32>
    %184 = arith.addi %182, %183 : vector<8x8x1xi32>
    %c2_i32_77 = arith.constant 2 : i32
    %185 = vector.broadcast %c2_i32_77 : i32 to vector<8x8x1xi32>
    %186 = arith.muli %8, %185 : vector<8x8x1xi32>
    %c1_i32_78 = arith.constant 1 : i32
    %187 = vector.broadcast %c1_i32_78 : i32 to vector<8x8x1xi32>
    %188 = arith.addi %186, %187 : vector<8x8x1xi32>
    %c1_i32_79 = arith.constant 1 : i32
    %189 = vector.broadcast %c1_i32_79 : i32 to vector<8x8x1xi32>
    %190 = arith.cmpi sge, %184, %189 : vector<8x8x1xi32>
    %c16_i32_80 = arith.constant 16 : i32
    %191 = vector.broadcast %c16_i32_80 : i32 to vector<8x8x1xi32>
    %192 = arith.cmpi sle, %184, %191 : vector<8x8x1xi32>
    %193 = arith.andi %190, %192 : vector<8x8x1xi1>
    %c1_i32_81 = arith.constant 1 : i32
    %194 = vector.broadcast %c1_i32_81 : i32 to vector<8x8x1xi32>
    %195 = arith.cmpi sge, %188, %194 : vector<8x8x1xi32>
    %196 = arith.andi %193, %195 : vector<8x8x1xi1>
    %c16_i32_82 = arith.constant 16 : i32
    %197 = vector.broadcast %c16_i32_82 : i32 to vector<8x8x1xi32>
    %198 = arith.cmpi sle, %188, %197 : vector<8x8x1xi32>
    %199 = arith.andi %196, %198 : vector<8x8x1xi1>
    %cst_83 = arith.constant 0.000000e+00 : f32
    %200 = vector.shape_cast %199 : vector<8x8x1xi1> to vector<8x8x1xi1>
    %201 = vector.broadcast %200 : vector<8x8x1xi1> to vector<8x8x128xi1>
    %202 = vector.broadcast %cst_83 : f32 to vector<8x8x128xf32>
    %203 = arith.select %201, %180, %202 : vector<8x8x128xi1>, vector<8x8x128xf32>
    %204 = arith.truncf %203 : vector<8x8x128xf32> to vector<8x8x128xbf16>
    %205 = vector.shape_cast %204 : vector<8x8x128xbf16> to vector<64x128xbf16>
    %c1_84 = arith.constant 1 : index
    %c1_85 = arith.constant 1 : index
    %c0_86 = arith.constant 0 : index
    %c0_87 = arith.constant 0 : index
    %206 = vector.load %arg5[%c1_84, %c1_85, %c0_86, %c0_87] : memref<3x3x128x128xbf16, #tpu.memory_space<vmem>>, vector<1x1x128x128xbf16>
    %207 = vector.shape_cast %206 : vector<1x1x128x128xbf16> to vector<128x128xbf16>
    %cst_88 = arith.constant dense<0.000000e+00> : vector<64x128xf32>
    %208 = tpu.matmul %205, %207, %cst_88 {dimension_numbers = #tpu.dot_dimension_numbers<[1], [0], [0], [1], [0, 0, 1, 1], [], []>} : vector<64x128xbf16>, vector<128x128xbf16>, vector<64x128xf32> -> vector<64x128xf32>
    %209 = arith.addf %169, %208 : vector<64x128xf32>
    %c0_i32_89 = arith.constant 0 : i32
    %210 = arith.addi %0, %c0_i32_89 : i32
    %c0_90 = arith.constant 0 : index
    %211 = arith.index_cast %210 : i32 to index
    %c1_91 = arith.constant 1 : index
    %c256_92 = arith.constant 256 : index
    %212 = vector.load %arg2[%c0_90, %211, %c1_91, %c256_92] : memref<1x9x9x512xbf16, #tpu.memory_space<vmem>>, vector<1x8x8x128xbf16>
    %213 = vector.shape_cast %212 : vector<1x8x8x128xbf16> to vector<8x8x128xbf16>
    %214 = arith.extf %213 : vector<8x8x128xbf16> to vector<8x8x128xf32>
    %215 = vector.broadcast %2 : vector<1x1x128xf32> to vector<8x8x128xf32>
    %216 = arith.mulf %214, %215 : vector<8x8x128xf32>
    %217 = vector.broadcast %4 : vector<1x1x128xf32> to vector<8x8x128xf32>
    %218 = arith.addf %216, %217 : vector<8x8x128xf32>
    %cst_93 = arith.constant 0.000000e+00 : f32
    %219 = vector.broadcast %cst_93 : f32 to vector<8x8x128xf32>
    %220 = arith.maximumf %218, %219 : vector<8x8x128xf32>
    %c2_i32_94 = arith.constant 2 : i32
    %221 = vector.broadcast %c2_i32_94 : i32 to vector<8x8x1xi32>
    %222 = arith.muli %7, %221 : vector<8x8x1xi32>
    %c1_i32_95 = arith.constant 1 : i32
    %223 = vector.broadcast %c1_i32_95 : i32 to vector<8x8x1xi32>
    %224 = arith.addi %222, %223 : vector<8x8x1xi32>
    %c2_i32_96 = arith.constant 2 : i32
    %225 = vector.broadcast %c2_i32_96 : i32 to vector<8x8x1xi32>
    %226 = arith.muli %8, %225 : vector<8x8x1xi32>
    %c2_i32_97 = arith.constant 2 : i32
    %227 = vector.broadcast %c2_i32_97 : i32 to vector<8x8x1xi32>
    %228 = arith.addi %226, %227 : vector<8x8x1xi32>
    %c1_i32_98 = arith.constant 1 : i32
    %229 = vector.broadcast %c1_i32_98 : i32 to vector<8x8x1xi32>
    %230 = arith.cmpi sge, %224, %229 : vector<8x8x1xi32>
    %c16_i32_99 = arith.constant 16 : i32
    %231 = vector.broadcast %c16_i32_99 : i32 to vector<8x8x1xi32>
    %232 = arith.cmpi sle, %224, %231 : vector<8x8x1xi32>
    %233 = arith.andi %230, %232 : vector<8x8x1xi1>
    %c1_i32_100 = arith.constant 1 : i32
    %234 = vector.broadcast %c1_i32_100 : i32 to vector<8x8x1xi32>
    %235 = arith.cmpi sge, %228, %234 : vector<8x8x1xi32>
    %236 = arith.andi %233, %235 : vector<8x8x1xi1>
    %c16_i32_101 = arith.constant 16 : i32
    %237 = vector.broadcast %c16_i32_101 : i32 to vector<8x8x1xi32>
    %238 = arith.cmpi sle, %228, %237 : vector<8x8x1xi32>
    %239 = arith.andi %236, %238 : vector<8x8x1xi1>
    %cst_102 = arith.constant 0.000000e+00 : f32
    %240 = vector.shape_cast %239 : vector<8x8x1xi1> to vector<8x8x1xi1>
    %241 = vector.broadcast %240 : vector<8x8x1xi1> to vector<8x8x128xi1>
    %242 = vector.broadcast %cst_102 : f32 to vector<8x8x128xf32>
    %243 = arith.select %241, %220, %242 : vector<8x8x128xi1>, vector<8x8x128xf32>
    %244 = arith.truncf %243 : vector<8x8x128xf32> to vector<8x8x128xbf16>
    %245 = vector.shape_cast %244 : vector<8x8x128xbf16> to vector<64x128xbf16>
    %c1_103 = arith.constant 1 : index
    %c2_104 = arith.constant 2 : index
    %c0_105 = arith.constant 0 : index
    %c0_106 = arith.constant 0 : index
    %246 = vector.load %arg5[%c1_103, %c2_104, %c0_105, %c0_106] : memref<3x3x128x128xbf16, #tpu.memory_space<vmem>>, vector<1x1x128x128xbf16>
    %247 = vector.shape_cast %246 : vector<1x1x128x128xbf16> to vector<128x128xbf16>
    %cst_107 = arith.constant dense<0.000000e+00> : vector<64x128xf32>
    %248 = tpu.matmul %245, %247, %cst_107 {dimension_numbers = #tpu.dot_dimension_numbers<[1], [0], [0], [1], [0, 0, 1, 1], [], []>} : vector<64x128xbf16>, vector<128x128xbf16>, vector<64x128xf32> -> vector<64x128xf32>
    %249 = arith.addf %209, %248 : vector<64x128xf32>
    %c1_i32_108 = arith.constant 1 : i32
    %250 = arith.addi %0, %c1_i32_108 : i32
    %c0_109 = arith.constant 0 : index
    %251 = arith.index_cast %250 : i32 to index
    %c0_110 = arith.constant 0 : index
    %c0_111 = arith.constant 0 : index
    %252 = vector.load %arg2[%c0_109, %251, %c0_110, %c0_111] : memref<1x9x9x512xbf16, #tpu.memory_space<vmem>>, vector<1x8x8x128xbf16>
    %253 = vector.shape_cast %252 : vector<1x8x8x128xbf16> to vector<8x8x128xbf16>
    %254 = arith.extf %253 : vector<8x8x128xbf16> to vector<8x8x128xf32>
    %255 = vector.broadcast %2 : vector<1x1x128xf32> to vector<8x8x128xf32>
    %256 = arith.mulf %254, %255 : vector<8x8x128xf32>
    %257 = vector.broadcast %4 : vector<1x1x128xf32> to vector<8x8x128xf32>
    %258 = arith.addf %256, %257 : vector<8x8x128xf32>
    %cst_112 = arith.constant 0.000000e+00 : f32
    %259 = vector.broadcast %cst_112 : f32 to vector<8x8x128xf32>
    %260 = arith.maximumf %258, %259 : vector<8x8x128xf32>
    %c2_i32_113 = arith.constant 2 : i32
    %261 = vector.broadcast %c2_i32_113 : i32 to vector<8x8x1xi32>
    %262 = arith.muli %7, %261 : vector<8x8x1xi32>
    %c2_i32_114 = arith.constant 2 : i32
    %263 = vector.broadcast %c2_i32_114 : i32 to vector<8x8x1xi32>
    %264 = arith.addi %262, %263 : vector<8x8x1xi32>
    %c2_i32_115 = arith.constant 2 : i32
    %265 = vector.broadcast %c2_i32_115 : i32 to vector<8x8x1xi32>
    %266 = arith.muli %8, %265 : vector<8x8x1xi32>
    %c0_i32_116 = arith.constant 0 : i32
    %267 = vector.broadcast %c0_i32_116 : i32 to vector<8x8x1xi32>
    %268 = arith.addi %266, %267 : vector<8x8x1xi32>
    %c1_i32_117 = arith.constant 1 : i32
    %269 = vector.broadcast %c1_i32_117 : i32 to vector<8x8x1xi32>
    %270 = arith.cmpi sge, %264, %269 : vector<8x8x1xi32>
    %c16_i32_118 = arith.constant 16 : i32
    %271 = vector.broadcast %c16_i32_118 : i32 to vector<8x8x1xi32>
    %272 = arith.cmpi sle, %264, %271 : vector<8x8x1xi32>
    %273 = arith.andi %270, %272 : vector<8x8x1xi1>
    %c1_i32_119 = arith.constant 1 : i32
    %274 = vector.broadcast %c1_i32_119 : i32 to vector<8x8x1xi32>
    %275 = arith.cmpi sge, %268, %274 : vector<8x8x1xi32>
    %276 = arith.andi %273, %275 : vector<8x8x1xi1>
    %c16_i32_120 = arith.constant 16 : i32
    %277 = vector.broadcast %c16_i32_120 : i32 to vector<8x8x1xi32>
    %278 = arith.cmpi sle, %268, %277 : vector<8x8x1xi32>
    %279 = arith.andi %276, %278 : vector<8x8x1xi1>
    %cst_121 = arith.constant 0.000000e+00 : f32
    %280 = vector.shape_cast %279 : vector<8x8x1xi1> to vector<8x8x1xi1>
    %281 = vector.broadcast %280 : vector<8x8x1xi1> to vector<8x8x128xi1>
    %282 = vector.broadcast %cst_121 : f32 to vector<8x8x128xf32>
    %283 = arith.select %281, %260, %282 : vector<8x8x128xi1>, vector<8x8x128xf32>
    %284 = arith.truncf %283 : vector<8x8x128xf32> to vector<8x8x128xbf16>
    %285 = vector.shape_cast %284 : vector<8x8x128xbf16> to vector<64x128xbf16>
    %c2_122 = arith.constant 2 : index
    %c0_123 = arith.constant 0 : index
    %c0_124 = arith.constant 0 : index
    %c0_125 = arith.constant 0 : index
    %286 = vector.load %arg5[%c2_122, %c0_123, %c0_124, %c0_125] : memref<3x3x128x128xbf16, #tpu.memory_space<vmem>>, vector<1x1x128x128xbf16>
    %287 = vector.shape_cast %286 : vector<1x1x128x128xbf16> to vector<128x128xbf16>
    %cst_126 = arith.constant dense<0.000000e+00> : vector<64x128xf32>
    %288 = tpu.matmul %285, %287, %cst_126 {dimension_numbers = #tpu.dot_dimension_numbers<[1], [0], [0], [1], [0, 0, 1, 1], [], []>} : vector<64x128xbf16>, vector<128x128xbf16>, vector<64x128xf32> -> vector<64x128xf32>
    %289 = arith.addf %249, %288 : vector<64x128xf32>
    %c1_i32_127 = arith.constant 1 : i32
    %290 = arith.addi %0, %c1_i32_127 : i32
    %c0_128 = arith.constant 0 : index
    %291 = arith.index_cast %290 : i32 to index
    %c0_129 = arith.constant 0 : index
    %c128_130 = arith.constant 128 : index
    %292 = vector.load %arg2[%c0_128, %291, %c0_129, %c128_130] : memref<1x9x9x512xbf16, #tpu.memory_space<vmem>>, vector<1x8x8x128xbf16>
    %293 = vector.shape_cast %292 : vector<1x8x8x128xbf16> to vector<8x8x128xbf16>
    %294 = arith.extf %293 : vector<8x8x128xbf16> to vector<8x8x128xf32>
    %295 = vector.broadcast %2 : vector<1x1x128xf32> to vector<8x8x128xf32>
    %296 = arith.mulf %294, %295 : vector<8x8x128xf32>
    %297 = vector.broadcast %4 : vector<1x1x128xf32> to vector<8x8x128xf32>
    %298 = arith.addf %296, %297 : vector<8x8x128xf32>
    %cst_131 = arith.constant 0.000000e+00 : f32
    %299 = vector.broadcast %cst_131 : f32 to vector<8x8x128xf32>
    %300 = arith.maximumf %298, %299 : vector<8x8x128xf32>
    %c2_i32_132 = arith.constant 2 : i32
    %301 = vector.broadcast %c2_i32_132 : i32 to vector<8x8x1xi32>
    %302 = arith.muli %7, %301 : vector<8x8x1xi32>
    %c2_i32_133 = arith.constant 2 : i32
    %303 = vector.broadcast %c2_i32_133 : i32 to vector<8x8x1xi32>
    %304 = arith.addi %302, %303 : vector<8x8x1xi32>
    %c2_i32_134 = arith.constant 2 : i32
    %305 = vector.broadcast %c2_i32_134 : i32 to vector<8x8x1xi32>
    %306 = arith.muli %8, %305 : vector<8x8x1xi32>
    %c1_i32_135 = arith.constant 1 : i32
    %307 = vector.broadcast %c1_i32_135 : i32 to vector<8x8x1xi32>
    %308 = arith.addi %306, %307 : vector<8x8x1xi32>
    %c1_i32_136 = arith.constant 1 : i32
    %309 = vector.broadcast %c1_i32_136 : i32 to vector<8x8x1xi32>
    %310 = arith.cmpi sge, %304, %309 : vector<8x8x1xi32>
    %c16_i32_137 = arith.constant 16 : i32
    %311 = vector.broadcast %c16_i32_137 : i32 to vector<8x8x1xi32>
    %312 = arith.cmpi sle, %304, %311 : vector<8x8x1xi32>
    %313 = arith.andi %310, %312 : vector<8x8x1xi1>
    %c1_i32_138 = arith.constant 1 : i32
    %314 = vector.broadcast %c1_i32_138 : i32 to vector<8x8x1xi32>
    %315 = arith.cmpi sge, %308, %314 : vector<8x8x1xi32>
    %316 = arith.andi %313, %315 : vector<8x8x1xi1>
    %c16_i32_139 = arith.constant 16 : i32
    %317 = vector.broadcast %c16_i32_139 : i32 to vector<8x8x1xi32>
    %318 = arith.cmpi sle, %308, %317 : vector<8x8x1xi32>
    %319 = arith.andi %316, %318 : vector<8x8x1xi1>
    %cst_140 = arith.constant 0.000000e+00 : f32
    %320 = vector.shape_cast %319 : vector<8x8x1xi1> to vector<8x8x1xi1>
    %321 = vector.broadcast %320 : vector<8x8x1xi1> to vector<8x8x128xi1>
    %322 = vector.broadcast %cst_140 : f32 to vector<8x8x128xf32>
    %323 = arith.select %321, %300, %322 : vector<8x8x128xi1>, vector<8x8x128xf32>
    %324 = arith.truncf %323 : vector<8x8x128xf32> to vector<8x8x128xbf16>
    %325 = vector.shape_cast %324 : vector<8x8x128xbf16> to vector<64x128xbf16>
    %c2_141 = arith.constant 2 : index
    %c1_142 = arith.constant 1 : index
    %c0_143 = arith.constant 0 : index
    %c0_144 = arith.constant 0 : index
    %326 = vector.load %arg5[%c2_141, %c1_142, %c0_143, %c0_144] : memref<3x3x128x128xbf16, #tpu.memory_space<vmem>>, vector<1x1x128x128xbf16>
    %327 = vector.shape_cast %326 : vector<1x1x128x128xbf16> to vector<128x128xbf16>
    %cst_145 = arith.constant dense<0.000000e+00> : vector<64x128xf32>
    %328 = tpu.matmul %325, %327, %cst_145 {dimension_numbers = #tpu.dot_dimension_numbers<[1], [0], [0], [1], [0, 0, 1, 1], [], []>} : vector<64x128xbf16>, vector<128x128xbf16>, vector<64x128xf32> -> vector<64x128xf32>
    %329 = arith.addf %289, %328 : vector<64x128xf32>
    %c1_i32_146 = arith.constant 1 : i32
    %330 = arith.addi %0, %c1_i32_146 : i32
    %c0_147 = arith.constant 0 : index
    %331 = arith.index_cast %330 : i32 to index
    %c1_148 = arith.constant 1 : index
    %c0_149 = arith.constant 0 : index
    %332 = vector.load %arg2[%c0_147, %331, %c1_148, %c0_149] : memref<1x9x9x512xbf16, #tpu.memory_space<vmem>>, vector<1x8x8x128xbf16>
    %333 = vector.shape_cast %332 : vector<1x8x8x128xbf16> to vector<8x8x128xbf16>
    %334 = arith.extf %333 : vector<8x8x128xbf16> to vector<8x8x128xf32>
    %335 = vector.broadcast %2 : vector<1x1x128xf32> to vector<8x8x128xf32>
    %336 = arith.mulf %334, %335 : vector<8x8x128xf32>
    %337 = vector.broadcast %4 : vector<1x1x128xf32> to vector<8x8x128xf32>
    %338 = arith.addf %336, %337 : vector<8x8x128xf32>
    %cst_150 = arith.constant 0.000000e+00 : f32
    %339 = vector.broadcast %cst_150 : f32 to vector<8x8x128xf32>
    %340 = arith.maximumf %338, %339 : vector<8x8x128xf32>
    %c2_i32_151 = arith.constant 2 : i32
    %341 = vector.broadcast %c2_i32_151 : i32 to vector<8x8x1xi32>
    %342 = arith.muli %7, %341 : vector<8x8x1xi32>
    %c2_i32_152 = arith.constant 2 : i32
    %343 = vector.broadcast %c2_i32_152 : i32 to vector<8x8x1xi32>
    %344 = arith.addi %342, %343 : vector<8x8x1xi32>
    %c2_i32_153 = arith.constant 2 : i32
    %345 = vector.broadcast %c2_i32_153 : i32 to vector<8x8x1xi32>
    %346 = arith.muli %8, %345 : vector<8x8x1xi32>
    %c2_i32_154 = arith.constant 2 : i32
    %347 = vector.broadcast %c2_i32_154 : i32 to vector<8x8x1xi32>
    %348 = arith.addi %346, %347 : vector<8x8x1xi32>
    %c1_i32_155 = arith.constant 1 : i32
    %349 = vector.broadcast %c1_i32_155 : i32 to vector<8x8x1xi32>
    %350 = arith.cmpi sge, %344, %349 : vector<8x8x1xi32>
    %c16_i32_156 = arith.constant 16 : i32
    %351 = vector.broadcast %c16_i32_156 : i32 to vector<8x8x1xi32>
    %352 = arith.cmpi sle, %344, %351 : vector<8x8x1xi32>
    %353 = arith.andi %350, %352 : vector<8x8x1xi1>
    %c1_i32_157 = arith.constant 1 : i32
    %354 = vector.broadcast %c1_i32_157 : i32 to vector<8x8x1xi32>
    %355 = arith.cmpi sge, %348, %354 : vector<8x8x1xi32>
    %356 = arith.andi %353, %355 : vector<8x8x1xi1>
    %c16_i32_158 = arith.constant 16 : i32
    %357 = vector.broadcast %c16_i32_158 : i32 to vector<8x8x1xi32>
    %358 = arith.cmpi sle, %348, %357 : vector<8x8x1xi32>
    %359 = arith.andi %356, %358 : vector<8x8x1xi1>
    %cst_159 = arith.constant 0.000000e+00 : f32
    %360 = vector.shape_cast %359 : vector<8x8x1xi1> to vector<8x8x1xi1>
    %361 = vector.broadcast %360 : vector<8x8x1xi1> to vector<8x8x128xi1>
    %362 = vector.broadcast %cst_159 : f32 to vector<8x8x128xf32>
    %363 = arith.select %361, %340, %362 : vector<8x8x128xi1>, vector<8x8x128xf32>
    %364 = arith.truncf %363 : vector<8x8x128xf32> to vector<8x8x128xbf16>
    %365 = vector.shape_cast %364 : vector<8x8x128xbf16> to vector<64x128xbf16>
    %c2_160 = arith.constant 2 : index
    %c2_161 = arith.constant 2 : index
    %c0_162 = arith.constant 0 : index
    %c0_163 = arith.constant 0 : index
    %366 = vector.load %arg5[%c2_160, %c2_161, %c0_162, %c0_163] : memref<3x3x128x128xbf16, #tpu.memory_space<vmem>>, vector<1x1x128x128xbf16>
    %367 = vector.shape_cast %366 : vector<1x1x128x128xbf16> to vector<128x128xbf16>
    %cst_164 = arith.constant dense<0.000000e+00> : vector<64x128xf32>
    %368 = tpu.matmul %365, %367, %cst_164 {dimension_numbers = #tpu.dot_dimension_numbers<[1], [0], [0], [1], [0, 0, 1, 1], [], []>} : vector<64x128xbf16>, vector<128x128xbf16>, vector<64x128xf32> -> vector<64x128xf32>
    %369 = arith.addf %329, %368 : vector<64x128xf32>
    %370 = arith.truncf %369 : vector<64x128xf32> to vector<64x128xbf16>
    %c0_165 = arith.constant 0 : index
    %c0_166 = arith.constant 0 : index
    %371 = vector.load %arg6[%c0_165, %c0_166] : memref<64x128xbf16, #tpu.memory_space<vmem>>, vector<64x128xbf16>
    tpu.vector_store %arg6[%c0_165, %c0_166], %370 {strides = array<i32>} : memref<64x128xbf16, #tpu.memory_space<vmem>>, vector<64x128xbf16>,
    %cst_167 = arith.constant dense<0.000000e+00> : vector<128xf32>
    %372 = vector.multi_reduction <add>, %369, %cst_167 [0] : vector<64x128xf32> to vector<128xf32>
    %373 = vector.shape_cast %372 : vector<128xf32> to vector<1x128xf32>
    %374 = arith.mulf %369, %369 : vector<64x128xf32>
    %cst_168 = arith.constant dense<0.000000e+00> : vector<128xf32>
    %375 = vector.multi_reduction <add>, %374, %cst_168 [0] : vector<64x128xf32> to vector<128xf32>
    %376 = vector.shape_cast %375 : vector<128xf32> to vector<1x128xf32>
    %377 = tpu.iota {dimensions = array<i32: 0>} : vector<8x128xi32>
    %c0_i32_169 = arith.constant 0 : i32
    %378 = vector.broadcast %c0_i32_169 : i32 to vector<8x128xi32>
    %379 = arith.cmpi eq, %377, %378 : vector<8x128xi32>
    %c1_i32_170 = arith.constant 1 : i32
    %380 = vector.broadcast %c1_i32_170 : i32 to vector<8x128xi32>
    %381 = arith.cmpi eq, %377, %380 : vector<8x128xi32>
    %cst_171 = arith.constant 0.000000e+00 : f32
    %382 = vector.shape_cast %376 : vector<1x128xf32> to vector<1x128xf32>
    %383 = vector.broadcast %382 : vector<1x128xf32> to vector<8x128xf32>
    %384 = vector.broadcast %cst_171 : f32 to vector<8x128xf32>
    %385 = arith.select %381, %383, %384 : vector<8x128xi1>, vector<8x128xf32>
    %386 = vector.shape_cast %373 : vector<1x128xf32> to vector<1x128xf32>
    %387 = vector.broadcast %386 : vector<1x128xf32> to vector<8x128xf32>
    %388 = arith.select %379, %387, %385 : vector<8x128xi1>, vector<8x128xf32>
    %c0_172 = arith.constant 0 : index
    %c0_173 = arith.constant 0 : index
    %389 = vector.load %arg7[%c0_172, %c0_173] : memref<8x128xf32, #tpu.memory_space<vmem>>, vector<8x128xf32>
    tpu.vector_store %arg7[%c0_172, %c0_173], %388 {strides = array<i32>} : memref<8x128xf32, #tpu.memory_space<vmem>>, vector<8x128xf32>,
    return
  }
  func.func @transform_0(%arg0: i32, %arg1: i32) -> (i32, i32, i32, i32) {
    %c0_i32 = arith.constant 0 : i32
    %c0_i32_0 = arith.constant 0 : i32
    %c0_i32_1 = arith.constant 0 : i32
    %c0_i32_2 = arith.constant 0 : i32
    return %arg0, %c0_i32, %c0_i32_0, %c0_i32_1 : i32, i32, i32, i32
  }
  func.func @transform_1(%arg0: i32, %arg1: i32) -> (i32, i32) {
    %c0_i32 = arith.constant 0 : i32
    %c0_i32_0 = arith.constant 0 : i32
    %c0_i32_1 = arith.constant 0 : i32
    return %c0_i32, %c0_i32_0 : i32, i32
  }
  func.func @transform_2(%arg0: i32, %arg1: i32) -> (i32, i32) {
    %c0_i32 = arith.constant 0 : i32
    %c0_i32_0 = arith.constant 0 : i32
    %c0_i32_1 = arith.constant 0 : i32
    return %c0_i32, %c0_i32_0 : i32, i32
  }
  func.func @transform_3(%arg0: i32, %arg1: i32) -> (i32, i32, i32, i32) {
    %c0_i32 = arith.constant 0 : i32
    %c0_i32_0 = arith.constant 0 : i32
    %c0_i32_1 = arith.constant 0 : i32
    %c0_i32_2 = arith.constant 0 : i32
    %c0_i32_3 = arith.constant 0 : i32
    return %c0_i32, %c0_i32_0, %c0_i32_1, %c0_i32_2 : i32, i32, i32, i32
  }
  func.func @transform_4(%arg0: i32, %arg1: i32) -> (i32, i32) {
    %c1_i32 = arith.constant 1 : i32
    %0 = arith.muli %arg0, %c1_i32 : i32
    %1 = arith.addi %0, %arg1 : i32
    %c0_i32 = arith.constant 0 : i32
    %c0_i32_0 = arith.constant 0 : i32
    return %1, %c0_i32 : i32, i32
  }
  func.func @transform_5(%arg0: i32, %arg1: i32) -> (i32, i32) {
    %c1_i32 = arith.constant 1 : i32
    %0 = arith.muli %arg0, %c1_i32 : i32
    %1 = arith.addi %0, %arg1 : i32
    %c0_i32 = arith.constant 0 : i32
    %c0_i32_0 = arith.constant 0 : i32
    return %1, %c0_i32 : i32, i32
  }
}

module attributes {stable_mosaic.version = 11 : i64} {
  func.func @_bn_mm_stats_kernel(%arg0: i32, %arg1: memref<128x128xbf16, #tpu.memory_space<vmem>>, %arg2: memref<1x128xf32, #tpu.memory_space<vmem>>, %arg3: memref<1x128xf32, #tpu.memory_space<vmem>>, %arg4: memref<128x128xbf16, #tpu.memory_space<vmem>>, %arg5: memref<128x128xbf16, #tpu.memory_space<vmem>>, %arg6: memref<8x128xf32, #tpu.memory_space<vmem>>) attributes {dimension_semantics = [#tpu.dimension_semantics<parallel>], iteration_bounds = array<i64: 1>, scalar_prefetch = 0 : i64, scratch_operands = 0 : i64, tpu.core_type = #tpu.core_type<tc>, window_params = [{transform_indices = @transform_0, window_bounds = array<i64: 128, 128>}, {pipeline_mode = #tpu.pipeline_mode<synchronous>, transform_indices = @transform_1, window_bounds = array<i64: 1, 128>}, {pipeline_mode = #tpu.pipeline_mode<synchronous>, transform_indices = @transform_2, window_bounds = array<i64: 1, 128>}, {pipeline_mode = #tpu.pipeline_mode<synchronous>, transform_indices = @transform_3, window_bounds = array<i64: 128, 128>}, {transform_indices = @transform_4, window_bounds = array<i64: 128, 128>}, {transform_indices = @transform_5, window_bounds = array<i64: 8, 128>}]} {
    %c0 = arith.constant 0 : index
    %c0_0 = arith.constant 0 : index
    %0 = vector.load %arg1[%c0, %c0_0] : memref<128x128xbf16, #tpu.memory_space<vmem>>, vector<128x128xbf16>
    %1 = arith.extf %0 : vector<128x128xbf16> to vector<128x128xf32>
    %c0_1 = arith.constant 0 : index
    %c0_2 = arith.constant 0 : index
    %2 = vector.load %arg2[%c0_1, %c0_2] : memref<1x128xf32, #tpu.memory_space<vmem>>, vector<1x128xf32>
    %3 = vector.broadcast %2 : vector<1x128xf32> to vector<128x128xf32>
    %4 = arith.mulf %1, %3 : vector<128x128xf32>
    %c0_3 = arith.constant 0 : index
    %c0_4 = arith.constant 0 : index
    %5 = vector.load %arg3[%c0_3, %c0_4] : memref<1x128xf32, #tpu.memory_space<vmem>>, vector<1x128xf32>
    %6 = vector.broadcast %5 : vector<1x128xf32> to vector<128x128xf32>
    %7 = arith.addf %4, %6 : vector<128x128xf32>
    %cst = arith.constant 0.000000e+00 : f32
    %8 = vector.broadcast %cst : f32 to vector<128x128xf32>
    %9 = arith.maximumf %7, %8 : vector<128x128xf32>
    %10 = arith.truncf %9 : vector<128x128xf32> to vector<128x128xbf16>
    %c0_5 = arith.constant 0 : index
    %c0_6 = arith.constant 0 : index
    %11 = vector.load %arg4[%c0_5, %c0_6] : memref<128x128xbf16, #tpu.memory_space<vmem>>, vector<128x128xbf16>
    %cst_7 = arith.constant dense<0.000000e+00> : vector<128x128xf32>
    %12 = tpu.matmul %10, %11, %cst_7 {dimension_numbers = #tpu.dot_dimension_numbers<[1], [0], [0], [1], [0, 0, 1, 1], [], []>} : vector<128x128xbf16>, vector<128x128xbf16>, vector<128x128xf32> -> vector<128x128xf32>
    %13 = arith.truncf %12 : vector<128x128xf32> to vector<128x128xbf16>
    %c0_8 = arith.constant 0 : index
    %c0_9 = arith.constant 0 : index
    %14 = vector.load %arg5[%c0_8, %c0_9] : memref<128x128xbf16, #tpu.memory_space<vmem>>, vector<128x128xbf16>
    tpu.vector_store %arg5[%c0_8, %c0_9], %13 {strides = array<i32>} : memref<128x128xbf16, #tpu.memory_space<vmem>>, vector<128x128xbf16>,
    %cst_10 = arith.constant dense<0.000000e+00> : vector<128xf32>
    %15 = vector.multi_reduction <add>, %12, %cst_10 [0] : vector<128x128xf32> to vector<128xf32>
    %16 = vector.shape_cast %15 : vector<128xf32> to vector<1x128xf32>
    %17 = arith.mulf %12, %12 : vector<128x128xf32>
    %cst_11 = arith.constant dense<0.000000e+00> : vector<128xf32>
    %18 = vector.multi_reduction <add>, %17, %cst_11 [0] : vector<128x128xf32> to vector<128xf32>
    %19 = vector.shape_cast %18 : vector<128xf32> to vector<1x128xf32>
    %20 = tpu.iota {dimensions = array<i32: 0>} : vector<8x128xi32>
    %c0_i32 = arith.constant 0 : i32
    %21 = vector.broadcast %c0_i32 : i32 to vector<8x128xi32>
    %22 = arith.cmpi eq, %20, %21 : vector<8x128xi32>
    %c1_i32 = arith.constant 1 : i32
    %23 = vector.broadcast %c1_i32 : i32 to vector<8x128xi32>
    %24 = arith.cmpi eq, %20, %23 : vector<8x128xi32>
    %cst_12 = arith.constant 0.000000e+00 : f32
    %25 = vector.shape_cast %19 : vector<1x128xf32> to vector<1x128xf32>
    %26 = vector.broadcast %25 : vector<1x128xf32> to vector<8x128xf32>
    %27 = vector.broadcast %cst_12 : f32 to vector<8x128xf32>
    %28 = arith.select %24, %26, %27 : vector<8x128xi1>, vector<8x128xf32>
    %29 = vector.shape_cast %16 : vector<1x128xf32> to vector<1x128xf32>
    %30 = vector.broadcast %29 : vector<1x128xf32> to vector<8x128xf32>
    %31 = arith.select %22, %30, %28 : vector<8x128xi1>, vector<8x128xf32>
    %c0_13 = arith.constant 0 : index
    %c0_14 = arith.constant 0 : index
    %32 = vector.load %arg6[%c0_13, %c0_14] : memref<8x128xf32, #tpu.memory_space<vmem>>, vector<8x128xf32>
    tpu.vector_store %arg6[%c0_13, %c0_14], %31 {strides = array<i32>} : memref<8x128xf32, #tpu.memory_space<vmem>>, vector<8x128xf32>,
    return
  }
  func.func @transform_0(%arg0: i32) -> (i32, i32) {
    %c0_i32 = arith.constant 0 : i32
    %c0_i32_0 = arith.constant 0 : i32
    return %arg0, %c0_i32 : i32, i32
  }
  func.func @transform_1(%arg0: i32) -> (i32, i32) {
    %c0_i32 = arith.constant 0 : i32
    %c0_i32_0 = arith.constant 0 : i32
    %c0_i32_1 = arith.constant 0 : i32
    return %c0_i32, %c0_i32_0 : i32, i32
  }
  func.func @transform_2(%arg0: i32) -> (i32, i32) {
    %c0_i32 = arith.constant 0 : i32
    %c0_i32_0 = arith.constant 0 : i32
    %c0_i32_1 = arith.constant 0 : i32
    return %c0_i32, %c0_i32_0 : i32, i32
  }
  func.func @transform_3(%arg0: i32) -> (i32, i32) {
    %c0_i32 = arith.constant 0 : i32
    %c0_i32_0 = arith.constant 0 : i32
    %c0_i32_1 = arith.constant 0 : i32
    return %c0_i32, %c0_i32_0 : i32, i32
  }
  func.func @transform_4(%arg0: i32) -> (i32, i32) {
    %c0_i32 = arith.constant 0 : i32
    %c0_i32_0 = arith.constant 0 : i32
    return %arg0, %c0_i32 : i32, i32
  }
  func.func @transform_5(%arg0: i32) -> (i32, i32) {
    %c0_i32 = arith.constant 0 : i32
    %c0_i32_0 = arith.constant 0 : i32
    return %arg0, %c0_i32 : i32, i32
  }
}

module attributes {stable_mosaic.version = 11 : i64} {
  func.func @_mm_stats_kernel(%arg0: i32, %arg1: memref<128x128xbf16, #tpu.memory_space<vmem>>, %arg2: memref<128x128xbf16, #tpu.memory_space<vmem>>, %arg3: memref<128x128xbf16, #tpu.memory_space<vmem>>, %arg4: memref<8x128xf32, #tpu.memory_space<vmem>>) attributes {dimension_semantics = [#tpu.dimension_semantics<parallel>], iteration_bounds = array<i64: 1>, scalar_prefetch = 0 : i64, scratch_operands = 0 : i64, tpu.core_type = #tpu.core_type<tc>, window_params = [{transform_indices = @transform_0, window_bounds = array<i64: 128, 128>}, {pipeline_mode = #tpu.pipeline_mode<synchronous>, transform_indices = @transform_1, window_bounds = array<i64: 128, 128>}, {transform_indices = @transform_2, window_bounds = array<i64: 128, 128>}, {transform_indices = @transform_3, window_bounds = array<i64: 8, 128>}]} {
    %c0 = arith.constant 0 : index
    %c0_0 = arith.constant 0 : index
    %0 = vector.load %arg1[%c0, %c0_0] : memref<128x128xbf16, #tpu.memory_space<vmem>>, vector<128x128xbf16>
    %c0_1 = arith.constant 0 : index
    %c0_2 = arith.constant 0 : index
    %1 = vector.load %arg2[%c0_1, %c0_2] : memref<128x128xbf16, #tpu.memory_space<vmem>>, vector<128x128xbf16>
    %cst = arith.constant dense<0.000000e+00> : vector<128x128xf32>
    %2 = tpu.matmul %0, %1, %cst {dimension_numbers = #tpu.dot_dimension_numbers<[1], [0], [0], [1], [0, 0, 1, 1], [], []>} : vector<128x128xbf16>, vector<128x128xbf16>, vector<128x128xf32> -> vector<128x128xf32>
    %3 = arith.truncf %2 : vector<128x128xf32> to vector<128x128xbf16>
    %c0_3 = arith.constant 0 : index
    %c0_4 = arith.constant 0 : index
    %4 = vector.load %arg3[%c0_3, %c0_4] : memref<128x128xbf16, #tpu.memory_space<vmem>>, vector<128x128xbf16>
    tpu.vector_store %arg3[%c0_3, %c0_4], %3 {strides = array<i32>} : memref<128x128xbf16, #tpu.memory_space<vmem>>, vector<128x128xbf16>,
    %cst_5 = arith.constant dense<0.000000e+00> : vector<128xf32>
    %5 = vector.multi_reduction <add>, %2, %cst_5 [0] : vector<128x128xf32> to vector<128xf32>
    %6 = vector.shape_cast %5 : vector<128xf32> to vector<1x128xf32>
    %7 = arith.mulf %2, %2 : vector<128x128xf32>
    %cst_6 = arith.constant dense<0.000000e+00> : vector<128xf32>
    %8 = vector.multi_reduction <add>, %7, %cst_6 [0] : vector<128x128xf32> to vector<128xf32>
    %9 = vector.shape_cast %8 : vector<128xf32> to vector<1x128xf32>
    %10 = tpu.iota {dimensions = array<i32: 0>} : vector<8x128xi32>
    %c0_i32 = arith.constant 0 : i32
    %11 = vector.broadcast %c0_i32 : i32 to vector<8x128xi32>
    %12 = arith.cmpi eq, %10, %11 : vector<8x128xi32>
    %c1_i32 = arith.constant 1 : i32
    %13 = vector.broadcast %c1_i32 : i32 to vector<8x128xi32>
    %14 = arith.cmpi eq, %10, %13 : vector<8x128xi32>
    %cst_7 = arith.constant 0.000000e+00 : f32
    %15 = vector.shape_cast %9 : vector<1x128xf32> to vector<1x128xf32>
    %16 = vector.broadcast %15 : vector<1x128xf32> to vector<8x128xf32>
    %17 = vector.broadcast %cst_7 : f32 to vector<8x128xf32>
    %18 = arith.select %14, %16, %17 : vector<8x128xi1>, vector<8x128xf32>
    %19 = vector.shape_cast %6 : vector<1x128xf32> to vector<1x128xf32>
    %20 = vector.broadcast %19 : vector<1x128xf32> to vector<8x128xf32>
    %21 = arith.select %12, %20, %18 : vector<8x128xi1>, vector<8x128xf32>
    %c0_8 = arith.constant 0 : index
    %c0_9 = arith.constant 0 : index
    %22 = vector.load %arg4[%c0_8, %c0_9] : memref<8x128xf32, #tpu.memory_space<vmem>>, vector<8x128xf32>
    tpu.vector_store %arg4[%c0_8, %c0_9], %21 {strides = array<i32>} : memref<8x128xf32, #tpu.memory_space<vmem>>, vector<8x128xf32>,
    return
  }
  func.func @transform_0(%arg0: i32) -> (i32, i32) {
    %c0_i32 = arith.constant 0 : i32
    %c0_i32_0 = arith.constant 0 : i32
    return %arg0, %c0_i32 : i32, i32
  }
  func.func @transform_1(%arg0: i32) -> (i32, i32) {
    %c0_i32 = arith.constant 0 : i32
    %c0_i32_0 = arith.constant 0 : i32
    %c0_i32_1 = arith.constant 0 : i32
    return %c0_i32, %c0_i32_0 : i32, i32
  }
  func.func @transform_2(%arg0: i32) -> (i32, i32) {
    %c0_i32 = arith.constant 0 : i32
    %c0_i32_0 = arith.constant 0 : i32
    return %arg0, %c0_i32 : i32, i32
  }
  func.func @transform_3(%arg0: i32) -> (i32, i32) {
    %c0_i32 = arith.constant 0 : i32
    %c0_i32_0 = arith.constant 0 : i32
    return %arg0, %c0_i32 : i32, i32
  }
}

module attributes {stable_mosaic.version = 11 : i64} {
  func.func @_bn_add_bn_relu_kernel(%arg0: i32, %arg1: memref<128x128xbf16, #tpu.memory_space<vmem>>, %arg2: memref<1x128xf32, #tpu.memory_space<vmem>>, %arg3: memref<1x128xf32, #tpu.memory_space<vmem>>, %arg4: memref<128x128xbf16, #tpu.memory_space<vmem>>, %arg5: memref<1x128xf32, #tpu.memory_space<vmem>>, %arg6: memref<1x128xf32, #tpu.memory_space<vmem>>, %arg7: memref<128x128xf32, #tpu.memory_space<vmem>>) attributes {dimension_semantics = [#tpu.dimension_semantics<parallel>], iteration_bounds = array<i64: 1>, scalar_prefetch = 0 : i64, scratch_operands = 0 : i64, tpu.core_type = #tpu.core_type<tc>, window_params = [{transform_indices = @transform_0, window_bounds = array<i64: 128, 128>}, {pipeline_mode = #tpu.pipeline_mode<synchronous>, transform_indices = @transform_1, window_bounds = array<i64: 1, 128>}, {pipeline_mode = #tpu.pipeline_mode<synchronous>, transform_indices = @transform_2, window_bounds = array<i64: 1, 128>}, {transform_indices = @transform_3, window_bounds = array<i64: 128, 128>}, {pipeline_mode = #tpu.pipeline_mode<synchronous>, transform_indices = @transform_4, window_bounds = array<i64: 1, 128>}, {pipeline_mode = #tpu.pipeline_mode<synchronous>, transform_indices = @transform_5, window_bounds = array<i64: 1, 128>}, {transform_indices = @transform_6, window_bounds = array<i64: 128, 128>}]} {
    %c0 = arith.constant 0 : index
    %c0_0 = arith.constant 0 : index
    %0 = vector.load %arg1[%c0, %c0_0] : memref<128x128xbf16, #tpu.memory_space<vmem>>, vector<128x128xbf16>
    %1 = arith.extf %0 : vector<128x128xbf16> to vector<128x128xf32>
    %c0_1 = arith.constant 0 : index
    %c0_2 = arith.constant 0 : index
    %2 = vector.load %arg2[%c0_1, %c0_2] : memref<1x128xf32, #tpu.memory_space<vmem>>, vector<1x128xf32>
    %3 = vector.broadcast %2 : vector<1x128xf32> to vector<128x128xf32>
    %4 = arith.mulf %1, %3 : vector<128x128xf32>
    %c0_3 = arith.constant 0 : index
    %c0_4 = arith.constant 0 : index
    %5 = vector.load %arg3[%c0_3, %c0_4] : memref<1x128xf32, #tpu.memory_space<vmem>>, vector<1x128xf32>
    %6 = vector.broadcast %5 : vector<1x128xf32> to vector<128x128xf32>
    %7 = arith.addf %4, %6 : vector<128x128xf32>
    %c0_5 = arith.constant 0 : index
    %c0_6 = arith.constant 0 : index
    %8 = vector.load %arg4[%c0_5, %c0_6] : memref<128x128xbf16, #tpu.memory_space<vmem>>, vector<128x128xbf16>
    %9 = arith.extf %8 : vector<128x128xbf16> to vector<128x128xf32>
    %c0_7 = arith.constant 0 : index
    %c0_8 = arith.constant 0 : index
    %10 = vector.load %arg5[%c0_7, %c0_8] : memref<1x128xf32, #tpu.memory_space<vmem>>, vector<1x128xf32>
    %11 = vector.broadcast %10 : vector<1x128xf32> to vector<128x128xf32>
    %12 = arith.mulf %9, %11 : vector<128x128xf32>
    %c0_9 = arith.constant 0 : index
    %c0_10 = arith.constant 0 : index
    %13 = vector.load %arg6[%c0_9, %c0_10] : memref<1x128xf32, #tpu.memory_space<vmem>>, vector<1x128xf32>
    %14 = vector.broadcast %13 : vector<1x128xf32> to vector<128x128xf32>
    %15 = arith.addf %12, %14 : vector<128x128xf32>
    %16 = arith.addf %7, %15 : vector<128x128xf32>
    %cst = arith.constant 0.000000e+00 : f32
    %17 = vector.broadcast %cst : f32 to vector<128x128xf32>
    %18 = arith.maximumf %16, %17 : vector<128x128xf32>
    %c0_11 = arith.constant 0 : index
    %c0_12 = arith.constant 0 : index
    %19 = vector.load %arg7[%c0_11, %c0_12] : memref<128x128xf32, #tpu.memory_space<vmem>>, vector<128x128xf32>
    tpu.vector_store %arg7[%c0_11, %c0_12], %18 {strides = array<i32>} : memref<128x128xf32, #tpu.memory_space<vmem>>, vector<128x128xf32>,
    return
  }
  func.func @transform_0(%arg0: i32) -> (i32, i32) {
    %c0_i32 = arith.constant 0 : i32
    %c0_i32_0 = arith.constant 0 : i32
    return %arg0, %c0_i32 : i32, i32
  }
  func.func @transform_1(%arg0: i32) -> (i32, i32) {
    %c0_i32 = arith.constant 0 : i32
    %c0_i32_0 = arith.constant 0 : i32
    %c0_i32_1 = arith.constant 0 : i32
    return %c0_i32, %c0_i32_0 : i32, i32
  }
  func.func @transform_2(%arg0: i32) -> (i32, i32) {
    %c0_i32 = arith.constant 0 : i32
    %c0_i32_0 = arith.constant 0 : i32
    %c0_i32_1 = arith.constant 0 : i32
    return %c0_i32, %c0_i32_0 : i32, i32
  }
  func.func @transform_3(%arg0: i32) -> (i32, i32) {
    %c0_i32 = arith.constant 0 : i32
    %c0_i32_0 = arith.constant 0 : i32
    return %arg0, %c0_i32 : i32, i32
  }
  func.func @transform_4(%arg0: i32) -> (i32, i32) {
    %c0_i32 = arith.constant 0 : i32
    %c0_i32_0 = arith.constant 0 : i32
    %c0_i32_1 = arith.constant 0 : i32
    return %c0_i32, %c0_i32_0 : i32, i32
  }
  func.func @transform_5(%arg0: i32) -> (i32, i32) {
    %c0_i32 = arith.constant 0 : i32
    %c0_i32_0 = arith.constant 0 : i32
    %c0_i32_1 = arith.constant 0 : i32
    return %c0_i32, %c0_i32_0 : i32, i32
  }
  func.func @transform_6(%arg0: i32) -> (i32, i32) {
    %c0_i32 = arith.constant 0 : i32
    %c0_i32_0 = arith.constant 0 : i32
    return %arg0, %c0_i32 : i32, i32
  }
}

</mosaic_0001>

<llo_original>
// kernel: bottleneck_forward.5
$region0: #{bottleneck_forward.5}
  #allocation0 [shape = 'u32[]', space=smem, size = 0x4, offset = 0x4, fixed_abs, tag = 'smem constant byte address 0x4 - core index']
  #allocation1 [shape = 'u32[144,128]{1,0:T(1,128)}', space=vmem, size = 0x12000, scoped, tag = 'internal scratch']
  %s0 = inlined_call_operand.vmem [shape: bf16[512,128], index: 0, kind: input, shape index: {}]
  %s1 = inlined_call_operand.vmem [shape: bf16[128,128], index: 1, kind: input, shape index: {}]
  %s2 = inlined_call_operand.vmem [shape: bf16[512,128], index: 2, kind: output, shape index: {0}]
  %s3 = inlined_call_operand.vmem [shape: f32[8,128], index: 3, kind: output, shape index: {1}]
  %4 = xla_tuple %s2, %s3
  %s5 = sld [smem:[#allocation0]]
  $region26: #{bottleneck_forward.5} parent=0
    _
  %s7 = ssub.s32 1, %s5
  %s8 = scalar_select 0, %s7, %s5
  // Predicated region
  $region2: #{bottleneck_forward.5} parent=0 // pred_check
    _
  $region3: #{bottleneck_forward.5} parent=0 // pred_check_branch
    %10 = sbr.rel (0) target = $region5
  $region4: #{bottleneck_forward.5} parent=0 // pred_region
    _
  $region5: #{bottleneck_forward.5} parent=0 // pred_fallthru
    _
  // Predicated region
  $region6: #{bottleneck_forward.5} parent=0 // pred_check
    _
  $region7: #{bottleneck_forward.5} parent=0 // pred_check_branch
    %12 = sbr.rel (0) target = $region9
  $region8: #{bottleneck_forward.5} parent=0 // pred_region
    _
  $region9: #{bottleneck_forward.5} parent=0 // pred_fallthru
    _
  %v14 = vld [vmem:[%s0] sm:$0xf]
  %v15 = vld [vmem:[%s0 + $0x4] sm:$0xf]
  %v16 = vld [vmem:[%s0 + $0x8] sm:$0xf]
  %v17 = vld [vmem:[%s0 + $0xc] sm:$0xf]
  %v18 = vld [vmem:[%s0 + $0x10] sm:$0xf]
  %v19 = vld [vmem:[%s0 + $0x14] sm:$0xf]
  %v20 = vld [vmem:[%s0 + $0x18] sm:$0xf]
  %v21 = vld [vmem:[%s0 + $0x1c] sm:$0xf]
  %v22 = vld [vmem:[%s0 + $0x20] sm:$0xf]
  %v23 = vld [vmem:[%s0 + $0x24] sm:$0xf]
  %v24 = vld [vmem:[%s0 + $0x28] sm:$0xf]
  %v25 = vld [vmem:[%s0 + $0x2c] sm:$0xf]
  %v26 = vld [vmem:[%s0 + $0x30] sm:$0xf]
  %v27 = vld [vmem:[%s0 + $0x34] sm:$0xf]
  %v28 = vld [vmem:[%s0 + $0x38] sm:$0xf]
  %v29 = vld [vmem:[%s0 + $0x3c] sm:$0xf]
  %v30 = vld [vmem:[%s0 + $0x40] sm:$0xf]
  %v31 = vld [vmem:[%s0 + $0x44] sm:$0xf]
  %v32 = vld [vmem:[%s0 + $0x48] sm:$0xf]
  %v33 = vld [vmem:[%s0 + $0x4c] sm:$0xf]
  %v34 = vld [vmem:[%s0 + $0x50] sm:$0xf]
  %v35 = vld [vmem:[%s0 + $0x54] sm:$0xf]
  %v36 = vld [vmem:[%s0 + $0x58] sm:$0xf]
  %v37 = vld [vmem:[%s0 + $0x5c] sm:$0xf]
  %v38 = vld [vmem:[%s0 + $0x60] sm:$0xf]
  %v39 = vld [vmem:[%s0 + $0x64] sm:$0xf]
  %v40 = vld [vmem:[%s0 + $0x68] sm:$0xf]
  %v41 = vld [vmem:[%s0 + $0x6c] sm:$0xf]
  %v42 = vld [vmem:[%s0 + $0x70] sm:$0xf]
  %v43 = vld [vmem:[%s0 + $0x74] sm:$0xf]
  %v44 = vld [vmem:[%s0 + $0x78] sm:$0xf]
  %v45 = vld [vmem:[%s0 + $0x7c] sm:$0xf]
  %v46 = vld [vmem:[%s0 + $0x80] sm:$0xf]
  %v47 = vld [vmem:[%s0 + $0x84] sm:$0xf]
  %v48 = vld [vmem:[%s0 + $0x88] sm:$0xf]
  %v49 = vld [vmem:[%s0 + $0x8c] sm:$0xf]
  %v50 = vld [vmem:[%s0 + $0x90] sm:$0xf]
  %v51 = vld [vmem:[%s0 + $0x94] sm:$0xf]
  %v52 = vld [vmem:[%s0 + $0x98] sm:$0xf]
  %v53 = vld [vmem:[%s0 + $0x9c] sm:$0xf]
  %v54 = vld [vmem:[%s0 + $0xa0] sm:$0xf]
  %v55 = vld [vmem:[%s0 + $0xa4] sm:$0xf]
  %v56 = vld [vmem:[%s0 + $0xa8] sm:$0xf]
  %v57 = vld [vmem:[%s0 + $0xac] sm:$0xf]
  %v58 = vld [vmem:[%s0 + $0xb0] sm:$0xf]
  %v59 = vld [vmem:[%s0 + $0xb4] sm:$0xf]
  %v60 = vld [vmem:[%s0 + $0xb8] sm:$0xf]
  %v61 = vld [vmem:[%s0 + $0xbc] sm:$0xf]
  %v62 = vld [vmem:[%s0 + $0xc0] sm:$0xf]
  %v63 = vld [vmem:[%s0 + $0xc4] sm:$0xf]
  %v64 = vld [vmem:[%s0 + $0xc8] sm:$0xf]
  %v65 = vld [vmem:[%s0 + $0xcc] sm:$0xf]
  %v66 = vld [vmem:[%s0 + $0xd0] sm:$0xf]
  %v67 = vld [vmem:[%s0 + $0xd4] sm:$0xf]
  %v68 = vld [vmem:[%s0 + $0xd8] sm:$0xf]
  %v69 = vld [vmem:[%s0 + $0xdc] sm:$0xf]
  %v70 = vld [vmem:[%s0 + $0xe0] sm:$0xf]
  %v71 = vld [vmem:[%s0 + $0xe4] sm:$0xf]
  %v72 = vld [vmem:[%s0 + $0xe8] sm:$0xf]
  %v73 = vld [vmem:[%s0 + $0xec] sm:$0xf]
  %v74 = vld [vmem:[%s0 + $0xf0] sm:$0xf]
  %v75 = vld [vmem:[%s0 + $0xf4] sm:$0xf]
  %v76 = vld [vmem:[%s0 + $0xf8] sm:$0xf]
  %v77 = vld [vmem:[%s0 + $0xfc] sm:$0xf]
  %v78 = vld [vmem:[%s1] sm:$0xf]
  %v79 = vld [vmem:[%s1 + $0x4] sm:$0xf]
  %v80 = vld [vmem:[%s1 + $0x8] sm:$0xf]
  %v81 = vld [vmem:[%s1 + $0xc] sm:$0xf]
  %v82 = vld [vmem:[%s1 + $0x10] sm:$0xf]
  %v83 = vld [vmem:[%s1 + $0x14] sm:$0xf]
  %v84 = vld [vmem:[%s1 + $0x18] sm:$0xf]
  %v85 = vld [vmem:[%s1 + $0x1c] sm:$0xf]
  %v86 = vld [vmem:[%s1 + $0x20] sm:$0xf]
  %v87 = vld [vmem:[%s1 + $0x24] sm:$0xf]
  %v88 = vld [vmem:[%s1 + $0x28] sm:$0xf]
  %v89 = vld [vmem:[%s1 + $0x2c] sm:$0xf]
  %v90 = vld [vmem:[%s1 + $0x30] sm:$0xf]
  %v91 = vld [vmem:[%s1 + $0x34] sm:$0xf]
  %v92 = vld [vmem:[%s1 + $0x38] sm:$0xf]
  %v93 = vld [vmem:[%s1 + $0x3c] sm:$0xf]
  %v158 = vunpack.c.l.b16 %v14
  %v159 = vunpack.c.l.b16 %v15
  %v160 = vunpack.c.l.b16 %v16
  %v161 = vunpack.c.l.b16 %v17
  %v162 = vunpack.c.l.b16 %v18
  %v163 = vunpack.c.l.b16 %v19
  %v164 = vunpack.c.l.b16 %v20
  %v165 = vunpack.c.l.b16 %v21
  %v166 = vunpack.c.l.b16 %v22
  %v167 = vunpack.c.l.b16 %v23
  %v168 = vunpack.c.l.b16 %v24
  %v169 = vunpack.c.l.b16 %v25
  %v170 = vunpack.c.l.b16 %v26
  %v171 = vunpack.c.l.b16 %v27
  %v172 = vunpack.c.l.b16 %v28
  %v173 = vunpack.c.l.b16 %v29
  %v174 = vunpack.c.l.b16 %v30
  %v175 = vunpack.c.l.b16 %v31
  %v176 = vunpack.c.l.b16 %v32
  %v177 = vunpack.c.l.b16 %v33
  %v178 = vunpack.c.l.b16 %v34
  %v179 = vunpack.c.l.b16 %v35
  %v180 = vunpack.c.l.b16 %v36
  %v181 = vunpack.c.l.b16 %v37
  %v182 = vunpack.c.l.b16 %v38
  %v183 = vunpack.c.l.b16 %v39
  %v184 = vunpack.c.l.b16 %v40
  %v185 = vunpack.c.l.b16 %v41
  %v186 = vunpack.c.l.b16 %v42
  %v187 = vunpack.c.l.b16 %v43
  %v188 = vunpack.c.l.b16 %v44
  %v189 = vunpack.c.l.b16 %v45
  %v190 = vunpack.c.l.b16 %v46
  %v191 = vunpack.c.l.b16 %v47
  %v192 = vunpack.c.l.b16 %v48
  %v193 = vunpack.c.l.b16 %v49
  %v194 = vunpack.c.l.b16 %v50
  %v195 = vunpack.c.l.b16 %v51
  %v196 = vunpack.c.l.b16 %v52
  %v197 = vunpack.c.l.b16 %v53
  %v198 = vunpack.c.l.b16 %v54
  %v199 = vunpack.c.l.b16 %v55
  %v200 = vunpack.c.l.b16 %v56
  %v201 = vunpack.c.l.b16 %v57
  %v202 = vunpack.c.l.b16 %v58
  %v203 = vunpack.c.l.b16 %v59
  %v204 = vunpack.c.l.b16 %v60
  %v205 = vunpack.c.l.b16 %v61
  %v206 = vunpack.c.l.b16 %v62
  %v207 = vunpack.c.l.b16 %v63
  %v208 = vunpack.c.l.b16 %v64
  %v209 = vunpack.c.l.b16 %v65
  %v210 = vunpack.c.l.b16 %v66
  %v211 = vunpack.c.l.b16 %v67
  %v212 = vunpack.c.l.b16 %v68
  %v213 = vunpack.c.l.b16 %v69
  %v214 = vunpack.c.l.b16 %v70
  %v215 = vunpack.c.l.b16 %v71
  %v216 = vunpack.c.l.b16 %v72
  %v217 = vunpack.c.l.b16 %v73
  %v218 = vunpack.c.l.b16 %v74
  %v219 = vunpack.c.l.b16 %v75
  %v220 = vunpack.c.l.b16 %v76
  %v221 = vunpack.c.l.b16 %v77
  %v222 = vpack.c.b16 %v159, %v158
  %v223 = vpack.c.b16 %v161, %v160
  %v224 = vpack.c.b16 %v163, %v162
  %v225 = vpack.c.b16 %v165, %v164
  %v226 = vpack.c.b16 %v167, %v166
  %v227 = vpack.c.b16 %v169, %v168
  %v228 = vpack.c.b16 %v171, %v170
  %v229 = vpack.c.b16 %v173, %v172
  %v230 = vpack.c.b16 %v175, %v174
  %v231 = vpack.c.b16 %v177, %v176
  %v232 = vpack.c.b16 %v179, %v178
  %v233 = vpack.c.b16 %v181, %v180
  %v234 = vpack.c.b16 %v183, %v182
  %v235 = vpack.c.b16 %v185, %v184
  %v236 = vpack.c.b16 %v187, %v186
  %v237 = vpack.c.b16 %v189, %v188
  %v238 = vpack.c.b16 %v191, %v190
  %v239 = vpack.c.b16 %v193, %v192
  %v240 = vpack.c.b16 %v195, %v194
  %v241 = vpack.c.b16 %v197, %v196
  %v242 = vpack.c.b16 %v199, %v198
  %v243 = vpack.c.b16 %v201, %v200
  %v244 = vpack.c.b16 %v203, %v202
  %v245 = vpack.c.b16 %v205, %v204
  %v246 = vpack.c.b16 %v207, %v206
  %v247 = vpack.c.b16 %v209, %v208
  %v248 = vpack.c.b16 %v211, %v210
  %v249 = vpack.c.b16 %v213, %v212
  %v250 = vpack.c.b16 %v215, %v214
  %v251 = vpack.c.b16 %v217, %v216
  %v252 = vpack.c.b16 %v219, %v218
  %v253 = vpack.c.b16 %v221, %v220
  %v302 = vunpack.c.l.b16 %v78
  %v303 = vunpack.c.l.b16 %v79
  %v304 = vunpack.c.l.b16 %v80
  %v305 = vunpack.c.l.b16 %v81
  %v306 = vunpack.c.l.b16 %v82
  %v307 = vunpack.c.l.b16 %v83
  %v308 = vunpack.c.l.b16 %v84
  %v309 = vunpack.c.l.b16 %v85
  %v310 = vunpack.c.l.b16 %v86
  %v311 = vunpack.c.l.b16 %v87
  %v312 = vunpack.c.l.b16 %v88
  %v313 = vunpack.c.l.b16 %v89
  %v314 = vunpack.c.l.b16 %v90
  %v315 = vunpack.c.l.b16 %v91
  %v316 = vunpack.c.l.b16 %v92
  %v317 = vunpack.c.l.b16 %v93
  %v318 = vpack.c.b16 %v303, %v302
  %v319 = vpack.c.b16 %v305, %v304
  %v320 = vpack.c.b16 %v307, %v306
  %v321 = vpack.c.b16 %v309, %v308
  %v322 = vpack.c.b16 %v311, %v310
  %v323 = vpack.c.b16 %v313, %v312
  %v324 = vpack.c.b16 %v315, %v314
  %v325 = vpack.c.b16 %v317, %v316
  %334 = vmatprep.subr.bf16.mxu0 0
  %335 = vmatpush1.bf16.msra.mxu0 %v318
  %336 = vmatprep.subr.bf16.mxu0 0
  %337 = vmatpush1.bf16.msra.mxu0 %v319
  %338 = vmatprep.subr.bf16.mxu0 0
  %339 = vmatpush1.bf16.msra.mxu0 %v320
  %340 = vmatprep.subr.bf16.mxu0 0
  %341 = vmatpush1.bf16.msra.mxu0 %v321
  %342 = vmatprep.subr.bf16.mxu0 0
  %343 = vmatpush1.bf16.msra.mxu0 %v322
  %344 = vmatprep.subr.bf16.mxu0 0
  %345 = vmatpush1.bf16.msra.mxu0 %v323
  %346 = vmatprep.subr.bf16.mxu0 0
  %347 = vmatpush1.bf16.msra.mxu0 %v324
  %348 = vmatprep.subr.bf16.mxu0 0
  %349 = vmatpush1.bf16.msra.mxu0 %v325
  %350 = vmatprep.subr.bf16.mxu0 0
  %351 = vmatpush1.bf16.msra.mxu0 0
  %352 = vmatprep.subr.bf16.mxu0 0
  %353 = vmatpush1.bf16.msra.mxu0 0
  %354 = vmatprep.subr.bf16.mxu0 0
  %355 = vmatpush1.bf16.msra.mxu0 0
  %356 = vmatprep.subr.bf16.mxu0 0
  %357 = vmatpush1.bf16.msra.mxu0 0
  %358 = vmatprep.subr.bf16.mxu0 0
  %359 = vmatpush1.bf16.msra.mxu0 0
  %360 = vmatprep.subr.bf16.mxu0 0
  %361 = vmatpush1.bf16.msra.mxu0 0
  %362 = vmatprep.subr.bf16.mxu0 0
  %363 = vmatpush1.bf16.msra.mxu0 0
  %364 = vmatprep.subr.bf16.mxu0 0
  %365 = vmatpush1.bf16.msra.mxu0 0
  %366 = vmatprep.mubr.bf16.mxu0 0
  %367 = vmatmul.mubr.bf16.gmra.mrb[0].mxu0 %v222
  %v368 = vpop.f32.mrb[0].mxu0
  %v369 = vadd.f32 0.0, %v368
  %v370 = vpop.f32.mrb[0].mxu0
  %v371 = vpop.f32.mrb[0].mxu0
  %v372 = vadd.f32 0.0, %v371
  %v373 = vpop.f32.mrb[0].mxu0
  %374 = vmatprep.mubr.bf16.mxu0 0
  %375 = vmatmul.mubr.bf16.gmra.mrb[0].mxu0 %v223
  %v376 = vpop.f32.mrb[0].mxu0
  %v377 = vadd.f32 0.0, %v376
  %v378 = vpop.f32.mrb[0].mxu0
  %v379 = vpop.f32.mrb[0].mxu0
  %v380 = vadd.f32 0.0, %v379
  %v381 = vpop.f32.mrb[0].mxu0
  %382 = vmatprep.mubr.bf16.mxu0 0
  %383 = vmatmul.mubr.bf16.gmra.mrb[0].mxu0 %v224
  %v384 = vpop.f32.mrb[0].mxu0
  %v385 = vadd.f32 0.0, %v384
  %v386 = vpop.f32.mrb[0].mxu0
  %v387 = vpop.f32.mrb[0].mxu0
  %v388 = vadd.f32 0.0, %v387
  %v389 = vpop.f32.mrb[0].mxu0
  %390 = vmatprep.mubr.bf16.mxu0 0
  %391 = vmatmul.mubr.bf16.gmra.mrb[0].mxu0 %v225
  %v392 = vpop.f32.mrb[0].mxu0
  %v393 = vadd.f32 0.0, %v392
  %v394 = vpop.f32.mrb[0].mxu0
  %v395 = vpop.f32.mrb[0].mxu0
  %v396 = vadd.f32 0.0, %v395
  %v397 = vpop.f32.mrb[0].mxu0
  %398 = vmatprep.mubr.bf16.mxu0 0
  %399 = vmatmul.mubr.bf16.gmra.mrb[0].mxu0 %v226
  %v400 = vpop.f32.mrb[0].mxu0
  %v401 = vadd.f32 0.0, %v400
  %v402 = vpop.f32.mrb[0].mxu0
  %v403 = vpop.f32.mrb[0].mxu0
  %v404 = vadd.f32 0.0, %v403
  %v405 = vpop.f32.mrb[0].mxu0
  %406 = vmatprep.mubr.bf16.mxu0 0
  %407 = vmatmul.mubr.bf16.gmra.mrb[0].mxu0 %v227
  %v408 = vpop.f32.mrb[0].mxu0
  %v409 = vadd.f32 0.0, %v408
  %v410 = vpop.f32.mrb[0].mxu0
  %v411 = vpop.f32.mrb[0].mxu0
  %v412 = vadd.f32 0.0, %v411
  %v413 = vpop.f32.mrb[0].mxu0
  %414 = vmatprep.mubr.bf16.mxu0 0
  %415 = vmatmul.mubr.bf16.gmra.mrb[0].mxu0 %v228
  %v416 = vpop.f32.mrb[0].mxu0
  %v417 = vadd.f32 0.0, %v416
  %v418 = vpop.f32.mrb[0].mxu0
  %v419 = vpop.f32.mrb[0].mxu0
  %v420 = vadd.f32 0.0, %v419
  %v421 = vpop.f32.mrb[0].mxu0
  %422 = vmatprep.mubr.bf16.mxu0 0
  %423 = vmatmul.mubr.bf16.gmra.mrb[0].mxu0 %v229
  %v424 = vpop.f32.mrb[0].mxu0
  %v425 = vadd.f32 0.0, %v424
  %v426 = vpop.f32.mrb[0].mxu0
  %v427 = vpop.f32.mrb[0].mxu0
  %v428 = vadd.f32 0.0, %v427
  %v429 = vpop.f32.mrb[0].mxu0
  %430 = vmatprep.mubr.bf16.mxu0 0
  %431 = vmatmul.mubr.bf16.gmra.mrb[0].mxu0 %v230
  %v432 = vpop.f32.mrb[0].mxu0
  %v433 = vadd.f32 0.0, %v432
  %v434 = vpop.f32.mrb[0].mxu0
  %v435 = vpop.f32.mrb[0].mxu0
  %v436 = vadd.f32 0.0, %v435
  %v437 = vpop.f32.mrb[0].mxu0
  %438 = vmatprep.mubr.bf16.mxu0 0
  %439 = vmatmul.mubr.bf16.gmra.mrb[0].mxu0 %v231
  %v440 = vpop.f32.mrb[0].mxu0
  %v441 = vadd.f32 0.0, %v440
  %v442 = vpop.f32.mrb[0].mxu0
  %v443 = vpop.f32.mrb[0].mxu0
  %v444 = vadd.f32 0.0, %v443
  %v445 = vpop.f32.mrb[0].mxu0
  %446 = vmatprep.mubr.bf16.mxu0 0
  %447 = vmatmul.mubr.bf16.gmra.mrb[0].mxu0 %v232
  %v448 = vpop.f32.mrb[0].mxu0
  %v449 = vadd.f32 0.0, %v448
  %v450 = vpop.f32.mrb[0].mxu0
  %v451 = vpop.f32.mrb[0].mxu0
  %v452 = vadd.f32 0.0, %v451
  %v453 = vpop.f32.mrb[0].mxu0
  %454 = vmatprep.mubr.bf16.mxu0 0
  %455 = vmatmul.mubr.bf16.gmra.mrb[0].mxu0 %v233
  %v456 = vpop.f32.mrb[0].mxu0
  %v457 = vadd.f32 0.0, %v456
  %v458 = vpop.f32.mrb[0].mxu0
  %v459 = vpop.f32.mrb[0].mxu0
  %v460 = vadd.f32 0.0, %v459
  %v461 = vpop.f32.mrb[0].mxu0
  %462 = vmatprep.mubr.bf16.mxu0 0
  %463 = vmatmul.mubr.bf16.gmra.mrb[0].mxu0 %v234
  %v464 = vpop.f32.mrb[0].mxu0
  %v465 = vadd.f32 0.0, %v464
  %v466 = vpop.f32.mrb[0].mxu0
  %v467 = vpop.f32.mrb[0].mxu0
  %v468 = vadd.f32 0.0, %v467
  %v469 = vpop.f32.mrb[0].mxu0
  %470 = vmatprep.mubr.bf16.mxu0 0
  %471 = vmatmul.mubr.bf16.gmra.mrb[0].mxu0 %v235
  %v472 = vpop.f32.mrb[0].mxu0
  %v473 = vadd.f32 0.0, %v472
  %v474 = vpop.f32.mrb[0].mxu0
  %v475 = vpop.f32.mrb[0].mxu0
  %v476 = vadd.f32 0.0, %v475
  %v477 = vpop.f32.mrb[0].mxu0
  %478 = vmatprep.mubr.bf16.mxu0 0
  %479 = vmatmul.mubr.bf16.gmra.mrb[0].mxu0 %v236
  %v480 = vpop.f32.mrb[0].mxu0
  %v481 = vadd.f32 0.0, %v480
  %v482 = vpop.f32.mrb[0].mxu0
  %v483 = vpop.f32.mrb[0].mxu0
  %v484 = vadd.f32 0.0, %v483
  %v485 = vpop.f32.mrb[0].mxu0
  %486 = vmatprep.mubr.bf16.mxu0 0
  %487 = vmatmul.mubr.bf16.gmra.mrb[0].mxu0 %v237
  %v488 = vpop.f32.mrb[0].mxu0
  %v489 = vadd.f32 0.0, %v488
  %v490 = vpop.f32.mrb[0].mxu0
  %v491 = vpop.f32.mrb[0].mxu0
  %v492 = vadd.f32 0.0, %v491
  %v493 = vpop.f32.mrb[0].mxu0
  %494 = vmatprep.mubr.bf16.mxu0 0
  %495 = vmatmul.mubr.bf16.gmra.mrb[0].mxu0 %v238
  %v496 = vpop.f32.mrb[0].mxu0
  %v497 = vadd.f32 0.0, %v496
  %v498 = vpop.f32.mrb[0].mxu0
  %v499 = vpop.f32.mrb[0].mxu0
  %v500 = vadd.f32 0.0, %v499
  %v501 = vpop.f32.mrb[0].mxu0
  %502 = vmatprep.mubr.bf16.mxu0 0
  %503 = vmatmul.mubr.bf16.gmra.mrb[0].mxu0 %v239
  %v504 = vpop.f32.mrb[0].mxu0
  %v505 = vadd.f32 0.0, %v504
  %v506 = vpop.f32.mrb[0].mxu0
  %v507 = vpop.f32.mrb[0].mxu0
  %v508 = vadd.f32 0.0, %v507
  %v509 = vpop.f32.mrb[0].mxu0
  %510 = vmatprep.mubr.bf16.mxu0 0
  %511 = vmatmul.mubr.bf16.gmra.mrb[0].mxu0 %v240
  %v512 = vpop.f32.mrb[0].mxu0
  %v513 = vadd.f32 0.0, %v512
  %v514 = vpop.f32.mrb[0].mxu0
  %v515 = vpop.f32.mrb[0].mxu0
  %v516 = vadd.f32 0.0, %v515
  %v517 = vpop.f32.mrb[0].mxu0
  %518 = vmatprep.mubr.bf16.mxu0 0
  %519 = vmatmul.mubr.bf16.gmra.mrb[0].mxu0 %v241
  %v520 = vpop.f32.mrb[0].mxu0
  %v521 = vadd.f32 0.0, %v520
  %v522 = vpop.f32.mrb[0].mxu0
  %v523 = vpop.f32.mrb[0].mxu0
  %v524 = vadd.f32 0.0, %v523
  %v525 = vpop.f32.mrb[0].mxu0
  %526 = vmatprep.mubr.bf16.mxu0 0
  %527 = vmatmul.mubr.bf16.gmra.mrb[0].mxu0 %v242
  %v528 = vpop.f32.mrb[0].mxu0
  %v529 = vadd.f32 0.0, %v528
  %v530 = vpop.f32.mrb[0].mxu0
  %v531 = vpop.f32.mrb[0].mxu0
  %v532 = vadd.f32 0.0, %v531
  %v533 = vpop.f32.mrb[0].mxu0
  %534 = vmatprep.mubr.bf16.mxu0 0
  %535 = vmatmul.mubr.bf16.gmra.mrb[0].mxu0 %v243
  %v536 = vpop.f32.mrb[0].mxu0
  %v537 = vadd.f32 0.0, %v536
  %v538 = vpop.f32.mrb[0].mxu0
  %v539 = vpop.f32.mrb[0].mxu0
  %v540 = vadd.f32 0.0, %v539
  %v541 = vpop.f32.mrb[0].mxu0
  %542 = vmatprep.mubr.bf16.mxu0 0
  %543 = vmatmul.mubr.bf16.gmra.mrb[0].mxu0 %v244
  %v544 = vpop.f32.mrb[0].mxu0
  %v545 = vadd.f32 0.0, %v544
  %v546 = vpop.f32.mrb[0].mxu0
  %v547 = vpop.f32.mrb[0].mxu0
  %v548 = vadd.f32 0.0, %v547
  %v549 = vpop.f32.mrb[0].mxu0
  %550 = vmatprep.mubr.bf16.mxu0 0
  %551 = vmatmul.mubr.bf16.gmra.mrb[0].mxu0 %v245
  %v552 = vpop.f32.mrb[0].mxu0
  %v553 = vadd.f32 0.0, %v552
  %v554 = vpop.f32.mrb[0].mxu0
  %v555 = vpop.f32.mrb[0].mxu0
  %v556 = vadd.f32 0.0, %v555
  %v557 = vpop.f32.mrb[0].mxu0
  %558 = vmatprep.mubr.bf16.mxu0 0
  %559 = vmatmul.mubr.bf16.gmra.mrb[0].mxu0 %v246
  %v560 = vpop.f32.mrb[0].mxu0
  %v561 = vadd.f32 0.0, %v560
  %v562 = vpop.f32.mrb[0].mxu0
  %v563 = vpop.f32.mrb[0].mxu0
  %v564 = vadd.f32 0.0, %v563
  %v565 = vpop.f32.mrb[0].mxu0
  %566 = vmatprep.mubr.bf16.mxu0 0
  %567 = vmatmul.mubr.bf16.gmra.mrb[0].mxu0 %v247
  %v568 = vpop.f32.mrb[0].mxu0
  %v569 = vadd.f32 0.0, %v568
  %v570 = vpop.f32.mrb[0].mxu0
  %v571 = vpop.f32.mrb[0].mxu0
  %v572 = vadd.f32 0.0, %v571
  %v573 = vpop.f32.mrb[0].mxu0
  %574 = vmatprep.mubr.bf16.mxu0 0
  %575 = vmatmul.mubr.bf16.gmra.mrb[0].mxu0 %v248
  %v576 = vpop.f32.mrb[0].mxu0
  %v577 = vadd.f32 0.0, %v576
  %v578 = vpop.f32.mrb[0].mxu0
  %v579 = vpop.f32.mrb[0].mxu0
  %v580 = vadd.f32 0.0, %v579
  %v581 = vpop.f32.mrb[0].mxu0
  %582 = vmatprep.mubr.bf16.mxu0 0
  %583 = vmatmul.mubr.bf16.gmra.mrb[0].mxu0 %v249
  %v584 = vpop.f32.mrb[0].mxu0
  %v585 = vadd.f32 0.0, %v584
  %v586 = vpop.f32.mrb[0].mxu0
  %v587 = vpop.f32.mrb[0].mxu0
  %v588 = vadd.f32 0.0, %v587
  %v589 = vpop.f32.mrb[0].mxu0
  %590 = vmatprep.mubr.bf16.mxu0 0
  %591 = vmatmul.mubr.bf16.gmra.mrb[0].mxu0 %v250
  %v592 = vpop.f32.mrb[0].mxu0
  %v593 = vadd.f32 0.0, %v592
  %v594 = vpop.f32.mrb[0].mxu0
  %v595 = vpop.f32.mrb[0].mxu0
  %v596 = vadd.f32 0.0, %v595
  %v597 = vpop.f32.mrb[0].mxu0
  %598 = vmatprep.mubr.bf16.mxu0 0
  %599 = vmatmul.mubr.bf16.gmra.mrb[0].mxu0 %v251
  %v600 = vpop.f32.mrb[0].mxu0
  %v601 = vadd.f32 0.0, %v600
  %v602 = vpop.f32.mrb[0].mxu0
  %v603 = vpop.f32.mrb[0].mxu0
  %v604 = vadd.f32 0.0, %v603
  %v605 = vpop.f32.mrb[0].mxu0
  %606 = vmatprep.mubr.bf16.mxu0 0
  %607 = vmatmul.mubr.bf16.gmra.mrb[0].mxu0 %v252
  %v608 = vpop.f32.mrb[0].mxu0
  %v609 = vadd.f32 0.0, %v608
  %v610 = vpop.f32.mrb[0].mxu0
  %v611 = vpop.f32.mrb[0].mxu0
  %v612 = vadd.f32 0.0, %v611
  %v613 = vpop.f32.mrb[0].mxu0
  %614 = vmatprep.mubr.bf16.mxu0 0
  %615 = vmatmul.mubr.bf16.gmra.mrb[0].mxu0 %v253
  %v616 = vpop.f32.mrb[0].mxu0
  %v617 = vadd.f32 0.0, %v616
  %v618 = vpop.f32.mrb[0].mxu0
  %v619 = vpop.f32.mrb[0].mxu0
  %v620 = vadd.f32 0.0, %v619
  %v621 = vpop.f32.mrb[0].mxu0
  %622 = vdwg.mxu0
  %v623 = vpack.c.bf16 %v372, %v369
  %v624 = vpack.c.bf16 %v380, %v377
  %v625 = vpack.c.bf16 %v388, %v385
  %v626 = vpack.c.bf16 %v396, %v393
  %v627 = vpack.c.bf16 %v404, %v401
  %v628 = vpack.c.bf16 %v412, %v409
  %v629 = vpack.c.bf16 %v420, %v417
  %v630 = vpack.c.bf16 %v428, %v425
  %v631 = vpack.c.bf16 %v436, %v433
  %v632 = vpack.c.bf16 %v444, %v441
  %v633 = vpack.c.bf16 %v452, %v449
  %v634 = vpack.c.bf16 %v460, %v457
  %v635 = vpack.c.bf16 %v468, %v465
  %v636 = vpack.c.bf16 %v476, %v473
  %v637 = vpack.c.bf16 %v484, %v481
  %v638 = vpack.c.bf16 %v492, %v489
  %v639 = vpack.c.bf16 %v500, %v497
  %v640 = vpack.c.bf16 %v508, %v505
  %v641 = vpack.c.bf16 %v516, %v513
  %v642 = vpack.c.bf16 %v524, %v521
  %v643 = vpack.c.bf16 %v532, %v529
  %v644 = vpack.c.bf16 %v540, %v537
  %v645 = vpack.c.bf16 %v548, %v545
  %v646 = vpack.c.bf16 %v556, %v553
  %v647 = vpack.c.bf16 %v564, %v561
  %v648 = vpack.c.bf16 %v572, %v569
  %v649 = vpack.c.bf16 %v580, %v577
  %v650 = vpack.c.bf16 %v588, %v585
  %v651 = vpack.c.bf16 %v596, %v593
  %v652 = vpack.c.bf16 %v604, %v601
  %v653 = vpack.c.bf16 %v612, %v609
  %v654 = vpack.c.bf16 %v620, %v617
  %v687 = vunpack.c.l.b16 %v623
  %v688 = vunpack.c.h.b16 %v623
  %v689 = vunpack.c.l.b16 %v624
  %v690 = vunpack.c.h.b16 %v624
  %v691 = vunpack.c.l.b16 %v625
  %v692 = vunpack.c.h.b16 %v625
  %v693 = vunpack.c.l.b16 %v626
  %v694 = vunpack.c.h.b16 %v626
  %v695 = vunpack.c.l.b16 %v627
  %v696 = vunpack.c.h.b16 %v627
  %v697 = vunpack.c.l.b16 %v628
  %v698 = vunpack.c.h.b16 %v628
  %v699 = vunpack.c.l.b16 %v629
  %v700 = vunpack.c.h.b16 %v629
  %v701 = vunpack.c.l.b16 %v630
  %v702 = vunpack.c.h.b16 %v630
  %v703 = vunpack.c.l.b16 %v631
  %v704 = vunpack.c.h.b16 %v631
  %v705 = vunpack.c.l.b16 %v632
  %v706 = vunpack.c.h.b16 %v632
  %v707 = vunpack.c.l.b16 %v633
  %v708 = vunpack.c.h.b16 %v633
  %v709 = vunpack.c.l.b16 %v634
  %v710 = vunpack.c.h.b16 %v634
  %v711 = vunpack.c.l.b16 %v635
  %v712 = vunpack.c.h.b16 %v635
  %v713 = vunpack.c.l.b16 %v636
  %v714 = vunpack.c.h.b16 %v636
  %v715 = vunpack.c.l.b16 %v637
  %v716 = vunpack.c.h.b16 %v637
  %v717 = vunpack.c.l.b16 %v638
  %v718 = vunpack.c.h.b16 %v638
  %v719 = vunpack.c.l.b16 %v639
  %v720 = vunpack.c.h.b16 %v639
  %v721 = vunpack.c.l.b16 %v640
  %v722 = vunpack.c.h.b16 %v640
  %v723 = vunpack.c.l.b16 %v641
  %v724 = vunpack.c.h.b16 %v641
  %v725 = vunpack.c.l.b16 %v642
  %v726 = vunpack.c.h.b16 %v642
  %v727 = vunpack.c.l.b16 %v643
  %v728 = vunpack.c.h.b16 %v643
  %v729 = vunpack.c.l.b16 %v644
  %v730 = vunpack.c.h.b16 %v644
  %v731 = vunpack.c.l.b16 %v645
  %v732 = vunpack.c.h.b16 %v645
  %v733 = vunpack.c.l.b16 %v646
  %v734 = vunpack.c.h.b16 %v646
  %v735 = vunpack.c.l.b16 %v647
  %v736 = vunpack.c.h.b16 %v647
  %v737 = vunpack.c.l.b16 %v648
  %v738 = vunpack.c.h.b16 %v648
  %v739 = vunpack.c.l.b16 %v649
  %v740 = vunpack.c.h.b16 %v649
  %v741 = vunpack.c.l.b16 %v650
  %v742 = vunpack.c.h.b16 %v650
  %v743 = vunpack.c.l.b16 %v651
  %v744 = vunpack.c.h.b16 %v651
  %v745 = vunpack.c.l.b16 %v652
  %v746 = vunpack.c.h.b16 %v652
  %v747 = vunpack.c.l.b16 %v653
  %v748 = vunpack.c.h.b16 %v653
  %v749 = vunpack.c.l.b16 %v654
  %v750 = vunpack.c.h.b16 %v654
  %v751 = vpack.c.b16 %v687, %v687
  %v752 = vpack.c.b16 %v688, %v688
  %v753 = vpack.c.b16 %v689, %v689
  %v754 = vpack.c.b16 %v690, %v690
  %v755 = vpack.c.b16 %v691, %v691
  %v756 = vpack.c.b16 %v692, %v692
  %v757 = vpack.c.b16 %v693, %v693
  %v758 = vpack.c.b16 %v694, %v694
  %v759 = vpack.c.b16 %v695, %v695
  %v760 = vpack.c.b16 %v696, %v696
  %v761 = vpack.c.b16 %v697, %v697
  %v762 = vpack.c.b16 %v698, %v698
  %v763 = vpack.c.b16 %v699, %v699
  %v764 = vpack.c.b16 %v700, %v700
  %v765 = vpack.c.b16 %v701, %v701
  %v766 = vpack.c.b16 %v702, %v702
  %v767 = vpack.c.b16 %v703, %v703
  %v768 = vpack.c.b16 %v704, %v704
  %v769 = vpack.c.b16 %v705, %v705
  %v770 = vpack.c.b16 %v706, %v706
  %v771 = vpack.c.b16 %v707, %v707
  %v772 = vpack.c.b16 %v708, %v708
  %v773 = vpack.c.b16 %v709, %v709
  %v774 = vpack.c.b16 %v710, %v710
  %v775 = vpack.c.b16 %v711, %v711
  %v776 = vpack.c.b16 %v712, %v712
  %v777 = vpack.c.b16 %v713, %v713
  %v778 = vpack.c.b16 %v714, %v714
  %v779 = vpack.c.b16 %v715, %v715
  %v780 = vpack.c.b16 %v716, %v716
  %v781 = vpack.c.b16 %v717, %v717
  %v782 = vpack.c.b16 %v718, %v718
  %v783 = vpack.c.b16 %v719, %v719
  %v784 = vpack.c.b16 %v720, %v720
  %v785 = vpack.c.b16 %v721, %v721
  %v786 = vpack.c.b16 %v722, %v722
  %v787 = vpack.c.b16 %v723, %v723
  %v788 = vpack.c.b16 %v724, %v724
  %v789 = vpack.c.b16 %v725, %v725
  %v790 = vpack.c.b16 %v726, %v726
  %v791 = vpack.c.b16 %v727, %v727
  %v792 = vpack.c.b16 %v728, %v728
  %v793 = vpack.c.b16 %v729, %v729
  %v794 = vpack.c.b16 %v730, %v730
  %v795 = vpack.c.b16 %v731, %v731
  %v796 = vpack.c.b16 %v732, %v732
  %v797 = vpack.c.b16 %v733, %v733
  %v798 = vpack.c.b16 %v734, %v734
  %v799 = vpack.c.b16 %v735, %v735
  %v800 = vpack.c.b16 %v736, %v736
  %v801 = vpack.c.b16 %v737, %v737
  %v802 = vpack.c.b16 %v738, %v738
  %v803 = vpack.c.b16 %v739, %v739
  %v804 = vpack.c.b16 %v740, %v740
  %v805 = vpack.c.b16 %v741, %v741
  %v806 = vpack.c.b16 %v742, %v742
  %v807 = vpack.c.b16 %v743, %v743
  %v808 = vpack.c.b16 %v744, %v744
  %v809 = vpack.c.b16 %v745, %v745
  %v810 = vpack.c.b16 %v746, %v746
  %v811 = vpack.c.b16 %v747, %v747
  %v812 = vpack.c.b16 %v748, %v748
  %v813 = vpack.c.b16 %v749, %v749
  %v814 = vpack.c.b16 %v750, %v750
  %879 = vst [vmem:[%s2] sm:$0xf] %v751
  %880 = vst [vmem:[%s2 + $0x4] sm:$0xf] %v752
  %881 = vst [vmem:[%s2 + $0x8] sm:$0xf] %v753
  %882 = vst [vmem:[%s2 + $0xc] sm:$0xf] %v754
  %883 = vst [vmem:[%s2 + $0x10] sm:$0xf] %v755
  %884 = vst [vmem:[%s2 + $0x14] sm:$0xf] %v756
  %885 = vst [vmem:[%s2 + $0x18] sm:$0xf] %v757
  %886 = vst [vmem:[%s2 + $0x1c] sm:$0xf] %v758
  %887 = vst [vmem:[%s2 + $0x20] sm:$0xf] %v759
  %888 = vst [vmem:[%s2 + $0x24] sm:$0xf] %v760
  %889 = vst [vmem:[%s2 + $0x28] sm:$0xf] %v761
  %890 = vst [vmem:[%s2 + $0x2c] sm:$0xf] %v762
  %891 = vst [vmem:[%s2 + $0x30] sm:$0xf] %v763
  %892 = vst [vmem:[%s2 + $0x34] sm:$0xf] %v764
  %893 = vst [vmem:[%s2 + $0x38] sm:$0xf] %v765
  %894 = vst [vmem:[%s2 + $0x3c] sm:$0xf] %v766
  %895 = vst [vmem:[%s2 + $0x40] sm:$0xf] %v767
  %896 = vst [vmem:[%s2 + $0x44] sm:$0xf] %v768
  %897 = vst [vmem:[%s2 + $0x48] sm:$0xf] %v769
  %898 = vst [vmem:[%s2 + $0x4c] sm:$0xf] %v770
  %899 = vst [vmem:[%s2 + $0x50] sm:$0xf] %v771
  %900 = vst [vmem:[%s2 + $0x54] sm:$0xf] %v772
  %901 = vst [vmem:[%s2 + $0x58] sm:$0xf] %v773
  %902 = vst [vmem:[%s2 + $0x5c] sm:$0xf] %v774
  %903 = vst [vmem:[%s2 + $0x60] sm:$0xf] %v775
  %904 = vst [vmem:[%s2 + $0x64] sm:$0xf] %v776
  %905 = vst [vmem:[%s2 + $0x68] sm:$0xf] %v777
  %906 = vst [vmem:[%s2 + $0x6c] sm:$0xf] %v778
  %907 = vst [vmem:[%s2 + $0x70] sm:$0xf] %v779
  %908 = vst [vmem:[%s2 + $0x74] sm:$0xf] %v780
  %909 = vst [vmem:[%s2 + $0x78] sm:$0xf] %v781
  %910 = vst [vmem:[%s2 + $0x7c] sm:$0xf] %v782
  %911 = vst [vmem:[%s2 + $0x80] sm:$0xf] %v783
  %912 = vst [vmem:[%s2 + $0x84] sm:$0xf] %v784
  %913 = vst [vmem:[%s2 + $0x88] sm:$0xf] %v785
  %914 = vst [vmem:[%s2 + $0x8c] sm:$0xf] %v786
  %915 = vst [vmem:[%s2 + $0x90] sm:$0xf] %v787
  %916 = vst [vmem:[%s2 + $0x94] sm:$0xf] %v788
  %917 = vst [vmem:[%s2 + $0x98] sm:$0xf] %v789
  %918 = vst [vmem:[%s2 + $0x9c] sm:$0xf] %v790
  %919 = vst [vmem:[%s2 + $0xa0] sm:$0xf] %v791
  %920 = vst [vmem:[%s2 + $0xa4] sm:$0xf] %v792
  %921 = vst [vmem:[%s2 + $0xa8] sm:$0xf] %v793
  %922 = vst [vmem:[%s2 + $0xac] sm:$0xf] %v794
  %923 = vst [vmem:[%s2 + $0xb0] sm:$0xf] %v795
  %924 = vst [vmem:[%s2 + $0xb4] sm:$0xf] %v796
  %925 = vst [vmem:[%s2 + $0xb8] sm:$0xf] %v797
  %926 = vst [vmem:[%s2 + $0xbc] sm:$0xf] %v798
  %927 = vst [vmem:[%s2 + $0xc0] sm:$0xf] %v799
  %928 = vst [vmem:[%s2 + $0xc4] sm:$0xf] %v800
  %929 = vst [vmem:[%s2 + $0xc8] sm:$0xf] %v801
  %930 = vst [vmem:[%s2 + $0xcc] sm:$0xf] %v802
  %931 = vst [vmem:[%s2 + $0xd0] sm:$0xf] %v803
  %932 = vst [vmem:[%s2 + $0xd4] sm:$0xf] %v804
  %933 = vst [vmem:[%s2 + $0xd8] sm:$0xf] %v805
  %934 = vst [vmem:[%s2 + $0xdc] sm:$0xf] %v806
  %935 = vst [vmem:[%s2 + $0xe0] sm:$0xf] %v807
  %936 = vst [vmem:[%s2 + $0xe4] sm:$0xf] %v808
  %937 = vst [vmem:[%s2 + $0xe8] sm:$0xf] %v809
  %938 = vst [vmem:[%s2 + $0xec] sm:$0xf] %v810
  %939 = vst [vmem:[%s2 + $0xf0] sm:$0xf] %v811
  %940 = vst [vmem:[%s2 + $0xf4] sm:$0xf] %v812
  %941 = vst [vmem:[%s2 + $0xf8] sm:$0xf] %v813
  %942 = vst [vmem:[%s2 + $0xfc] sm:$0xf] %v814
  %v943 = vadd.f32 %v369, %v372
  %v944 = vadd.f32 %v943, %v377
  %v945 = vadd.f32 %v944, %v380
  %v946 = vadd.f32 %v945, %v385
  %v947 = vadd.f32 %v946, %v388
  %v948 = vadd.f32 %v947, %v393
  %v949 = vadd.f32 %v948, %v396
  %v950 = vadd.f32 %v949, %v401
  %v951 = vadd.f32 %v950, %v404
  %v952 = vadd.f32 %v951, %v409
  %v953 = vadd.f32 %v952, %v412
  %v954 = vadd.f32 %v953, %v417
  %v955 = vadd.f32 %v954, %v420
  %v956 = vadd.f32 %v955, %v425
  %v957 = vadd.f32 %v956, %v428
  %v958 = vadd.f32 %v957, %v433
  %v959 = vadd.f32 %v958, %v436
  %v960 = vadd.f32 %v959, %v441
  %v961 = vadd.f32 %v960, %v444
  %v962 = vadd.f32 %v961, %v449
  %v963 = vadd.f32 %v962, %v452
  %v964 = vadd.f32 %v963, %v457
  %v965 = vadd.f32 %v964, %v460
  %v966 = vadd.f32 %v965, %v465
  %v967 = vadd.f32 %v966, %v468
  %v968 = vadd.f32 %v967, %v473
  %v969 = vadd.f32 %v968, %v476
  %v970 = vadd.f32 %v969, %v481
  %v971 = vadd.f32 %v970, %v484
  %v972 = vadd.f32 %v971, %v489
  %v973 = vadd.f32 %v972, %v492
  %v974 = vadd.f32 %v973, %v497
  %v975 = vadd.f32 %v974, %v500
  %v976 = vadd.f32 %v975, %v505
  %v977 = vadd.f32 %v976, %v508
  %v978 = vadd.f32 %v977, %v513
  %v979 = vadd.f32 %v978, %v516
  %v980 = vadd.f32 %v979, %v521
  %v981 = vadd.f32 %v980, %v524
  %v982 = vadd.f32 %v981, %v529
  %v983 = vadd.f32 %v982, %v532
  %v984 = vadd.f32 %v983, %v537
  %v985 = vadd.f32 %v984, %v540
  %v986 = vadd.f32 %v985, %v545
  %v987 = vadd.f32 %v986, %v548
  %v988 = vadd.f32 %v987, %v553
  %v989 = vadd.f32 %v988, %v556
  %v990 = vadd.f32 %v989, %v561
  %v991 = vadd.f32 %v990, %v564
  %v992 = vadd.f32 %v991, %v569
  %v993 = vadd.f32 %v992, %v572
  %v994 = vadd.f32 %v993, %v577
  %v995 = vadd.f32 %v994, %v580
  %v996 = vadd.f32 %v995, %v585
  %v997 = vadd.f32 %v996, %v588
  %v998 = vadd.f32 %v997, %v593
  %v999 = vadd.f32 %v998, %v596
  %v1000 = vadd.f32 %v999, %v601
  %v1001 = vadd.f32 %v1000, %v604
  %v1002 = vadd.f32 %v1001, %v609
  %v1003 = vadd.f32 %v1002, %v612
  %v1004 = vadd.f32 %v1003, %v617
  %v1005 = vadd.f32 %v1004, %v620
  %v1006 = vrot.slane %v1005, 4
  %v1007 = vadd.f32 %v1005, %v1006
  %v1008 = vrot.slane %v1007, 2
  %v1009 = vadd.f32 %v1007, %v1008
  %v1010 = vrot.slane %v1009, 1
  %v1011 = vadd.f32 %v1009, %v1010
  %v1012 = vmul.f32 %v369, %v369
  %v1013 = vmul.f32 %v372, %v372
  %v1014 = vmul.f32 %v377, %v377
  %v1015 = vmul.f32 %v380, %v380
  %v1016 = vmul.f32 %v385, %v385
  %v1017 = vmul.f32 %v388, %v388
  %v1018 = vmul.f32 %v393, %v393
  %v1019 = vmul.f32 %v396, %v396
  %v1020 = vmul.f32 %v401, %v401
  %v1021 = vmul.f32 %v404, %v404
  %v1022 = vmul.f32 %v409, %v409
  %v1023 = vmul.f32 %v412, %v412
  %v1024 = vmul.f32 %v417, %v417
  %v1025 = vmul.f32 %v420, %v420
  %v1026 = vmul.f32 %v425, %v425
  %v1027 = vmul.f32 %v428, %v428
  %v1028 = vmul.f32 %v433, %v433
  %v1029 = vmul.f32 %v436, %v436
  %v1030 = vmul.f32 %v441, %v441
  %v1031 = vmul.f32 %v444, %v444
  %v1032 = vmul.f32 %v449, %v449
  %v1033 = vmul.f32 %v452, %v452
  %v1034 = vmul.f32 %v457, %v457
  %v1035 = vmul.f32 %v460, %v460
  %v1036 = vmul.f32 %v465, %v465
  %v1037 = vmul.f32 %v468, %v468
  %v1038 = vmul.f32 %v473, %v473
  %v1039 = vmul.f32 %v476, %v476
  %v1040 = vmul.f32 %v481, %v481
  %v1041 = vmul.f32 %v484, %v484
  %v1042 = vmul.f32 %v489, %v489
  %v1043 = vmul.f32 %v492, %v492
  %v1044 = vmul.f32 %v497, %v497
  %v1045 = vmul.f32 %v500, %v500
  %v1046 = vmul.f32 %v505, %v505
  %v1047 = vmul.f32 %v508, %v508
  %v1048 = vmul.f32 %v513, %v513
  %v1049 = vmul.f32 %v516, %v516
  %v1050 = vmul.f32 %v521, %v521
  %v1051 = vmul.f32 %v524, %v524
  %v1052 = vmul.f32 %v529, %v529
  %v1053 = vmul.f32 %v532, %v532
  %v1054 = vmul.f32 %v537, %v537
  %v1055 = vmul.f32 %v540, %v540
  %v1056 = vmul.f32 %v545, %v545
  %v1057 = vmul.f32 %v548, %v548
  %v1058 = vmul.f32 %v553, %v553
  %v1059 = vmul.f32 %v556, %v556
  %v1060 = vmul.f32 %v561, %v561
  %v1061 = vmul.f32 %v564, %v564
  %v1062 = vmul.f32 %v569, %v569
  %v1063 = vmul.f32 %v572, %v572
  %v1064 = vmul.f32 %v577, %v577
  %v1065 = vmul.f32 %v580, %v580
  %v1066 = vmul.f32 %v585, %v585
  %v1067 = vmul.f32 %v588, %v588
  %v1068 = vmul.f32 %v593, %v593
  %v1069 = vmul.f32 %v596, %v596
  %v1070 = vmul.f32 %v601, %v601
  %v1071 = vmul.f32 %v604, %v604
  %v1072 = vmul.f32 %v609, %v609
  %v1073 = vmul.f32 %v612, %v612
  %v1074 = vmul.f32 %v617, %v617
  %v1075 = vmul.f32 %v620, %v620
  %v1076 = vadd.f32 %v1012, %v1013
  %v1077 = vadd.f32 %v1076, %v1014
  %v1078 = vadd.f32 %v1077, %v1015
  %v1079 = vadd.f32 %v1078, %v1016
  %v1080 = vadd.f32 %v1079, %v1017
  %v1081 = vadd.f32 %v1080, %v1018
  %v1082 = vadd.f32 %v1081, %v1019
  %v1083 = vadd.f32 %v1082, %v1020
  %v1084 = vadd.f32 %v1083, %v1021
  %v1085 = vadd.f32 %v1084, %v1022
  %v1086 = vadd.f32 %v1085, %v1023
  %v1087 = vadd.f32 %v1086, %v1024
  %v1088 = vadd.f32 %v1087, %v1025
  %v1089 = vadd.f32 %v1088, %v1026
  %v1090 = vadd.f32 %v1089, %v1027
  %v1091 = vadd.f32 %v1090, %v1028
  %v1092 = vadd.f32 %v1091, %v1029
  %v1093 = vadd.f32 %v1092, %v1030
  %v1094 = vadd.f32 %v1093, %v1031
  %v1095 = vadd.f32 %v1094, %v1032
  %v1096 = vadd.f32 %v1095, %v1033
  %v1097 = vadd.f32 %v1096, %v1034
  %v1098 = vadd.f32 %v1097, %v1035
  %v1099 = vadd.f32 %v1098, %v1036
  %v1100 = vadd.f32 %v1099, %v1037
  %v1101 = vadd.f32 %v1100, %v1038
  %v1102 = vadd.f32 %v1101, %v1039
  %v1103 = vadd.f32 %v1102, %v1040
  %v1104 = vadd.f32 %v1103, %v1041
  %v1105 = vadd.f32 %v1104, %v1042
  %v1106 = vadd.f32 %v1105, %v1043
  %v1107 = vadd.f32 %v1106, %v1044
  %v1108 = vadd.f32 %v1107, %v1045
  %v1109 = vadd.f32 %v1108, %v1046
  %v1110 = vadd.f32 %v1109, %v1047
  %v1111 = vadd.f32 %v1110, %v1048
  %v1112 = vadd.f32 %v1111, %v1049
  %v1113 = vadd.f32 %v1112, %v1050
  %v1114 = vadd.f32 %v1113, %v1051
  %v1115 = vadd.f32 %v1114, %v1052
  %v1116 = vadd.f32 %v1115, %v1053
  %v1117 = vadd.f32 %v1116, %v1054
  %v1118 = vadd.f32 %v1117, %v1055
  %v1119 = vadd.f32 %v1118, %v1056
  %v1120 = vadd.f32 %v1119, %v1057
  %v1121 = vadd.f32 %v1120, %v1058
  %v1122 = vadd.f32 %v1121, %v1059
  %v1123 = vadd.f32 %v1122, %v1060
  %v1124 = vadd.f32 %v1123, %v1061
  %v1125 = vadd.f32 %v1124, %v1062
  %v1126 = vadd.f32 %v1125, %v1063
  %v1127 = vadd.f32 %v1126, %v1064
  %v1128 = vadd.f32 %v1127, %v1065
  %v1129 = vadd.f32 %v1128, %v1066
  %v1130 = vadd.f32 %v1129, %v1067
  %v1131 = vadd.f32 %v1130, %v1068
  %v1132 = vadd.f32 %v1131, %v1069
  %v1133 = vadd.f32 %v1132, %v1070
  %v1134 = vadd.f32 %v1133, %v1071
  %v1135 = vadd.f32 %v1134, %v1072
  %v1136 = vadd.f32 %v1135, %v1073
  %v1137 = vadd.f32 %v1136, %v1074
  %v1138 = vadd.f32 %v1137, %v1075
  %v1139 = vrot.slane %v1138, 4
  %v1140 = vadd.f32 %v1138, %v1139
  %v1141 = vrot.slane %v1140, 2
  %v1142 = vadd.f32 %v1140, %v1141
  %v1143 = vrot.slane %v1142, 1
  %v1144 = vadd.f32 %v1142, %v1143
  %v1145 = vlaneseq
  %v1146 = vshrl.u32 %v1145, 7
  %vm1147 = vcmp.eq.s32.totalorder %v1146, 0
  %vm1148 = vcmp.eq.s32.totalorder %v1146, 1
  %v1149 = vsel %vm1148, %v1144, 0.0
  %v1150 = vsel %vm1147, %v1011, %v1149
  %1151 = vst [vmem:[%s3] sm:$0xff] %v1150
  // Predicated region
  $region10: #{bottleneck_forward.5} parent=0 // pred_check
    _
  $region11: #{bottleneck_forward.5} parent=0 // pred_check_branch
    %1153 = sbr.rel (0) target = $region13
  $region12: #{bottleneck_forward.5} parent=0 // pred_region
    _
  $region13: #{bottleneck_forward.5} parent=0 // pred_fallthru
    _
  // Predicated region
  $region14: #{bottleneck_forward.5} parent=0 // pred_check
    _
  $region15: #{bottleneck_forward.5} parent=0 // pred_check_branch
    %1155 = sbr.rel (0) target = $region17
  $region16: #{bottleneck_forward.5} parent=0 // pred_region
    _
  $region17: #{bottleneck_forward.5} parent=0 // pred_fallthru
    _
  // Predicated region
  $region18: #{bottleneck_forward.5} parent=0 // pred_check
    _
  $region19: #{bottleneck_forward.5} parent=0 // pred_check_branch
    %1157 = sbr.rel (0) target = $region21
  $region20: #{bottleneck_forward.5} parent=0 // pred_region
    _
  $region21: #{bottleneck_forward.5} parent=0 // pred_fallthru
    _
  // Predicated region
  $region22: #{bottleneck_forward.5} parent=0 // pred_check
    _
  $region23: #{bottleneck_forward.5} parent=0 // pred_check_branch
    %1159 = sbr.rel (0) target = $region25
  $region24: #{bottleneck_forward.5} parent=0 // pred_region
    _
  $region25: #{bottleneck_forward.5} parent=0 // pred_fallthru
    _

// kernel: bottleneck_forward.7
$region0: #{bottleneck_forward.7}
  #allocation0 [shape = 'u32[]', space=smem, size = 0x4, offset = 0x4, fixed_abs, tag = 'smem constant byte address 0x4 - core index']
  #allocation1 [shape = 'u32[144,128]{1,0:T(1,128)}', space=vmem, size = 0x12000, scoped, tag = 'internal scratch']
  %s0 = inlined_call_operand.vmem [shape: bf16[128,128], index: 0, kind: input, shape index: {}]
  %s1 = inlined_call_operand.vmem [shape: f32[1,128], index: 1, kind: input, shape index: {}]
  %s2 = inlined_call_operand.vmem [shape: f32[1,128], index: 2, kind: input, shape index: {}]
  %s3 = inlined_call_operand.vmem [shape: bf16[128,128], index: 3, kind: input, shape index: {}]
  %s4 = inlined_call_operand.vmem [shape: bf16[128,128], index: 4, kind: output, shape index: {0}]
  %s5 = inlined_call_operand.vmem [shape: f32[8,128], index: 5, kind: output, shape index: {1}]
  %6 = xla_tuple %s4, %s5
  %s7 = sld [smem:[#allocation0]]
  $region34: #{bottleneck_forward.7} parent=0
    _
  %s9 = ssub.s32 1, %s7
  %s10 = scalar_select 0, %s9, %s7
  // Predicated region
  $region2: #{bottleneck_forward.7} parent=0 // pred_check
    _
  $region3: #{bottleneck_forward.7} parent=0 // pred_check_branch
    %12 = sbr.rel (0) target = $region5
  $region4: #{bottleneck_forward.7} parent=0 // pred_region
    _
  $region5: #{bottleneck_forward.7} parent=0 // pred_fallthru
    _
  // Predicated region
  $region6: #{bottleneck_forward.7} parent=0 // pred_check
    _
  $region7: #{bottleneck_forward.7} parent=0 // pred_check_branch
    %14 = sbr.rel (0) target = $region9
  $region8: #{bottleneck_forward.7} parent=0 // pred_region
    _
  $region9: #{bottleneck_forward.7} parent=0 // pred_fallthru
    _
  // Predicated region
  $region10: #{bottleneck_forward.7} parent=0 // pred_check
    _
  $region11: #{bottleneck_forward.7} parent=0 // pred_check_branch
    %16 = sbr.rel (0) target = $region13
  $region12: #{bottleneck_forward.7} parent=0 // pred_region
    _
  $region13: #{bottleneck_forward.7} parent=0 // pred_fallthru
    _
  // Predicated region
  $region14: #{bottleneck_forward.7} parent=0 // pred_check
    _
  $region15: #{bottleneck_forward.7} parent=0 // pred_check_branch
    %18 = sbr.rel (0) target = $region17
  $region16: #{bottleneck_forward.7} parent=0 // pred_region
    _
  $region17: #{bottleneck_forward.7} parent=0 // pred_fallthru
    _
  %v20 = vld [vmem:[%s0] sm:$0xf]
  %v21 = vld [vmem:[%s0 + $0x4] sm:$0xf]
  %v22 = vld [vmem:[%s0 + $0x8] sm:$0xf]
  %v23 = vld [vmem:[%s0 + $0xc] sm:$0xf]
  %v24 = vld [vmem:[%s0 + $0x10] sm:$0xf]
  %v25 = vld [vmem:[%s0 + $0x14] sm:$0xf]
  %v26 = vld [vmem:[%s0 + $0x18] sm:$0xf]
  %v27 = vld [vmem:[%s0 + $0x1c] sm:$0xf]
  %v28 = vld [vmem:[%s0 + $0x20] sm:$0xf]
  %v29 = vld [vmem:[%s0 + $0x24] sm:$0xf]
  %v30 = vld [vmem:[%s0 + $0x28] sm:$0xf]
  %v31 = vld [vmem:[%s0 + $0x2c] sm:$0xf]
  %v32 = vld [vmem:[%s0 + $0x30] sm:$0xf]
  %v33 = vld [vmem:[%s0 + $0x34] sm:$0xf]
  %v34 = vld [vmem:[%s0 + $0x38] sm:$0xf]
  %v35 = vld [vmem:[%s0 + $0x3c] sm:$0xf]
  %v36 = vunpack.c.l.bf16 %v20
  %v37 = vunpack.c.l.bf16 %v21
  %v38 = vunpack.c.l.bf16 %v22
  %v39 = vunpack.c.l.bf16 %v23
  %v40 = vunpack.c.l.bf16 %v24
  %v41 = vunpack.c.l.bf16 %v25
  %v42 = vunpack.c.l.bf16 %v26
  %v43 = vunpack.c.l.bf16 %v27
  %v44 = vunpack.c.l.bf16 %v28
  %v45 = vunpack.c.l.bf16 %v29
  %v46 = vunpack.c.l.bf16 %v30
  %v47 = vunpack.c.l.bf16 %v31
  %v48 = vunpack.c.l.bf16 %v32
  %v49 = vunpack.c.l.bf16 %v33
  %v50 = vunpack.c.l.bf16 %v34
  %v51 = vunpack.c.l.bf16 %v35
  %v52 = vld [vmem:[%s1] sm:$0x1]
  %v54 = vlaneseq
  %v55 = vshrl.u32 %v54, 7
  %v56 = vsub.s32 0, %v55
  %v57 = vrot.slane %v52, %v56
  %v59 = vmul.f32 %v36, %v57
  %v60 = vmul.f32 %v37, %v57
  %v61 = vmul.f32 %v38, %v57
  %v62 = vmul.f32 %v39, %v57
  %v63 = vmul.f32 %v40, %v57
  %v64 = vmul.f32 %v41, %v57
  %v65 = vmul.f32 %v42, %v57
  %v66 = vmul.f32 %v43, %v57
  %v67 = vmul.f32 %v44, %v57
  %v68 = vmul.f32 %v45, %v57
  %v69 = vmul.f32 %v46, %v57
  %v70 = vmul.f32 %v47, %v57
  %v71 = vmul.f32 %v48, %v57
  %v72 = vmul.f32 %v49, %v57
  %v73 = vmul.f32 %v50, %v57
  %v74 = vmul.f32 %v51, %v57
  %v75 = vld [vmem:[%s2] sm:$0x1]
  %v77 = vlaneseq
  %v78 = vshrl.u32 %v77, 7
  %v79 = vsub.s32 0, %v78
  %v80 = vrot.slane %v75, %v79
  %v82 = vadd.f32 %v59, %v80
  %v83 = vadd.f32 %v60, %v80
  %v84 = vadd.f32 %v61, %v80
  %v85 = vadd.f32 %v62, %v80
  %v86 = vadd.f32 %v63, %v80
  %v87 = vadd.f32 %v64, %v80
  %v88 = vadd.f32 %v65, %v80
  %v89 = vadd.f32 %v66, %v80
  %v90 = vadd.f32 %v67, %v80
  %v91 = vadd.f32 %v68, %v80
  %v92 = vadd.f32 %v69, %v80
  %v93 = vadd.f32 %v70, %v80
  %v94 = vadd.f32 %v71, %v80
  %v95 = vadd.f32 %v72, %v80
  %v96 = vadd.f32 %v73, %v80
  %v97 = vadd.f32 %v74, %v80
  %v98 = vmax.f32 %v82, 0.0
  %v99 = vmax.f32 %v83, 0.0
  %v100 = vmax.f32 %v84, 0.0
  %v101 = vmax.f32 %v85, 0.0
  %v102 = vmax.f32 %v86, 0.0
  %v103 = vmax.f32 %v87, 0.0
  %v104 = vmax.f32 %v88, 0.0
  %v105 = vmax.f32 %v89, 0.0
  %v106 = vmax.f32 %v90, 0.0
  %v107 = vmax.f32 %v91, 0.0
  %v108 = vmax.f32 %v92, 0.0
  %v109 = vmax.f32 %v93, 0.0
  %v110 = vmax.f32 %v94, 0.0
  %v111 = vmax.f32 %v95, 0.0
  %v112 = vmax.f32 %v96, 0.0
  %v113 = vmax.f32 %v97, 0.0
  %v114 = vpack.c.bf16 %v99, %v98
  %v115 = vpack.c.bf16 %v101, %v100
  %v116 = vpack.c.bf16 %v103, %v102
  %v117 = vpack.c.bf16 %v105, %v104
  %v118 = vpack.c.bf16 %v107, %v106
  %v119 = vpack.c.bf16 %v109, %v108
  %v120 = vpack.c.bf16 %v111, %v110
  %v121 = vpack.c.bf16 %v113, %v112
  %v122 = vld [vmem:[%s3] sm:$0xf]
  %v123 = vld [vmem:[%s3 + $0x4] sm:$0xf]
  %v124 = vld [vmem:[%s3 + $0x8] sm:$0xf]
  %v125 = vld [vmem:[%s3 + $0xc] sm:$0xf]
  %v126 = vld [vmem:[%s3 + $0x10] sm:$0xf]
  %v127 = vld [vmem:[%s3 + $0x14] sm:$0xf]
  %v128 = vld [vmem:[%s3 + $0x18] sm:$0xf]
  %v129 = vld [vmem:[%s3 + $0x1c] sm:$0xf]
  %v130 = vld [vmem:[%s3 + $0x20] sm:$0xf]
  %v131 = vld [vmem:[%s3 + $0x24] sm:$0xf]
  %v132 = vld [vmem:[%s3 + $0x28] sm:$0xf]
  %v133 = vld [vmem:[%s3 + $0x2c] sm:$0xf]
  %v134 = vld [vmem:[%s3 + $0x30] sm:$0xf]
  %v135 = vld [vmem:[%s3 + $0x34] sm:$0xf]
  %v136 = vld [vmem:[%s3 + $0x38] sm:$0xf]
  %v137 = vld [vmem:[%s3 + $0x3c] sm:$0xf]
  %v154 = vunpack.c.l.b16 %v122
  %v155 = vunpack.c.l.b16 %v123
  %v156 = vunpack.c.l.b16 %v124
  %v157 = vunpack.c.l.b16 %v125
  %v158 = vunpack.c.l.b16 %v126
  %v159 = vunpack.c.l.b16 %v127
  %v160 = vunpack.c.l.b16 %v128
  %v161 = vunpack.c.l.b16 %v129
  %v162 = vunpack.c.l.b16 %v130
  %v163 = vunpack.c.l.b16 %v131
  %v164 = vunpack.c.l.b16 %v132
  %v165 = vunpack.c.l.b16 %v133
  %v166 = vunpack.c.l.b16 %v134
  %v167 = vunpack.c.l.b16 %v135
  %v168 = vunpack.c.l.b16 %v136
  %v169 = vunpack.c.l.b16 %v137
  %v170 = vpack.c.b16 %v155, %v154
  %v171 = vpack.c.b16 %v157, %v156
  %v172 = vpack.c.b16 %v159, %v158
  %v173 = vpack.c.b16 %v161, %v160
  %v174 = vpack.c.b16 %v163, %v162
  %v175 = vpack.c.b16 %v165, %v164
  %v176 = vpack.c.b16 %v167, %v166
  %v177 = vpack.c.b16 %v169, %v168
  %186 = vmatprep.subr.bf16.mxu0 0
  %187 = vmatpush1.bf16.msra.mxu0 %v170
  %188 = vmatprep.subr.bf16.mxu0 0
  %189 = vmatpush1.bf16.msra.mxu0 %v171
  %190 = vmatprep.subr.bf16.mxu0 0
  %191 = vmatpush1.bf16.msra.mxu0 %v172
  %192 = vmatprep.subr.bf16.mxu0 0
  %193 = vmatpush1.bf16.msra.mxu0 %v173
  %194 = vmatprep.subr.bf16.mxu0 0
  %195 = vmatpush1.bf16.msra.mxu0 %v174
  %196 = vmatprep.subr.bf16.mxu0 0
  %197 = vmatpush1.bf16.msra.mxu0 %v175
  %198 = vmatprep.subr.bf16.mxu0 0
  %199 = vmatpush1.bf16.msra.mxu0 %v176
  %200 = vmatprep.subr.bf16.mxu0 0
  %201 = vmatpush1.bf16.msra.mxu0 %v177
  %202 = vmatprep.subr.bf16.mxu0 0
  %203 = vmatpush1.bf16.msra.mxu0 0
  %204 = vmatprep.subr.bf16.mxu0 0
  %205 = vmatpush1.bf16.msra.mxu0 0
  %206 = vmatprep.subr.bf16.mxu0 0
  %207 = vmatpush1.bf16.msra.mxu0 0
  %208 = vmatprep.subr.bf16.mxu0 0
  %209 = vmatpush1.bf16.msra.mxu0 0
  %210 = vmatprep.subr.bf16.mxu0 0
  %211 = vmatpush1.bf16.msra.mxu0 0
  %212 = vmatprep.subr.bf16.mxu0 0
  %213 = vmatpush1.bf16.msra.mxu0 0
  %214 = vmatprep.subr.bf16.mxu0 0
  %215 = vmatpush1.bf16.msra.mxu0 0
  %216 = vmatprep.subr.bf16.mxu0 0
  %217 = vmatpush1.bf16.msra.mxu0 0
  %218 = vmatprep.mubr.bf16.mxu0 0
  %219 = vmatmul.mubr.bf16.gmra.mrb[0].mxu0 %v114
  %v220 = vpop.f32.mrb[0].mxu0
  %v221 = vadd.f32 0.0, %v220
  %v222 = vpop.f32.mrb[0].mxu0
  %v223 = vpop.f32.mrb[0].mxu0
  %v224 = vadd.f32 0.0, %v223
  %v225 = vpop.f32.mrb[0].mxu0
  %226 = vmatprep.mubr.bf16.mxu0 0
  %227 = vmatmul.mubr.bf16.gmra.mrb[0].mxu0 %v115
  %v228 = vpop.f32.mrb[0].mxu0
  %v229 = vadd.f32 0.0, %v228
  %v230 = vpop.f32.mrb[0].mxu0
  %v231 = vpop.f32.mrb[0].mxu0
  %v232 = vadd.f32 0.0, %v231
  %v233 = vpop.f32.mrb[0].mxu0
  %234 = vmatprep.mubr.bf16.mxu0 0
  %235 = vmatmul.mubr.bf16.gmra.mrb[0].mxu0 %v116
  %v236 = vpop.f32.mrb[0].mxu0
  %v237 = vadd.f32 0.0, %v236
  %v238 = vpop.f32.mrb[0].mxu0
  %v239 = vpop.f32.mrb[0].mxu0
  %v240 = vadd.f32 0.0, %v239
  %v241 = vpop.f32.mrb[0].mxu0
  %242 = vmatprep.mubr.bf16.mxu0 0
  %243 = vmatmul.mubr.bf16.gmra.mrb[0].mxu0 %v117
  %v244 = vpop.f32.mrb[0].mxu0
  %v245 = vadd.f32 0.0, %v244
  %v246 = vpop.f32.mrb[0].mxu0
  %v247 = vpop.f32.mrb[0].mxu0
  %v248 = vadd.f32 0.0, %v247
  %v249 = vpop.f32.mrb[0].mxu0
  %250 = vmatprep.mubr.bf16.mxu0 0
  %251 = vmatmul.mubr.bf16.gmra.mrb[0].mxu0 %v118
  %v252 = vpop.f32.mrb[0].mxu0
  %v253 = vadd.f32 0.0, %v252
  %v254 = vpop.f32.mrb[0].mxu0
  %v255 = vpop.f32.mrb[0].mxu0
  %v256 = vadd.f32 0.0, %v255
  %v257 = vpop.f32.mrb[0].mxu0
  %258 = vmatprep.mubr.bf16.mxu0 0
  %259 = vmatmul.mubr.bf16.gmra.mrb[0].mxu0 %v119
  %v260 = vpop.f32.mrb[0].mxu0
  %v261 = vadd.f32 0.0, %v260
  %v262 = vpop.f32.mrb[0].mxu0
  %v263 = vpop.f32.mrb[0].mxu0
  %v264 = vadd.f32 0.0, %v263
  %v265 = vpop.f32.mrb[0].mxu0
  %266 = vmatprep.mubr.bf16.mxu0 0
  %267 = vmatmul.mubr.bf16.gmra.mrb[0].mxu0 %v120
  %v268 = vpop.f32.mrb[0].mxu0
  %v269 = vadd.f32 0.0, %v268
  %v270 = vpop.f32.mrb[0].mxu0
  %v271 = vpop.f32.mrb[0].mxu0
  %v272 = vadd.f32 0.0, %v271
  %v273 = vpop.f32.mrb[0].mxu0
  %274 = vmatprep.mubr.bf16.mxu0 0
  %275 = vmatmul.mubr.bf16.gmra.mrb[0].mxu0 %v121
  %v276 = vpop.f32.mrb[0].mxu0
  %v277 = vadd.f32 0.0, %v276
  %v278 = vpop.f32.mrb[0].mxu0
  %v279 = vpop.f32.mrb[0].mxu0
  %v280 = vadd.f32 0.0, %v279
  %v281 = vpop.f32.mrb[0].mxu0
  %282 = vdwg.mxu0
  %v283 = vpack.c.bf16 %v224, %v221
  %v284 = vpack.c.bf16 %v232, %v229
  %v285 = vpack.c.bf16 %v240, %v237
  %v286 = vpack.c.bf16 %v248, %v245
  %v287 = vpack.c.bf16 %v256, %v253
  %v288 = vpack.c.bf16 %v264, %v261
  %v289 = vpack.c.bf16 %v272, %v269
  %v290 = vpack.c.bf16 %v280, %v277
  %v299 = vunpack.c.l.b16 %v283
  %v300 = vunpack.c.h.b16 %v283
  %v301 = vunpack.c.l.b16 %v284
  %v302 = vunpack.c.h.b16 %v284
  %v303 = vunpack.c.l.b16 %v285
  %v304 = vunpack.c.h.b16 %v285
  %v305 = vunpack.c.l.b16 %v286
  %v306 = vunpack.c.h.b16 %v286
  %v307 = vunpack.c.l.b16 %v287
  %v308 = vunpack.c.h.b16 %v287
  %v309 = vunpack.c.l.b16 %v288
  %v310 = vunpack.c.h.b16 %v288
  %v311 = vunpack.c.l.b16 %v289
  %v312 = vunpack.c.h.b16 %v289
  %v313 = vunpack.c.l.b16 %v290
  %v314 = vunpack.c.h.b16 %v290
  %v315 = vpack.c.b16 %v299, %v299
  %v316 = vpack.c.b16 %v300, %v300
  %v317 = vpack.c.b16 %v301, %v301
  %v318 = vpack.c.b16 %v302, %v302
  %v319 = vpack.c.b16 %v303, %v303
  %v320 = vpack.c.b16 %v304, %v304
  %v321 = vpack.c.b16 %v305, %v305
  %v322 = vpack.c.b16 %v306, %v306
  %v323 = vpack.c.b16 %v307, %v307
  %v324 = vpack.c.b16 %v308, %v308
  %v325 = vpack.c.b16 %v309, %v309
  %v326 = vpack.c.b16 %v310, %v310
  %v327 = vpack.c.b16 %v311, %v311
  %v328 = vpack.c.b16 %v312, %v312
  %v329 = vpack.c.b16 %v313, %v313
  %v330 = vpack.c.b16 %v314, %v314
  %347 = vst [vmem:[%s4] sm:$0xf] %v315
  %348 = vst [vmem:[%s4 + $0x4] sm:$0xf] %v316
  %349 = vst [vmem:[%s4 + $0x8] sm:$0xf] %v317
  %350 = vst [vmem:[%s4 + $0xc] sm:$0xf] %v318
  %351 = vst [vmem:[%s4 + $0x10] sm:$0xf] %v319
  %352 = vst [vmem:[%s4 + $0x14] sm:$0xf] %v320
  %353 = vst [vmem:[%s4 + $0x18] sm:$0xf] %v321
  %354 = vst [vmem:[%s4 + $0x1c] sm:$0xf] %v322
  %355 = vst [vmem:[%s4 + $0x20] sm:$0xf] %v323
  %356 = vst [vmem:[%s4 + $0x24] sm:$0xf] %v324
  %357 = vst [vmem:[%s4 + $0x28] sm:$0xf] %v325
  %358 = vst [vmem:[%s4 + $0x2c] sm:$0xf] %v326
  %359 = vst [vmem:[%s4 + $0x30] sm:$0xf] %v327
  %360 = vst [vmem:[%s4 + $0x34] sm:$0xf] %v328
  %361 = vst [vmem:[%s4 + $0x38] sm:$0xf] %v329
  %362 = vst [vmem:[%s4 + $0x3c] sm:$0xf] %v330
  %v363 = vadd.f32 %v221, %v224
  %v364 = vadd.f32 %v363, %v229
  %v365 = vadd.f32 %v364, %v232
  %v366 = vadd.f32 %v365, %v237
  %v367 = vadd.f32 %v366, %v240
  %v368 = vadd.f32 %v367, %v245
  %v369 = vadd.f32 %v368, %v248
  %v370 = vadd.f32 %v369, %v253
  %v371 = vadd.f32 %v370, %v256
  %v372 = vadd.f32 %v371, %v261
  %v373 = vadd.f32 %v372, %v264
  %v374 = vadd.f32 %v373, %v269
  %v375 = vadd.f32 %v374, %v272
  %v376 = vadd.f32 %v375, %v277
  %v377 = vadd.f32 %v376, %v280
  %v378 = vrot.slane %v377, 4
  %v379 = vadd.f32 %v377, %v378
  %v380 = vrot.slane %v379, 2
  %v381 = vadd.f32 %v379, %v380
  %v382 = vrot.slane %v381, 1
  %v383 = vadd.f32 %v381, %v382
  %v384 = vmul.f32 %v221, %v221
  %v385 = vmul.f32 %v224, %v224
  %v386 = vmul.f32 %v229, %v229
  %v387 = vmul.f32 %v232, %v232
  %v388 = vmul.f32 %v237, %v237
  %v389 = vmul.f32 %v240, %v240
  %v390 = vmul.f32 %v245, %v245
  %v391 = vmul.f32 %v248, %v248
  %v392 = vmul.f32 %v253, %v253
  %v393 = vmul.f32 %v256, %v256
  %v394 = vmul.f32 %v261, %v261
  %v395 = vmul.f32 %v264, %v264
  %v396 = vmul.f32 %v269, %v269
  %v397 = vmul.f32 %v272, %v272
  %v398 = vmul.f32 %v277, %v277
  %v399 = vmul.f32 %v280, %v280
  %v400 = vadd.f32 %v384, %v385
  %v401 = vadd.f32 %v400, %v386
  %v402 = vadd.f32 %v401, %v387
  %v403 = vadd.f32 %v402, %v388
  %v404 = vadd.f32 %v403, %v389
  %v405 = vadd.f32 %v404, %v390
  %v406 = vadd.f32 %v405, %v391
  %v407 = vadd.f32 %v406, %v392
  %v408 = vadd.f32 %v407, %v393
  %v409 = vadd.f32 %v408, %v394
  %v410 = vadd.f32 %v409, %v395
  %v411 = vadd.f32 %v410, %v396
  %v412 = vadd.f32 %v411, %v397
  %v413 = vadd.f32 %v412, %v398
  %v414 = vadd.f32 %v413, %v399
  %v415 = vrot.slane %v414, 4
  %v416 = vadd.f32 %v414, %v415
  %v417 = vrot.slane %v416, 2
  %v418 = vadd.f32 %v416, %v417
  %v419 = vrot.slane %v418, 1
  %v420 = vadd.f32 %v418, %v419
  %v421 = vlaneseq
  %v422 = vshrl.u32 %v421, 7
  %vm423 = vcmp.eq.s32.totalorder %v422, 0
  %vm424 = vcmp.eq.s32.totalorder %v422, 1
  %v425 = vsel %vm424, %v420, 0.0
  %v426 = vsel %vm423, %v383, %v425
  %427 = vst [vmem:[%s5] sm:$0xff] %v426
  // Predicated region
  $region18: #{bottleneck_forward.7} parent=0 // pred_check
    _
  $region19: #{bottleneck_forward.7} parent=0 // pred_check_branch
    %429 = sbr.rel (0) target = $region21
  $region20: #{bottleneck_forward.7} parent=0 // pred_region
    _
  $region21: #{bottleneck_forward.7} parent=0 // pred_fallthru
    _
  // Predicated region
  $region22: #{bottleneck_forward.7} parent=0 // pred_check
    _
  $region23: #{bottleneck_forward.7} parent=0 // pred_check_branch
    %431 = sbr.rel (0) target = $region25
  $region24: #{bottleneck_forward.7} parent=0 // pred_region
    _
  $region25: #{bottleneck_forward.7} parent=0 // pred_fallthru
    _
  // Predicated region
  $region26: #{bottleneck_forward.7} parent=0 // pred_check
    _
  $region27: #{bottleneck_forward.7} parent=0 // pred_check_branch
    %433 = sbr.rel (0) target = $region29
  $region28: #{bottleneck_forward.7} parent=0 // pred_region
    _
  $region29: #{bottleneck_forward.7} parent=0 // pred_fallthru
    _
  // Predicated region
  $region30: #{bottleneck_forward.7} parent=0 // pred_check
    _
  $region31: #{bottleneck_forward.7} parent=0 // pred_check_branch
    %435 = sbr.rel (0) target = $region33
  $region32: #{bottleneck_forward.7} parent=0 // pred_region
    _
  $region33: #{bottleneck_forward.7} parent=0 // pred_fallthru
    _

// kernel: bottleneck_forward.6
$region0: #{bottleneck_forward.6}
  #allocation0 [shape = 'u32[]', space=smem, size = 0x4, offset = 0x4, fixed_abs, tag = 'smem constant byte address 0x4 - core index']
  #allocation1 [shape = 'u32[144,128]{1,0:T(1,128)}', space=vmem, size = 0x12000, scoped, tag = 'internal scratch']
  %s0 = inlined_call_operand.vmem [shape: bf16[2,9,9,512], index: 0, kind: input, shape index: {}]
  %s1 = inlined_call_operand.vmem [shape: f32[1,128], index: 1, kind: input, shape index: {}]
  %s2 = inlined_call_operand.vmem [shape: f32[1,128], index: 2, kind: input, shape index: {}]
  %s3 = inlined_call_operand.vmem [shape: bf16[3,3,128,128], index: 3, kind: input, shape index: {}]
  %s4 = inlined_call_operand.vmem [shape: bf16[128,128], index: 4, kind: output, shape index: {0}]
  %s5 = inlined_call_operand.vmem [shape: f32[16,128], index: 5, kind: output, shape index: {1}]
  %6 = xla_tuple %s4, %s5
  %s7 = sld [smem:[#allocation0]]
  $region57: #{bottleneck_forward.6} parent=0
    _
  %s9 = ssub.s32 1, %s7
  %s10 = scalar_select 0, %s9, %s7
  loop: start=0, step=1, limit=4
  $region2: #{bottleneck_forward.6} parent=0 // loop_pre_header
    _
  $region3: #{bottleneck_forward.6} parent=0 // loop_header
    %s12 = sphi 0, %s16
    %p13 = scmp.ge.s32.totalorder %s12, 4
    %s19 = sphi 0, %s31
    %s20 = sphi 0, %s27
    %s21 = sphi 0, %s19
    %s22 = sphi 0, %s20
    %s23 = sphi 0, %s21
    %s24 = sphi 0, %s22
    %s34 = sphi 0, %s36
    %s37 = sphi 0, %s34
    %s38 = sphi 0, %s37
    %s54 = sphi 0, %s38
    %s58 = sphi 0, %s58
    %s60 = sphi 0, %s58
    %s61 = sphi 0, %s60
    %s75 = sphi 0, %s61
    %s79 = sphi 0, %s79
    %s81 = sphi 0, %s79
    %s82 = sphi 0, %s81
    %s96 = sphi 0, %s82
    %s100 = sphi 0, %s100
    %s102 = sphi 0, %s100
    %s103 = sphi 0, %s102
    %s117 = sphi 0, %s103
    %s125 = sphi 0, %s127
    %s128 = sphi 0, %s125
    %s129 = sphi 0, %s128
    %s145 = sphi 0, %s129
    %s153 = sphi 0, %s155
    %s156 = sphi 0, %s153
    %s157 = sphi 0, %s156
    %s173 = sphi 0, %s157
  $region4: #{bottleneck_forward.6} parent=0 // loop_header_branch
    %15 = sbr.rel (%p13) target = $region8
  $region5: #{bottleneck_forward.6} parent=0 // loop_body
    %s17 = ssub.s32 %s12, 1
    %s18 = ssub.s32 %s12, 2
    %s25 = sadd.s32 1, %s20
    %p26 = scmp.ge.s32.totalorder %s25, 1
    %s27 = scalar_select %p26, 0, %s25
    %s28 = sadd.s32 1, %s19
    %s29 = scalar_select %p26, %s28, %s19
    %p30 = scmp.ge.s32.totalorder %s29, 2
    %s31 = scalar_select %p30, 0, %s29
    %s32 = ssub.s32 %s19, %s31
    %p33 = scmp.eq.s32.totalorder %s32, 0
    %s35 = sadd.s32 %s34, 1
    %s36 = scalar_select %p33, %s34, %s35
    %p39 = pneg %p33
    %p40 = scmp.eq.s32.totalorder %s12, 1
    %p41 = por %p39, %p40
    %p42 = scmp.ne.s32.totalorder %s34, %s37
    %p43 = scmp.eq.s32.totalorder %s12, 0
    %p44 = por %p42, %p43
    %p45 = scmp.ne.s32.totalorder %s34, %s37
    %p46 = scmp.eq.s32.totalorder %s17, 1
    %p47 = por %p45, %p46
    %p48 = scmp.ne.s32.totalorder %s37, %s38
    %p49 = scmp.eq.s32.totalorder %s17, 0
    %p50 = por %p48, %p49
    %p51 = scmp.ne.s32.totalorder %s37, %s38
    %p52 = scmp.eq.s32.totalorder %s18, 1
    %p53 = por %p51, %p52
    %p55 = scmp.ne.s32.totalorder %s38, %s54
    %p56 = scmp.eq.s32.totalorder %s18, 0
    %p57 = por %p55, %p56
    %s59 = sadd.s32 %s58, 1
    %p62 = scmp.eq.s32.totalorder %s12, 1
    %p63 = scmp.ne.s32.totalorder %s58, %s60
    %p64 = scmp.eq.s32.totalorder %s12, 0
    %p65 = por %p63, %p64
    %p66 = scmp.ne.s32.totalorder %s58, %s60
    %p67 = scmp.eq.s32.totalorder %s17, 1
    %p68 = por %p66, %p67
    %p69 = scmp.ne.s32.totalorder %s60, %s61
    %p70 = scmp.eq.s32.totalorder %s17, 0
    %p71 = por %p69, %p70
    %p72 = scmp.ne.s32.totalorder %s60, %s61
    %p73 = scmp.eq.s32.totalorder %s18, 1
    %p74 = por %p72, %p73
    %p76 = scmp.ne.s32.totalorder %s61, %s75
    %p77 = scmp.eq.s32.totalorder %s18, 0
    %p78 = por %p76, %p77
    %s80 = sadd.s32 %s79, 1
    %p83 = scmp.eq.s32.totalorder %s12, 1
    %p84 = scmp.ne.s32.totalorder %s79, %s81
    %p85 = scmp.eq.s32.totalorder %s12, 0
    %p86 = por %p84, %p85
    %p87 = scmp.ne.s32.totalorder %s79, %s81
    %p88 = scmp.eq.s32.totalorder %s17, 1
    %p89 = por %p87, %p88
    %p90 = scmp.ne.s32.totalorder %s81, %s82
    %p91 = scmp.eq.s32.totalorder %s17, 0
    %p92 = por %p90, %p91
    %p93 = scmp.ne.s32.totalorder %s81, %s82
    %p94 = scmp.eq.s32.totalorder %s18, 1
    %p95 = por %p93, %p94
    %p97 = scmp.ne.s32.totalorder %s82, %s96
    %p98 = scmp.eq.s32.totalorder %s18, 0
    %p99 = por %p97, %p98
    %s101 = sadd.s32 %s100, 1
    %p104 = scmp.eq.s32.totalorder %s12, 1
    %p105 = scmp.ne.s32.totalorder %s100, %s102
    %p106 = scmp.eq.s32.totalorder %s12, 0
    %p107 = por %p105, %p106
    %p108 = scmp.ne.s32.totalorder %s100, %s102
    %p109 = scmp.eq.s32.totalorder %s17, 1
    %p110 = por %p108, %p109
    %p111 = scmp.ne.s32.totalorder %s102, %s103
    %p112 = scmp.eq.s32.totalorder %s17, 0
    %p113 = por %p111, %p112
    %p114 = scmp.ne.s32.totalorder %s102, %s103
    %p115 = scmp.eq.s32.totalorder %s18, 1
    %p116 = por %p114, %p115
    %p118 = scmp.ne.s32.totalorder %s103, %s117
    %p119 = scmp.eq.s32.totalorder %s18, 0
    %p120 = por %p118, %p119
    %s121 = sadd.s32 %s19, %s20
    %s122 = sadd.s32 %s31, %s27
    %s123 = ssub.s32 %s121, %s122
    %p124 = scmp.eq.s32.totalorder %s123, 0
    %s126 = sadd.s32 %s125, 1
    %s127 = scalar_select %p124, %s125, %s126
    %p130 = pneg %p124
    %p131 = scmp.eq.s32.totalorder %s12, 1
    %p132 = por %p130, %p131
    %p133 = scmp.ne.s32.totalorder %s125, %s128
    %p134 = scmp.eq.s32.totalorder %s12, 0
    %p135 = por %p133, %p134
    %p136 = scmp.ne.s32.totalorder %s125, %s128
    %p137 = scmp.eq.s32.totalorder %s17, 1
    %p138 = por %p136, %p137
    %p139 = scmp.ne.s32.totalorder %s128, %s129
    %p140 = scmp.eq.s32.totalorder %s17, 0
    %p141 = por %p139, %p140
    %p142 = scmp.ne.s32.totalorder %s128, %s129
    %p143 = scmp.eq.s32.totalorder %s18, 1
    %p144 = por %p142, %p143
    %p146 = scmp.ne.s32.totalorder %s129, %s145
    %p147 = scmp.eq.s32.totalorder %s18, 0
    %p148 = por %p146, %p147
    %s149 = sadd.s32 %s19, %s20
    %s150 = sadd.s32 %s31, %s27
    %s151 = ssub.s32 %s149, %s150
    %p152 = scmp.eq.s32.totalorder %s151, 0
    %s154 = sadd.s32 %s153, 1
    %s155 = scalar_select %p152, %s153, %s154
    %p158 = pneg %p152
    %p159 = scmp.eq.s32.totalorder %s12, 1
    %p160 = por %p158, %p159
    %p161 = scmp.ne.s32.totalorder %s153, %s156
    %p162 = scmp.eq.s32.totalorder %s12, 0
    %p163 = por %p161, %p162
    %p164 = scmp.ne.s32.totalorder %s153, %s156
    %p165 = scmp.eq.s32.totalorder %s17, 1
    %p166 = por %p164, %p165
    %p167 = scmp.ne.s32.totalorder %s156, %s157
    %p168 = scmp.eq.s32.totalorder %s17, 0
    %p169 = por %p167, %p168
    %p170 = scmp.ne.s32.totalorder %s156, %s157
    %p171 = scmp.eq.s32.totalorder %s18, 1
    %p172 = por %p170, %p171
    %p174 = scmp.ne.s32.totalorder %s157, %s173
    %p175 = scmp.eq.s32.totalorder %s18, 0
    %p176 = por %p174, %p175
    %p177 = scmp.le.s32.totalorder 1, %s12
    %p178 = scmp.lt.s32.totalorder %s12, 3
    %p179 = pnand %p177, %p178
    %p180 = pneg %p179
    // Predicated region
    $region9: #{bottleneck_forward.6} parent=5 // pred_check
      _
    $region10: #{bottleneck_forward.6} parent=5 // pred_check_branch
      %182 = sbr.rel (%p179) target = $region12
    $region11: #{bottleneck_forward.6} parent=5 // pred_region
      %s183 = ssub.s32 %s12, 1
      // Predicated region
      $region13: #{bottleneck_forward.6} parent=11 // pred_check
        %p184 = pneg %p71
      $region14: #{bottleneck_forward.6} parent=11 // pred_check_branch
        %186 = sbr.rel (%p184) target = $region16
      $region15: #{bottleneck_forward.6} parent=11 // pred_region
        _
      $region16: #{bottleneck_forward.6} parent=11 // pred_fallthru
        _
      // Predicated region
      $region17: #{bottleneck_forward.6} parent=11 // pred_check
        %p187 = pneg %p92
      $region18: #{bottleneck_forward.6} parent=11 // pred_check_branch
        %189 = sbr.rel (%p187) target = $region20
      $region19: #{bottleneck_forward.6} parent=11 // pred_region
        _
      $region20: #{bottleneck_forward.6} parent=11 // pred_fallthru
        _
      // Predicated region
      $region21: #{bottleneck_forward.6} parent=11 // pred_check
        %p190 = pneg %p113
      $region22: #{bottleneck_forward.6} parent=11 // pred_check_branch
        %192 = sbr.rel (%p190) target = $region24
      $region23: #{bottleneck_forward.6} parent=11 // pred_region
        _
      $region24: #{bottleneck_forward.6} parent=11 // pred_fallthru
        _
    $region12: #{bottleneck_forward.6} parent=5 // pred_fallthru
      _
    %p193 = scmp.lt.s32.totalorder %s12, 2
    // Predicated region
    $region25: #{bottleneck_forward.6} parent=5 // pred_check
      %p194 = pneg %p193
    $region26: #{bottleneck_forward.6} parent=5 // pred_check_branch
      %196 = sbr.rel (%p194) target = $region28
    $region27: #{bottleneck_forward.6} parent=5 // pred_region
      // Predicated region
      $region29: #{bottleneck_forward.6} parent=27 // pred_check
        %p197 = pneg %p44
      $region30: #{bottleneck_forward.6} parent=27 // pred_check_branch
        %199 = sbr.rel (%p197) target = $region32
      $region31: #{bottleneck_forward.6} parent=27 // pred_region
        %p200 = scmp.lt.s32.totalorder %s19, 1
        %s201 = scalar_select %p200, %s19, 1
        %s202 = smul.addr %s201, 72
        %s203 = smul.addr %s202, 4
        %s204 = scalar_lea.vmem %s0, %s203
      $region32: #{bottleneck_forward.6} parent=27 // pred_fallthru
        _
    $region28: #{bottleneck_forward.6} parent=5 // pred_fallthru
      _
    %p205 = scmp.le.s32.totalorder 1, %s12
    %p206 = scmp.lt.s32.totalorder %s12, 3
    %p207 = pnand %p205, %p206
    %p208 = pneg %p207
    // Predicated region
    $region33: #{bottleneck_forward.6} parent=5 // pred_check
      _
    $region34: #{bottleneck_forward.6} parent=5 // pred_check_branch
      %210 = sbr.rel (%p207) target = $region36
    $region35: #{bottleneck_forward.6} parent=5 // pred_region
      %s211 = ssub.s32 %s12, 1
      %p212 = scmp.lt.s32.totalorder %s21, 1
      %s213 = scalar_select %p212, %s21, 1
      %s214 = smul.addr %s213, 72
      %s215 = smul.addr %s214, 4
      %s216 = scalar_lea.vmem %s0, %s215
      %p217 = pneg %p50
      %p218 = pneg %p47
      %p219 = pneg %p71
      %p220 = pneg %p68
      %p221 = pneg %p92
      %p222 = pneg %p89
      %p223 = pneg %p113
      %p224 = pneg %p110
      %p225 = pneg %p141
      %p226 = pneg %p138
      %s227 = sadd.s32 %s21, %s22
      %s228 = smul.u32 8, %s227
      %p229 = scmp.lt.s32.totalorder %s228, 15
      %s230 = scalar_select %p229, %s228, 15
      %s231 = smul.addr %s230, 4
      %s232 = scalar_lea.vmem %s4, %s231
      %p233 = pneg %p169
      %p234 = pneg %p166
      %s235 = sadd.s32 %s21, %s22
      %p236 = scmp.lt.s32.totalorder %s235, 1
      %s237 = scalar_select %p236, %s235, 1
      %s238 = smul.addr %s237, 8
      %s239 = scalar_lea.vmem %s5, %s238
      %p240 = scmp.lt.s32.totalorder %s21, 1
      %s241 = scalar_select %p240, %s21, 1
      %s242 = smul.addr %s241, 72
      %s243 = smul.addr %s242, 4
      %s244 = scalar_lea.vmem %s0, %s243
      %s245 = sadd.s32 %s21, %s22
      %s246 = smul.u32 8, %s245
      %p247 = scmp.lt.s32.totalorder %s246, 15
      %s248 = scalar_select %p247, %s246, 15
      %s249 = smul.addr %s248, 4
      %s250 = scalar_lea.vmem %s4, %s249
      %s251 = sadd.s32 %s21, %s22
      %s252 = smul.u32 8, %s251
      %s253 = sadd.s32 %s21, %s22
      %p254 = scmp.lt.s32.totalorder %s253, 1
      %s255 = scalar_select %p254, %s253, 1
      %s256 = smul.addr %s255, 8
      %s257 = scalar_lea.vmem %s5, %s256
      %s258 = sadd.s32 %s21, %s22
      %s260 = smul.u32 %s22, 8
      %v261 = vld [vmem:[%s1] sm:$0x1]
      %v262 = vld [vmem:[%s2] sm:$0x1]
      %v263 = vstv %s260
      %v264 = vadd.s32 %v263, 1
      %v265 = vadd.s32 %v263, 2
      %v266 = vadd.s32 %v263, 3
      %v267 = vadd.s32 %v263, 4
      %v268 = vadd.s32 %v263, 5
      %v269 = vadd.s32 %v263, 6
      %v270 = vadd.s32 %v263, 7
      %v271 = vlaneseq
      %v272 = vshrl.u32 %v271, 7
      %s273 = smul.u32 %s260, 8
      %s274 = smul.addr %s273, 4
      %s275 = scalar_lea.vmem %s244, %s274
      %v276 = vld [vmem:[%s275] sm:$0xf]
      %v277 = vld [vmem:[%s275 + $0x20] sm:$0xf]
      %v278 = vld [vmem:[%s275 + $0x40] sm:$0xf]
      %v279 = vld [vmem:[%s275 + $0x60] sm:$0xf]
      %v280 = vld [vmem:[%s275 + $0x80] sm:$0xf]
      %v281 = vld [vmem:[%s275 + $0xa0] sm:$0xf]
      %v282 = vld [vmem:[%s275 + $0xc0] sm:$0xf]
      %v283 = vld [vmem:[%s275 + $0xe0] sm:$0xf]
      %v284 = vunpack.c.l.bf16 %v276
      %v285 = vunpack.c.l.bf16 %v277
      %v286 = vunpack.c.l.bf16 %v278
      %v287 = vunpack.c.l.bf16 %v279
      %v288 = vunpack.c.l.bf16 %v280
      %v289 = vunpack.c.l.bf16 %v281
      %v290 = vunpack.c.l.bf16 %v282
      %v291 = vunpack.c.l.bf16 %v283
      %v293 = vlaneseq
      %v294 = vshrl.u32 %v293, 7
      %v295 = vsub.s32 0, %v294
      %v296 = vrot.slane %v261, %v295
      %v298 = vmul.f32 %v284, %v296
      %v299 = vmul.f32 %v285, %v296
      %v300 = vmul.f32 %v286, %v296
      %v301 = vmul.f32 %v287, %v296
      %v302 = vmul.f32 %v288, %v296
      %v303 = vmul.f32 %v289, %v296
      %v304 = vmul.f32 %v290, %v296
      %v305 = vmul.f32 %v291, %v296
      %v307 = vlaneseq
      %v308 = vshrl.u32 %v307, 7
      %v309 = vsub.s32 0, %v308
      %v310 = vrot.slane %v262, %v309
      %v312 = vadd.f32 %v298, %v310
      %v313 = vadd.f32 %v299, %v310
      %v314 = vadd.f32 %v300, %v310
      %v315 = vadd.f32 %v301, %v310
      %v316 = vadd.f32 %v302, %v310
      %v317 = vadd.f32 %v303, %v310
      %v318 = vadd.f32 %v304, %v310
      %v319 = vadd.f32 %v305, %v310
      %v320 = vmax.f32 %v312, 0.0
      %v321 = vmax.f32 %v313, 0.0
      %v322 = vmax.f32 %v314, 0.0
      %v323 = vmax.f32 %v315, 0.0
      %v324 = vmax.f32 %v316, 0.0
      %v325 = vmax.f32 %v317, 0.0
      %v326 = vmax.f32 %v318, 0.0
      %v327 = vmax.f32 %v319, 0.0
      %v328 = vmul.u32 %v263, 2
      %v329 = vmul.u32 %v264, 2
      %v330 = vmul.u32 %v265, 2
      %v331 = vmul.u32 %v266, 2
      %v332 = vmul.u32 %v267, 2
      %v333 = vmul.u32 %v268, 2
      %v334 = vmul.u32 %v269, 2
      %v335 = vmul.u32 %v270, 2
      %v336 = vmul.u32 %v272, 2
      %vm337 = vcmp.ge.s32.totalorder %v328, 1
      %vm338 = vcmp.ge.s32.totalorder %v329, 1
      %vm339 = vcmp.ge.s32.totalorder %v330, 1
      %vm340 = vcmp.ge.s32.totalorder %v331, 1
      %vm341 = vcmp.ge.s32.totalorder %v332, 1
      %vm342 = vcmp.ge.s32.totalorder %v333, 1
      %vm343 = vcmp.ge.s32.totalorder %v334, 1
      %vm344 = vcmp.ge.s32.totalorder %v335, 1
      %vm345 = vcmp.le.s32.totalorder %v328, 16
      %vm346 = vcmp.le.s32.totalorder %v329, 16
      %vm347 = vcmp.le.s32.totalorder %v330, 16
      %vm348 = vcmp.le.s32.totalorder %v331, 16
      %vm349 = vcmp.le.s32.totalorder %v332, 16
      %vm350 = vcmp.le.s32.totalorder %v333, 16
      %vm351 = vcmp.le.s32.totalorder %v334, 16
      %vm352 = vcmp.le.s32.totalorder %v335, 16
      %vm353 = vmand %vm337, %vm345
      %vm354 = vmand %vm338, %vm346
      %vm355 = vmand %vm339, %vm347
      %vm356 = vmand %vm340, %vm348
      %vm357 = vmand %vm341, %vm349
      %vm358 = vmand %vm342, %vm350
      %vm359 = vmand %vm343, %vm351
      %vm360 = vmand %vm344, %vm352
      %vm361 = vcmp.ge.s32.totalorder %v336, 1
      %vm362 = vmand %vm353, %vm361
      %vm363 = vmand %vm354, %vm361
      %vm364 = vmand %vm355, %vm361
      %vm365 = vmand %vm356, %vm361
      %vm366 = vmand %vm357, %vm361
      %vm367 = vmand %vm358, %vm361
      %vm368 = vmand %vm359, %vm361
      %vm369 = vmand %vm360, %vm361
      %vm370 = vcmp.le.s32.totalorder %v336, 16
      %vm371 = vmand %vm362, %vm370
      %vm372 = vmand %vm363, %vm370
      %vm373 = vmand %vm364, %vm370
      %vm374 = vmand %vm365, %vm370
      %vm375 = vmand %vm366, %vm370
      %vm376 = vmand %vm367, %vm370
      %vm377 = vmand %vm368, %vm370
      %vm378 = vmand %vm369, %vm370
      %v379 = vsel %vm371, 1, 0
      %v380 = vsel %vm372, 1, 0
      %v381 = vsel %vm373, 1, 0
      %v382 = vsel %vm374, 1, 0
      %v383 = vsel %vm375, 1, 0
      %v384 = vsel %vm376, 1, 0
      %v385 = vsel %vm377, 1, 0
      %v386 = vsel %vm378, 1, 0
      %vm387 = vcmp.eq.s32.totalorder %v379, 1
      %vm388 = vcmp.eq.s32.totalorder %v380, 1
      %vm389 = vcmp.eq.s32.totalorder %v381, 1
      %vm390 = vcmp.eq.s32.totalorder %v382, 1
      %vm391 = vcmp.eq.s32.totalorder %v383, 1
      %vm392 = vcmp.eq.s32.totalorder %v384, 1
      %vm393 = vcmp.eq.s32.totalorder %v385, 1
      %vm394 = vcmp.eq.s32.totalorder %v386, 1
      %v395 = vsel %vm387, %v320, 0.0
      %v396 = vsel %vm388, %v321, 0.0
      %v397 = vsel %vm389, %v322, 0.0
      %v398 = vsel %vm390, %v323, 0.0
      %v399 = vsel %vm391, %v324, 0.0
      %v400 = vsel %vm392, %v325, 0.0
      %v401 = vsel %vm393, %v326, 0.0
      %v402 = vsel %vm394, %v327, 0.0
      %v403 = vpack.c.bf16 %v395, %v395
      %v404 = vpack.c.bf16 %v396, %v396
      %v405 = vpack.c.bf16 %v397, %v397
      %v406 = vpack.c.bf16 %v398, %v398
      %v407 = vpack.c.bf16 %v399, %v399
      %v408 = vpack.c.bf16 %v400, %v400
      %v409 = vpack.c.bf16 %v401, %v401
      %v410 = vpack.c.bf16 %v402, %v402
      %v411 = vld [vmem:[%s3] sm:$0xf]
      %v412 = vld [vmem:[%s3 + $0x4] sm:$0xf]
      %v413 = vld [vmem:[%s3 + $0x8] sm:$0xf]
      %v414 = vld [vmem:[%s3 + $0xc] sm:$0xf]
      %v415 = vld [vmem:[%s3 + $0x10] sm:$0xf]
      %v416 = vld [vmem:[%s3 + $0x14] sm:$0xf]
      %v417 = vld [vmem:[%s3 + $0x18] sm:$0xf]
      %v418 = vld [vmem:[%s3 + $0x1c] sm:$0xf]
      %v419 = vld [vmem:[%s3 + $0x20] sm:$0xf]
      %v420 = vld [vmem:[%s3 + $0x24] sm:$0xf]
      %v421 = vld [vmem:[%s3 + $0x28] sm:$0xf]
      %v422 = vld [vmem:[%s3 + $0x2c] sm:$0xf]
      %v423 = vld [vmem:[%s3 + $0x30] sm:$0xf]
      %v424 = vld [vmem:[%s3 + $0x34] sm:$0xf]
      %v425 = vld [vmem:[%s3 + $0x38] sm:$0xf]
      %v426 = vld [vmem:[%s3 + $0x3c] sm:$0xf]
      %v427 = vld [vmem:[%s275 + $0x4] sm:$0xf]
      %v428 = vld [vmem:[%s275 + $0x24] sm:$0xf]
      %v429 = vld [vmem:[%s275 + $0x44] sm:$0xf]
      %v430 = vld [vmem:[%s275 + $0x64] sm:$0xf]
      %v431 = vld [vmem:[%s275 + $0x84] sm:$0xf]
      %v432 = vld [vmem:[%s275 + $0xa4] sm:$0xf]
      %v433 = vld [vmem:[%s275 + $0xc4] sm:$0xf]
      %v434 = vld [vmem:[%s275 + $0xe4] sm:$0xf]
      %v435 = vunpack.c.l.bf16 %v427
      %v436 = vunpack.c.l.bf16 %v428
      %v437 = vunpack.c.l.bf16 %v429
      %v438 = vunpack.c.l.bf16 %v430
      %v439 = vunpack.c.l.bf16 %v431
      %v440 = vunpack.c.l.bf16 %v432
      %v441 = vunpack.c.l.bf16 %v433
      %v442 = vunpack.c.l.bf16 %v434
      %v443 = vmul.f32 %v435, %v296
      %v444 = vmul.f32 %v436, %v296
      %v445 = vmul.f32 %v437, %v296
      %v446 = vmul.f32 %v438, %v296
      %v447 = vmul.f32 %v439, %v296
      %v448 = vmul.f32 %v440, %v296
      %v449 = vmul.f32 %v441, %v296
      %v450 = vmul.f32 %v442, %v296
      %v451 = vadd.f32 %v443, %v310
      %v452 = vadd.f32 %v444, %v310
      %v453 = vadd.f32 %v445, %v310
      %v454 = vadd.f32 %v446, %v310
      %v455 = vadd.f32 %v447, %v310
      %v456 = vadd.f32 %v448, %v310
      %v457 = vadd.f32 %v449, %v310
      %v458 = vadd.f32 %v450, %v310
      %v459 = vmax.f32 %v451, 0.0
      %v460 = vmax.f32 %v452, 0.0
      %v461 = vmax.f32 %v453, 0.0
      %v462 = vmax.f32 %v454, 0.0
      %v463 = vmax.f32 %v455, 0.0
      %v464 = vmax.f32 %v456, 0.0
      %v465 = vmax.f32 %v457, 0.0
      %v466 = vmax.f32 %v458, 0.0
      %v467 = vadd.s32 %v336, 1
      %vm468 = vcmp.ge.s32.totalorder %v467, 1
      %vm469 = vmand %vm353, %vm468
      %vm470 = vmand %vm354, %vm468
      %vm471 = vmand %vm355, %vm468
      %vm472 = vmand %vm356, %vm468
      %vm473 = vmand %vm357, %vm468
      %vm474 = vmand %vm358, %vm468
      %vm475 = vmand %vm359, %vm468
      %vm476 = vmand %vm360, %vm468
      %vm477 = vcmp.le.s32.totalorder %v467, 16
      %vm478 = vmand %vm469, %vm477
      %vm479 = vmand %vm470, %vm477
      %vm480 = vmand %vm471, %vm477
      %vm481 = vmand %vm472, %vm477
      %vm482 = vmand %vm473, %vm477
      %vm483 = vmand %vm474, %vm477
      %vm484 = vmand %vm475, %vm477
      %vm485 = vmand %vm476, %vm477
      %v486 = vsel %vm478, 1, 0
      %v487 = vsel %vm479, 1, 0
      %v488 = vsel %vm480, 1, 0
      %v489 = vsel %vm481, 1, 0
      %v490 = vsel %vm482, 1, 0
      %v491 = vsel %vm483, 1, 0
      %v492 = vsel %vm484, 1, 0
      %v493 = vsel %vm485, 1, 0
      %vm494 = vcmp.eq.s32.totalorder %v486, 1
      %vm495 = vcmp.eq.s32.totalorder %v487, 1
      %vm496 = vcmp.eq.s32.totalorder %v488, 1
      %vm497 = vcmp.eq.s32.totalorder %v489, 1
      %vm498 = vcmp.eq.s32.totalorder %v490, 1
      %vm499 = vcmp.eq.s32.totalorder %v491, 1
      %vm500 = vcmp.eq.s32.totalorder %v492, 1
      %vm501 = vcmp.eq.s32.totalorder %v493, 1
      %v502 = vsel %vm494, %v459, 0.0
      %v503 = vsel %vm495, %v460, 0.0
      %v504 = vsel %vm496, %v461, 0.0
      %v505 = vsel %vm497, %v462, 0.0
      %v506 = vsel %vm498, %v463, 0.0
      %v507 = vsel %vm499, %v464, 0.0
      %v508 = vsel %vm500, %v465, 0.0
      %v509 = vsel %vm501, %v466, 0.0
      %v510 = vpack.c.bf16 %v502, %v502
      %v511 = vpack.c.bf16 %v503, %v503
      %v512 = vpack.c.bf16 %v504, %v504
      %v513 = vpack.c.bf16 %v505, %v505
      %v514 = vpack.c.bf16 %v506, %v506
      %v515 = vpack.c.bf16 %v507, %v507
      %v516 = vpack.c.bf16 %v508, %v508
      %v517 = vpack.c.bf16 %v509, %v509
      %s518 = scalar_lea.vmem %s3, 64
      %v519 = vld [vmem:[%s518] sm:$0xf]
      %v520 = vld [vmem:[%s518 + $0x4] sm:$0xf]
      %v521 = vld [vmem:[%s518 + $0x8] sm:$0xf]
      %v522 = vld [vmem:[%s518 + $0xc] sm:$0xf]
      %v523 = vld [vmem:[%s518 + $0x10] sm:$0xf]
      %v524 = vld [vmem:[%s518 + $0x14] sm:$0xf]
      %v525 = vld [vmem:[%s518 + $0x18] sm:$0xf]
      %v526 = vld [vmem:[%s518 + $0x1c] sm:$0xf]
      %v527 = vld [vmem:[%s518 + $0x20] sm:$0xf]
      %v528 = vld [vmem:[%s518 + $0x24] sm:$0xf]
      %v529 = vld [vmem:[%s518 + $0x28] sm:$0xf]
      %v530 = vld [vmem:[%s518 + $0x2c] sm:$0xf]
      %v531 = vld [vmem:[%s518 + $0x30] sm:$0xf]
      %v532 = vld [vmem:[%s518 + $0x34] sm:$0xf]
      %v533 = vld [vmem:[%s518 + $0x38] sm:$0xf]
      %v534 = vld [vmem:[%s518 + $0x3c] sm:$0xf]
      %v543 = vunpack.c.l.b16 %v510
      %v544 = vunpack.c.l.b16 %v511
      %v545 = vunpack.c.l.b16 %v512
      %v546 = vunpack.c.l.b16 %v513
      %v547 = vunpack.c.l.b16 %v514
      %v548 = vunpack.c.l.b16 %v515
      %v549 = vunpack.c.l.b16 %v516
      %v550 = vunpack.c.l.b16 %v517
      %v551 = vpack.c.b16 %v544, %v543
      %v552 = vpack.c.b16 %v546, %v545
      %v553 = vpack.c.b16 %v548, %v547
      %v554 = vpack.c.b16 %v550, %v549
      %v575 = vunpack.c.l.b16 %v519
      %v576 = vunpack.c.l.b16 %v520
      %v577 = vunpack.c.l.b16 %v521
      %v578 = vunpack.c.l.b16 %v522
      %v579 = vunpack.c.l.b16 %v523
      %v580 = vunpack.c.l.b16 %v524
      %v581 = vunpack.c.l.b16 %v525
      %v582 = vunpack.c.l.b16 %v526
      %v583 = vunpack.c.l.b16 %v527
      %v584 = vunpack.c.l.b16 %v528
      %v585 = vunpack.c.l.b16 %v529
      %v586 = vunpack.c.l.b16 %v530
      %v587 = vunpack.c.l.b16 %v531
      %v588 = vunpack.c.l.b16 %v532
      %v589 = vunpack.c.l.b16 %v533
      %v590 = vunpack.c.l.b16 %v534
      %v591 = vpack.c.b16 %v576, %v575
      %v592 = vpack.c.b16 %v578, %v577
      %v593 = vpack.c.b16 %v580, %v579
      %v594 = vpack.c.b16 %v582, %v581
      %v595 = vpack.c.b16 %v584, %v583
      %v596 = vpack.c.b16 %v586, %v585
      %v597 = vpack.c.b16 %v588, %v587
      %v598 = vpack.c.b16 %v590, %v589
      %607 = vmatprep.subr.bf16.mxu0 0
      %608 = vmatpush1.bf16.msra.mxu0 %v591
      %609 = vmatprep.subr.bf16.mxu0 0
      %610 = vmatpush1.bf16.msra.mxu0 %v592
      %611 = vmatprep.subr.bf16.mxu0 0
      %612 = vmatpush1.bf16.msra.mxu0 %v593
      %613 = vmatprep.subr.bf16.mxu0 0
      %614 = vmatpush1.bf16.msra.mxu0 %v594
      %615 = vmatprep.subr.bf16.mxu0 0
      %616 = vmatpush1.bf16.msra.mxu0 %v595
      %617 = vmatprep.subr.bf16.mxu0 0
      %618 = vmatpush1.bf16.msra.mxu0 %v596
      %619 = vmatprep.subr.bf16.mxu0 0
      %620 = vmatpush1.bf16.msra.mxu0 %v597
      %621 = vmatprep.subr.bf16.mxu0 0
      %622 = vmatpush1.bf16.msra.mxu0 %v598
      %623 = vmatprep.subr.bf16.mxu0 0
      %624 = vmatpush1.bf16.msra.mxu0 0
      %625 = vmatprep.subr.bf16.mxu0 0
      %626 = vmatpush1.bf16.msra.mxu0 0
      %627 = vmatprep.subr.bf16.mxu0 0
      %628 = vmatpush1.bf16.msra.mxu0 0
      %629 = vmatprep.subr.bf16.mxu0 0
      %630 = vmatpush1.bf16.msra.mxu0 0
      %631 = vmatprep.subr.bf16.mxu0 0
      %632 = vmatpush1.bf16.msra.mxu0 0
      %633 = vmatprep.subr.bf16.mxu0 0
      %634 = vmatpush1.bf16.msra.mxu0 0
      %635 = vmatprep.subr.bf16.mxu0 0
      %636 = vmatpush1.bf16.msra.mxu0 0
      %637 = vmatprep.subr.bf16.mxu0 0
      %638 = vmatpush1.bf16.msra.mxu0 0
      %639 = vmatprep.mubr.bf16.mxu0 0
      %640 = vmatmul.mubr.bf16.gmra.mrb[0].mxu0 %v551
      %v641 = vpop.f32.mrb[0].mxu0
      %v642 = vadd.f32 0.0, %v641
      %v643 = vpop.f32.mrb[0].mxu0
      %v644 = vpop.f32.mrb[0].mxu0
      %v645 = vadd.f32 0.0, %v644
      %v646 = vpop.f32.mrb[0].mxu0
      %647 = vmatprep.mubr.bf16.mxu0 0
      %648 = vmatmul.mubr.bf16.gmra.mrb[0].mxu0 %v552
      %v649 = vpop.f32.mrb[0].mxu0
      %v650 = vadd.f32 0.0, %v649
      %v651 = vpop.f32.mrb[0].mxu0
      %v652 = vpop.f32.mrb[0].mxu0
      %v653 = vadd.f32 0.0, %v652
      %v654 = vpop.f32.mrb[0].mxu0
      %655 = vmatprep.mubr.bf16.mxu0 0
      %656 = vmatmul.mubr.bf16.gmra.mrb[0].mxu0 %v553
      %v657 = vpop.f32.mrb[0].mxu0
      %v658 = vadd.f32 0.0, %v657
      %v659 = vpop.f32.mrb[0].mxu0
      %v660 = vpop.f32.mrb[0].mxu0
      %v661 = vadd.f32 0.0, %v660
      %v662 = vpop.f32.mrb[0].mxu0
      %663 = vmatprep.mubr.bf16.mxu0 0
      %664 = vmatmul.mubr.bf16.gmra.mrb[0].mxu0 %v554
      %v665 = vpop.f32.mrb[0].mxu0
      %v666 = vadd.f32 0.0, %v665
      %v667 = vpop.f32.mrb[0].mxu0
      %v668 = vpop.f32.mrb[0].mxu0
      %v669 = vadd.f32 0.0, %v668
      %v670 = vpop.f32.mrb[0].mxu0
      %671 = vdwg.mxu0
      %v680 = vunpack.c.l.b16 %v403
      %v681 = vunpack.c.l.b16 %v404
      %v682 = vunpack.c.l.b16 %v405
      %v683 = vunpack.c.l.b16 %v406
      %v684 = vunpack.c.l.b16 %v407
      %v685 = vunpack.c.l.b16 %v408
      %v686 = vunpack.c.l.b16 %v409
      %v687 = vunpack.c.l.b16 %v410
      %v688 = vpack.c.b16 %v681, %v680
      %v689 = vpack.c.b16 %v683, %v682
      %v690 = vpack.c.b16 %v685, %v684
      %v691 = vpack.c.b16 %v687, %v686
      %v712 = vunpack.c.l.b16 %v411
      %v713 = vunpack.c.l.b16 %v412
      %v714 = vunpack.c.l.b16 %v413
      %v715 = vunpack.c.l.b16 %v414
      %v716 = vunpack.c.l.b16 %v415
      %v717 = vunpack.c.l.b16 %v416
      %v718 = vunpack.c.l.b16 %v417
      %v719 = vunpack.c.l.b16 %v418
      %v720 = vunpack.c.l.b16 %v419
      %v721 = vunpack.c.l.b16 %v420
      %v722 = vunpack.c.l.b16 %v421
      %v723 = vunpack.c.l.b16 %v422
      %v724 = vunpack.c.l.b16 %v423
      %v725 = vunpack.c.l.b16 %v424
      %v726 = vunpack.c.l.b16 %v425
      %v727 = vunpack.c.l.b16 %v426
      %v728 = vpack.c.b16 %v713, %v712
      %v729 = vpack.c.b16 %v715, %v714
      %v730 = vpack.c.b16 %v717, %v716
      %v731 = vpack.c.b16 %v719, %v718
      %v732 = vpack.c.b16 %v721, %v720
      %v733 = vpack.c.b16 %v723, %v722
      %v734 = vpack.c.b16 %v725, %v724
      %v735 = vpack.c.b16 %v727, %v726
      %744 = vmatprep.subr.bf16.mxu0 0
      %745 = vmatpush1.bf16.msra.mxu0 %v728
      %746 = vmatprep.subr.bf16.mxu0 0
      %747 = vmatpush1.bf16.msra.mxu0 %v729
      %748 = vmatprep.subr.bf16.mxu0 0
      %749 = vmatpush1.bf16.msra.mxu0 %v730
      %750 = vmatprep.subr.bf16.mxu0 0
      %751 = vmatpush1.bf16.msra.mxu0 %v731
      %752 = vmatprep.subr.bf16.mxu0 0
      %753 = vmatpush1.bf16.msra.mxu0 %v732
      %754 = vmatprep.subr.bf16.mxu0 0
      %755 = vmatpush1.bf16.msra.mxu0 %v733
      %756 = vmatprep.subr.bf16.mxu0 0
      %757 = vmatpush1.bf16.msra.mxu0 %v734
      %758 = vmatprep.subr.bf16.mxu0 0
      %759 = vmatpush1.bf16.msra.mxu0 %v735
      %760 = vmatprep.subr.bf16.mxu0 0
      %761 = vmatpush1.bf16.msra.mxu0 0
      %762 = vmatprep.subr.bf16.mxu0 0
      %763 = vmatpush1.bf16.msra.mxu0 0
      %764 = vmatprep.subr.bf16.mxu0 0
      %765 = vmatpush1.bf16.msra.mxu0 0
      %766 = vmatprep.subr.bf16.mxu0 0
      %767 = vmatpush1.bf16.msra.mxu0 0
      %768 = vmatprep.subr.bf16.mxu0 0
      %769 = vmatpush1.bf16.msra.mxu0 0
      %770 = vmatprep.subr.bf16.mxu0 0
      %771 = vmatpush1.bf16.msra.mxu0 0
      %772 = vmatprep.subr.bf16.mxu0 0
      %773 = vmatpush1.bf16.msra.mxu0 0
      %774 = vmatprep.subr.bf16.mxu0 0
      %775 = vmatpush1.bf16.msra.mxu0 0
      %776 = vmatprep.mubr.bf16.mxu0 0
      %777 = vmatmul.mubr.bf16.gmra.mrb[0].mxu0 %v688
      %v778 = vpop.f32.mrb[0].mxu0
      %v779 = vadd.f32 %v642, %v778
      %v780 = vpop.f32.mrb[0].mxu0
      %v781 = vpop.f32.mrb[0].mxu0
      %v782 = vadd.f32 %v645, %v781
      %v783 = vpop.f32.mrb[0].mxu0
      %784 = vmatprep.mubr.bf16.mxu0 0
      %785 = vmatmul.mubr.bf16.gmra.mrb[0].mxu0 %v689
      %v786 = vpop.f32.mrb[0].mxu0
      %v787 = vadd.f32 %v650, %v786
      %v788 = vpop.f32.mrb[0].mxu0
      %v789 = vpop.f32.mrb[0].mxu0
      %v790 = vadd.f32 %v653, %v789
      %v791 = vpop.f32.mrb[0].mxu0
      %792 = vmatprep.mubr.bf16.mxu0 0
      %793 = vmatmul.mubr.bf16.gmra.mrb[0].mxu0 %v690
      %v794 = vpop.f32.mrb[0].mxu0
      %v795 = vadd.f32 %v658, %v794
      %v796 = vpop.f32.mrb[0].mxu0
      %v797 = vpop.f32.mrb[0].mxu0
      %v798 = vadd.f32 %v661, %v797
      %v799 = vpop.f32.mrb[0].mxu0
      %800 = vmatprep.mubr.bf16.mxu0 0
      %801 = vmatmul.mubr.bf16.gmra.mrb[0].mxu0 %v691
      %v802 = vpop.f32.mrb[0].mxu0
      %v803 = vadd.f32 %v666, %v802
      %v804 = vpop.f32.mrb[0].mxu0
      %v805 = vpop.f32.mrb[0].mxu0
      %v806 = vadd.f32 %v669, %v805
      %v807 = vpop.f32.mrb[0].mxu0
      %808 = vdwg.mxu0
      %v809 = vld [vmem:[%s275] sm:$0xf]
      %v810 = vld [vmem:[%s275 + $0x10] sm:$0x1]
      %v811 = vld [vmem:[%s275 + $0x20] sm:$0xf]
      %v812 = vld [vmem:[%s275 + $0x30] sm:$0x1]
      %v813 = vld [vmem:[%s275 + $0x40] sm:$0xf]
      %v814 = vld [vmem:[%s275 + $0x50] sm:$0x1]
      %v815 = vld [vmem:[%s275 + $0x60] sm:$0xf]
      %v816 = vld [vmem:[%s275 + $0x70] sm:$0x1]
      %v817 = vld [vmem:[%s275 + $0x80] sm:$0xf]
      %v818 = vld [vmem:[%s275 + $0x90] sm:$0x1]
      %v819 = vld [vmem:[%s275 + $0xa0] sm:$0xf]
      %v820 = vld [vmem:[%s275 + $0xb0] sm:$0x1]
      %v821 = vld [vmem:[%s275 + $0xc0] sm:$0xf]
      %v822 = vld [vmem:[%s275 + $0xd0] sm:$0x1]
      %v823 = vld [vmem:[%s275 + $0xe0] sm:$0xf]
      %v824 = vld [vmem:[%s275 + $0xf0] sm:$0x1]
      %v825 = vunpack.c.l.bf16 %v809
      %v826 = vunpack.c.l.bf16 %v810
      %v827 = vunpack.c.l.bf16 %v811
      %v828 = vunpack.c.l.bf16 %v812
      %v829 = vunpack.c.l.bf16 %v813
      %v830 = vunpack.c.l.bf16 %v814
      %v831 = vunpack.c.l.bf16 %v815
      %v832 = vunpack.c.l.bf16 %v816
      %v833 = vunpack.c.l.bf16 %v817
      %v834 = vunpack.c.l.bf16 %v818
      %v835 = vunpack.c.l.bf16 %v819
      %v836 = vunpack.c.l.bf16 %v820
      %v837 = vunpack.c.l.bf16 %v821
      %v838 = vunpack.c.l.bf16 %v822
      %v839 = vunpack.c.l.bf16 %v823
      %v840 = vunpack.c.l.bf16 %v824
      %v841 = vmul.f32 %v825, %v296
      %v842 = vmul.f32 %v826, %v296
      %v843 = vmul.f32 %v827, %v296
      %v844 = vmul.f32 %v828, %v296
      %v845 = vmul.f32 %v829, %v296
      %v846 = vmul.f32 %v830, %v296
      %v847 = vmul.f32 %v831, %v296
      %v848 = vmul.f32 %v832, %v296
      %v849 = vmul.f32 %v833, %v296
      %v850 = vmul.f32 %v834, %v296
      %v851 = vmul.f32 %v835, %v296
      %v852 = vmul.f32 %v836, %v296
      %v853 = vmul.f32 %v837, %v296
      %v854 = vmul.f32 %v838, %v296
      %v855 = vmul.f32 %v839, %v296
      %v856 = vmul.f32 %v840, %v296
      %v857 = vadd.f32 %v841, %v310
      %v858 = vadd.f32 %v842, %v310
      %v859 = vadd.f32 %v843, %v310
      %v860 = vadd.f32 %v844, %v310
      %v861 = vadd.f32 %v845, %v310
      %v862 = vadd.f32 %v846, %v310
      %v863 = vadd.f32 %v847, %v310
      %v864 = vadd.f32 %v848, %v310
      %v865 = vadd.f32 %v849, %v310
      %v866 = vadd.f32 %v850, %v310
      %v867 = vadd.f32 %v851, %v310
      %v868 = vadd.f32 %v852, %v310
      %v869 = vadd.f32 %v853, %v310
      %v870 = vadd.f32 %v854, %v310
      %v871 = vadd.f32 %v855, %v310
      %v872 = vadd.f32 %v856, %v310
      %v873 = vmax.f32 %v857, 0.0
      %v874 = vmax.f32 %v858, 0.0
      %v875 = vmax.f32 %v859, 0.0
      %v876 = vmax.f32 %v860, 0.0
      %v877 = vmax.f32 %v861, 0.0
      %v878 = vmax.f32 %v862, 0.0
      %v879 = vmax.f32 %v863, 0.0
      %v880 = vmax.f32 %v864, 0.0
      %v881 = vmax.f32 %v865, 0.0
      %v882 = vmax.f32 %v866, 0.0
      %v883 = vmax.f32 %v867, 0.0
      %v884 = vmax.f32 %v868, 0.0
      %v885 = vmax.f32 %v869, 0.0
      %v886 = vmax.f32 %v870, 0.0
      %v887 = vmax.f32 %v871, 0.0
      %v888 = vmax.f32 %v872, 0.0
      %v889 = vadd.s32 %v336, 2
      %vm890 = vcmp.ge.s32.totalorder %v889, 1
      %vm891 = vmand %vm353, %vm890
      %vm892 = vmand %vm354, %vm890
      %vm893 = vmand %vm355, %vm890
      %vm894 = vmand %vm356, %vm890
      %vm895 = vmand %vm357, %vm890
      %vm896 = vmand %vm358, %vm890
      %vm897 = vmand %vm359, %vm890
      %vm898 = vmand %vm360, %vm890
      %vm899 = vcmp.le.s32.totalorder %v889, 16
      %vm900 = vmand %vm891, %vm899
      %vm901 = vmand %vm892, %vm899
      %vm902 = vmand %vm893, %vm899
      %vm903 = vmand %vm894, %vm899
      %vm904 = vmand %vm895, %vm899
      %vm905 = vmand %vm896, %vm899
      %vm906 = vmand %vm897, %vm899
      %vm907 = vmand %vm898, %vm899
      %v908 = vsel %vm900, 1, 0
      %v909 = vsel %vm901, 1, 0
      %v910 = vsel %vm902, 1, 0
      %v911 = vsel %vm903, 1, 0
      %v912 = vsel %vm904, 1, 0
      %v913 = vsel %vm905, 1, 0
      %v914 = vsel %vm906, 1, 0
      %v915 = vsel %vm907, 1, 0
      %vm916 = vcmp.eq.s32.totalorder %v908, 1
      %vm917 = vcmp.eq.s32.totalorder %v909, 1
      %vm918 = vcmp.eq.s32.totalorder %v910, 1
      %vm919 = vcmp.eq.s32.totalorder %v911, 1
      %vm920 = vcmp.eq.s32.totalorder %v912, 1
      %vm921 = vcmp.eq.s32.totalorder %v913, 1
      %vm922 = vcmp.eq.s32.totalorder %v914, 1
      %vm923 = vcmp.eq.s32.totalorder %v915, 1
      %vm940 = vcmask 1046528
      %v941 = vrot.slane %v873, 1
      %v942 = vrot.slane %v874, 1
      %v943 = vsel %vm940, %v941, %v942
      %v944 = vrot.slane %v875, 1
      %v945 = vrot.slane %v876, 1
      %v946 = vsel %vm940, %v944, %v945
      %v947 = vrot.slane %v877, 1
      %v948 = vrot.slane %v878, 1
      %v949 = vsel %vm940, %v947, %v948
      %v950 = vrot.slane %v879, 1
      %v951 = vrot.slane %v880, 1
      %v952 = vsel %vm940, %v950, %v951
      %v953 = vrot.slane %v881, 1
      %v954 = vrot.slane %v882, 1
      %v955 = vsel %vm940, %v953, %v954
      %v956 = vrot.slane %v883, 1
      %v957 = vrot.slane %v884, 1
      %v958 = vsel %vm940, %v956, %v957
      %v959 = vrot.slane %v885, 1
      %v960 = vrot.slane %v886, 1
      %v961 = vsel %vm940, %v959, %v960
      %v962 = vrot.slane %v887, 1
      %v963 = vrot.slane %v888, 1
      %v964 = vsel %vm940, %v962, %v963
      %v973 = vsel %vm916, %v943, 0.0
      %v974 = vsel %vm917, %v946, 0.0
      %v975 = vsel %vm918, %v949, 0.0
      %v976 = vsel %vm919, %v952, 0.0
      %v977 = vsel %vm920, %v955, 0.0
      %v978 = vsel %vm921, %v958, 0.0
      %v979 = vsel %vm922, %v961, 0.0
      %v980 = vsel %vm923, %v964, 0.0
      %v981 = vpack.c.bf16 %v973, %v973
      %v982 = vpack.c.bf16 %v974, %v974
      %v983 = vpack.c.bf16 %v975, %v975
      %v984 = vpack.c.bf16 %v976, %v976
      %v985 = vpack.c.bf16 %v977, %v977
      %v986 = vpack.c.bf16 %v978, %v978
      %v987 = vpack.c.bf16 %v979, %v979
      %v988 = vpack.c.bf16 %v980, %v980
      %s989 = scalar_lea.vmem %s3, 128
      %v990 = vld [vmem:[%s989] sm:$0xf]
      %v991 = vld [vmem:[%s989 + $0x4] sm:$0xf]
      %v992 = vld [vmem:[%s989 + $0x8] sm:$0xf]
      %v993 = vld [vmem:[%s989 + $0xc] sm:$0xf]
      %v994 = vld [vmem:[%s989 + $0x10] sm:$0xf]
      %v995 = vld [vmem:[%s989 + $0x14] sm:$0xf]
      %v996 = vld [vmem:[%s989 + $0x18] sm:$0xf]
      %v997 = vld [vmem:[%s989 + $0x1c] sm:$0xf]
      %v998 = vld [vmem:[%s989 + $0x20] sm:$0xf]
      %v999 = vld [vmem:[%s989 + $0x24] sm:$0xf]
      %v1000 = vld [vmem:[%s989 + $0x28] sm:$0xf]
      %v1001 = vld [vmem:[%s989 + $0x2c] sm:$0xf]
      %v1002 = vld [vmem:[%s989 + $0x30] sm:$0xf]
      %v1003 = vld [vmem:[%s989 + $0x34] sm:$0xf]
      %v1004 = vld [vmem:[%s989 + $0x38] sm:$0xf]
      %v1005 = vld [vmem:[%s989 + $0x3c] sm:$0xf]
      %v1014 = vunpack.c.l.b16 %v981
      %v1015 = vunpack.c.l.b16 %v982
      %v1016 = vunpack.c.l.b16 %v983
      %v1017 = vunpack.c.l.b16 %v984
      %v1018 = vunpack.c.l.b16 %v985
      %v1019 = vunpack.c.l.b16 %v986
      %v1020 = vunpack.c.l.b16 %v987
      %v1021 = vunpack.c.l.b16 %v988
      %v1022 = vpack.c.b16 %v1015, %v1014
      %v1023 = vpack.c.b16 %v1017, %v1016
      %v1024 = vpack.c.b16 %v1019, %v1018
      %v1025 = vpack.c.b16 %v1021, %v1020
      %v1046 = vunpack.c.l.b16 %v990
      %v1047 = vunpack.c.l.b16 %v991
      %v1048 = vunpack.c.l.b16 %v992
      %v1049 = vunpack.c.l.b16 %v993
      %v1050 = vunpack.c.l.b16 %v994
      %v1051 = vunpack.c.l.b16 %v995
      %v1052 = vunpack.c.l.b16 %v996
      %v1053 = vunpack.c.l.b16 %v997
      %v1054 = vunpack.c.l.b16 %v998
      %v1055 = vunpack.c.l.b16 %v999
      %v1056 = vunpack.c.l.b16 %v1000
      %v1057 = vunpack.c.l.b16 %v1001
      %v1058 = vunpack.c.l.b16 %v1002
      %v1059 = vunpack.c.l.b16 %v1003
      %v1060 = vunpack.c.l.b16 %v1004
      %v1061 = vunpack.c.l.b16 %v1005
      %v1062 = vpack.c.b16 %v1047, %v1046
      %v1063 = vpack.c.b16 %v1049, %v1048
      %v1064 = vpack.c.b16 %v1051, %v1050
      %v1065 = vpack.c.b16 %v1053, %v1052
      %v1066 = vpack.c.b16 %v1055, %v1054
      %v1067 = vpack.c.b16 %v1057, %v1056
      %v1068 = vpack.c.b16 %v1059, %v1058
      %v1069 = vpack.c.b16 %v1061, %v1060
      %1078 = vmatprep.subr.bf16.mxu0 0
      %1079 = vmatpush1.bf16.msra.mxu0 %v1062
      %1080 = vmatprep.subr.bf16.mxu0 0
      %1081 = vmatpush1.bf16.msra.mxu0 %v1063
      %1082 = vmatprep.subr.bf16.mxu0 0
      %1083 = vmatpush1.bf16.msra.mxu0 %v1064
      %1084 = vmatprep.subr.bf16.mxu0 0
      %1085 = vmatpush1.bf16.msra.mxu0 %v1065
      %1086 = vmatprep.subr.bf16.mxu0 0
      %1087 = vmatpush1.bf16.msra.mxu0 %v1066
      %1088 = vmatprep.subr.bf16.mxu0 0
      %1089 = vmatpush1.bf16.msra.mxu0 %v1067
      %1090 = vmatprep.subr.bf16.mxu0 0
      %1091 = vmatpush1.bf16.msra.mxu0 %v1068
      %1092 = vmatprep.subr.bf16.mxu0 0
      %1093 = vmatpush1.bf16.msra.mxu0 %v1069
      %1094 = vmatprep.subr.bf16.mxu0 0
      %1095 = vmatpush1.bf16.msra.mxu0 0
      %1096 = vmatprep.subr.bf16.mxu0 0
      %1097 = vmatpush1.bf16.msra.mxu0 0
      %1098 = vmatprep.subr.bf16.mxu0 0
      %1099 = vmatpush1.bf16.msra.mxu0 0
      %1100 = vmatprep.subr.bf16.mxu0 0
      %1101 = vmatpush1.bf16.msra.mxu0 0
      %1102 = vmatprep.subr.bf16.mxu0 0
      %1103 = vmatpush1.bf16.msra.mxu0 0
      %1104 = vmatprep.subr.bf16.mxu0 0
      %1105 = vmatpush1.bf16.msra.mxu0 0
      %1106 = vmatprep.subr.bf16.mxu0 0
      %1107 = vmatpush1.bf16.msra.mxu0 0
      %1108 = vmatprep.subr.bf16.mxu0 0
      %1109 = vmatpush1.bf16.msra.mxu0 0
      %1110 = vmatprep.mubr.bf16.mxu0 0
      %1111 = vmatmul.mubr.bf16.gmra.mrb[0].mxu0 %v1022
      %v1112 = vpop.f32.mrb[0].mxu0
      %v1113 = vadd.f32 0.0, %v1112
      %v1114 = vpop.f32.mrb[0].mxu0
      %v1115 = vpop.f32.mrb[0].mxu0
      %v1116 = vadd.f32 0.0, %v1115
      %v1117 = vpop.f32.mrb[0].mxu0
      %1118 = vmatprep.mubr.bf16.mxu0 0
      %1119 = vmatmul.mubr.bf16.gmra.mrb[0].mxu0 %v1023
      %v1120 = vpop.f32.mrb[0].mxu0
      %v1121 = vadd.f32 0.0, %v1120
      %v1122 = vpop.f32.mrb[0].mxu0
      %v1123 = vpop.f32.mrb[0].mxu0
      %v1124 = vadd.f32 0.0, %v1123
      %v1125 = vpop.f32.mrb[0].mxu0
      %1126 = vmatprep.mubr.bf16.mxu0 0
      %1127 = vmatmul.mubr.bf16.gmra.mrb[0].mxu0 %v1024
      %v1128 = vpop.f32.mrb[0].mxu0
      %v1129 = vadd.f32 0.0, %v1128
      %v1130 = vpop.f32.mrb[0].mxu0
      %v1131 = vpop.f32.mrb[0].mxu0
      %v1132 = vadd.f32 0.0, %v1131
      %v1133 = vpop.f32.mrb[0].mxu0
      %1134 = vmatprep.mubr.bf16.mxu0 0
      %1135 = vmatmul.mubr.bf16.gmra.mrb[0].mxu0 %v1025
      %v1136 = vpop.f32.mrb[0].mxu0
      %v1137 = vadd.f32 0.0, %v1136
      %v1138 = vpop.f32.mrb[0].mxu0
      %v1139 = vpop.f32.mrb[0].mxu0
      %v1140 = vadd.f32 0.0, %v1139
      %v1141 = vpop.f32.mrb[0].mxu0
      %1142 = vdwg.mxu0
      %v1143 = vadd.f32 %v779, %v1113
      %v1144 = vadd.f32 %v782, %v1116
      %v1145 = vadd.f32 %v787, %v1121
      %v1146 = vadd.f32 %v790, %v1124
      %v1147 = vadd.f32 %v795, %v1129
      %v1148 = vadd.f32 %v798, %v1132
      %v1149 = vadd.f32 %v803, %v1137
      %v1150 = vadd.f32 %v806, %v1140
      %v1151 = vld [vmem:[%s275 + $0x8] sm:$0xf]
      %v1152 = vld [vmem:[%s275 + $0x28] sm:$0xf]
      %v1153 = vld [vmem:[%s275 + $0x48] sm:$0xf]
      %v1154 = vld [vmem:[%s275 + $0x68] sm:$0xf]
      %v1155 = vld [vmem:[%s275 + $0x88] sm:$0xf]
      %v1156 = vld [vmem:[%s275 + $0xa8] sm:$0xf]
      %v1157 = vld [vmem:[%s275 + $0xc8] sm:$0xf]
      %v1158 = vld [vmem:[%s275 + $0xe8] sm:$0xf]
      %v1159 = vunpack.c.l.bf16 %v1151
      %v1160 = vunpack.c.l.bf16 %v1152
      %v1161 = vunpack.c.l.bf16 %v1153
      %v1162 = vunpack.c.l.bf16 %v1154
      %v1163 = vunpack.c.l.bf16 %v1155
      %v1164 = vunpack.c.l.bf16 %v1156
      %v1165 = vunpack.c.l.bf16 %v1157
      %v1166 = vunpack.c.l.bf16 %v1158
      %v1167 = vmul.f32 %v1159, %v296
      %v1168 = vmul.f32 %v1160, %v296
      %v1169 = vmul.f32 %v1161, %v296
      %v1170 = vmul.f32 %v1162, %v296
      %v1171 = vmul.f32 %v1163, %v296
      %v1172 = vmul.f32 %v1164, %v296
      %v1173 = vmul.f32 %v1165, %v296
      %v1174 = vmul.f32 %v1166, %v296
      %v1175 = vadd.f32 %v1167, %v310
      %v1176 = vadd.f32 %v1168, %v310
      %v1177 = vadd.f32 %v1169, %v310
      %v1178 = vadd.f32 %v1170, %v310
      %v1179 = vadd.f32 %v1171, %v310
      %v1180 = vadd.f32 %v1172, %v310
      %v1181 = vadd.f32 %v1173, %v310
      %v1182 = vadd.f32 %v1174, %v310
      %v1183 = vmax.f32 %v1175, 0.0
      %v1184 = vmax.f32 %v1176, 0.0
      %v1185 = vmax.f32 %v1177, 0.0
      %v1186 = vmax.f32 %v1178, 0.0
      %v1187 = vmax.f32 %v1179, 0.0
      %v1188 = vmax.f32 %v1180, 0.0
      %v1189 = vmax.f32 %v1181, 0.0
      %v1190 = vmax.f32 %v1182, 0.0
      %v1191 = vadd.s32 %v328, 1
      %v1192 = vadd.s32 %v329, 1
      %v1193 = vadd.s32 %v330, 1
      %v1194 = vadd.s32 %v331, 1
      %v1195 = vadd.s32 %v332, 1
      %v1196 = vadd.s32 %v333, 1
      %v1197 = vadd.s32 %v334, 1
      %v1198 = vadd.s32 %v335, 1
      %vm1199 = vcmp.ge.s32.totalorder %v1191, 1
      %vm1200 = vcmp.ge.s32.totalorder %v1192, 1
      %vm1201 = vcmp.ge.s32.totalorder %v1193, 1
      %vm1202 = vcmp.ge.s32.totalorder %v1194, 1
      %vm1203 = vcmp.ge.s32.totalorder %v1195, 1
      %vm1204 = vcmp.ge.s32.totalorder %v1196, 1
      %vm1205 = vcmp.ge.s32.totalorder %v1197, 1
      %vm1206 = vcmp.ge.s32.totalorder %v1198, 1
      %vm1207 = vcmp.le.s32.totalorder %v1191, 16
      %vm1208 = vcmp.le.s32.totalorder %v1192, 16
      %vm1209 = vcmp.le.s32.totalorder %v1193, 16
      %vm1210 = vcmp.le.s32.totalorder %v1194, 16
      %vm1211 = vcmp.le.s32.totalorder %v1195, 16
      %vm1212 = vcmp.le.s32.totalorder %v1196, 16
      %vm1213 = vcmp.le.s32.totalorder %v1197, 16
      %vm1214 = vcmp.le.s32.totalorder %v1198, 16
      %vm1215 = vmand %vm1199, %vm1207
      %vm1216 = vmand %vm1200, %vm1208
      %vm1217 = vmand %vm1201, %vm1209
      %vm1218 = vmand %vm1202, %vm1210
      %vm1219 = vmand %vm1203, %vm1211
      %vm1220 = vmand %vm1204, %vm1212
      %vm1221 = vmand %vm1205, %vm1213
      %vm1222 = vmand %vm1206, %vm1214
      %vm1223 = vmand %vm1215, %vm361
      %vm1224 = vmand %vm1216, %vm361
      %vm1225 = vmand %vm1217, %vm361
      %vm1226 = vmand %vm1218, %vm361
      %vm1227 = vmand %vm1219, %vm361
      %vm1228 = vmand %vm1220, %vm361
      %vm1229 = vmand %vm1221, %vm361
      %vm1230 = vmand %vm1222, %vm361
      %vm1231 = vmand %vm1223, %vm370
      %vm1232 = vmand %vm1224, %vm370
      %vm1233 = vmand %vm1225, %vm370
      %vm1234 = vmand %vm1226, %vm370
      %vm1235 = vmand %vm1227, %vm370
      %vm1236 = vmand %vm1228, %vm370
      %vm1237 = vmand %vm1229, %vm370
      %vm1238 = vmand %vm1230, %vm370
      %v1239 = vsel %vm1231, 1, 0
      %v1240 = vsel %vm1232, 1, 0
      %v1241 = vsel %vm1233, 1, 0
      %v1242 = vsel %vm1234, 1, 0
      %v1243 = vsel %vm1235, 1, 0
      %v1244 = vsel %vm1236, 1, 0
      %v1245 = vsel %vm1237, 1, 0
      %v1246 = vsel %vm1238, 1, 0
      %vm1247 = vcmp.eq.s32.totalorder %v1239, 1
      %vm1248 = vcmp.eq.s32.totalorder %v1240, 1
      %vm1249 = vcmp.eq.s32.totalorder %v1241, 1
      %vm1250 = vcmp.eq.s32.totalorder %v1242, 1
      %vm1251 = vcmp.eq.s32.totalorder %v1243, 1
      %vm1252 = vcmp.eq.s32.totalorder %v1244, 1
      %vm1253 = vcmp.eq.s32.totalorder %v1245, 1
      %vm1254 = vcmp.eq.s32.totalorder %v1246, 1
      %v1255 = vsel %vm1247, %v1183, 0.0
      %v1256 = vsel %vm1248, %v1184, 0.0
      %v1257 = vsel %vm1249, %v1185, 0.0
      %v1258 = vsel %vm1250, %v1186, 0.0
      %v1259 = vsel %vm1251, %v1187, 0.0
      %v1260 = vsel %vm1252, %v1188, 0.0
      %v1261 = vsel %vm1253, %v1189, 0.0
      %v1262 = vsel %vm1254, %v1190, 0.0
      %v1263 = vpack.c.bf16 %v1255, %v1255
      %v1264 = vpack.c.bf16 %v1256, %v1256
      %v1265 = vpack.c.bf16 %v1257, %v1257
      %v1266 = vpack.c.bf16 %v1258, %v1258
      %v1267 = vpack.c.bf16 %v1259, %v1259
      %v1268 = vpack.c.bf16 %v1260, %v1260
      %v1269 = vpack.c.bf16 %v1261, %v1261
      %v1270 = vpack.c.bf16 %v1262, %v1262
      %s1271 = scalar_lea.vmem %s3, 192
      %v1272 = vld [vmem:[%s1271] sm:$0xf]
      %v1273 = vld [vmem:[%s1271 + $0x4] sm:$0xf]
      %v1274 = vld [vmem:[%s1271 + $0x8] sm:$0xf]
      %v1275 = vld [vmem:[%s1271 + $0xc] sm:$0xf]
      %v1276 = vld [vmem:[%s1271 + $0x10] sm:$0xf]
      %v1277 = vld [vmem:[%s1271 + $0x14] sm:$0xf]
      %v1278 = vld [vmem:[%s1271 + $0x18] sm:$0xf]
      %v1279 = vld [vmem:[%s1271 + $0x1c] sm:$0xf]
      %v1280 = vld [vmem:[%s1271 + $0x20] sm:$0xf]
      %v1281 = vld [vmem:[%s1271 + $0x24] sm:$0xf]
      %v1282 = vld [vmem:[%s1271 + $0x28] sm:$0xf]
      %v1283 = vld [vmem:[%s1271 + $0x2c] sm:$0xf]
      %v1284 = vld [vmem:[%s1271 + $0x30] sm:$0xf]
      %v1285 = vld [vmem:[%s1271 + $0x34] sm:$0xf]
      %v1286 = vld [vmem:[%s1271 + $0x38] sm:$0xf]
      %v1287 = vld [vmem:[%s1271 + $0x3c] sm:$0xf]
      %v1296 = vunpack.c.l.b16 %v1263
      %v1297 = vunpack.c.l.b16 %v1264
      %v1298 = vunpack.c.l.b16 %v1265
      %v1299 = vunpack.c.l.b16 %v1266
      %v1300 = vunpack.c.l.b16 %v1267
      %v1301 = vunpack.c.l.b16 %v1268
      %v1302 = vunpack.c.l.b16 %v1269
      %v1303 = vunpack.c.l.b16 %v1270
      %v1304 = vpack.c.b16 %v1297, %v1296
      %v1305 = vpack.c.b16 %v1299, %v1298
      %v1306 = vpack.c.b16 %v1301, %v1300
      %v1307 = vpack.c.b16 %v1303, %v1302
      %v1328 = vunpack.c.l.b16 %v1272
      %v1329 = vunpack.c.l.b16 %v1273
      %v1330 = vunpack.c.l.b16 %v1274
      %v1331 = vunpack.c.l.b16 %v1275
      %v1332 = vunpack.c.l.b16 %v1276
      %v1333 = vunpack.c.l.b16 %v1277
      %v1334 = vunpack.c.l.b16 %v1278
      %v1335 = vunpack.c.l.b16 %v1279
      %v1336 = vunpack.c.l.b16 %v1280
      %v1337 = vunpack.c.l.b16 %v1281
      %v1338 = vunpack.c.l.b16 %v1282
      %v1339 = vunpack.c.l.b16 %v1283
      %v1340 = vunpack.c.l.b16 %v1284
      %v1341 = vunpack.c.l.b16 %v1285
      %v1342 = vunpack.c.l.b16 %v1286
      %v1343 = vunpack.c.l.b16 %v1287
      %v1344 = vpack.c.b16 %v1329, %v1328
      %v1345 = vpack.c.b16 %v1331, %v1330
      %v1346 = vpack.c.b16 %v1333, %v1332
      %v1347 = vpack.c.b16 %v1335, %v1334
      %v1348 = vpack.c.b16 %v1337, %v1336
      %v1349 = vpack.c.b16 %v1339, %v1338
      %v1350 = vpack.c.b16 %v1341, %v1340
      %v1351 = vpack.c.b16 %v1343, %v1342
      %1360 = vmatprep.subr.bf16.mxu0 0
      %1361 = vmatpush1.bf16.msra.mxu0 %v1344
      %1362 = vmatprep.subr.bf16.mxu0 0
      %1363 = vmatpush1.bf16.msra.mxu0 %v1345
      %1364 = vmatprep.subr.bf16.mxu0 0
      %1365 = vmatpush1.bf16.msra.mxu0 %v1346
      %1366 = vmatprep.subr.bf16.mxu0 0
      %1367 = vmatpush1.bf16.msra.mxu0 %v1347
      %1368 = vmatprep.subr.bf16.mxu0 0
      %1369 = vmatpush1.bf16.msra.mxu0 %v1348
      %1370 = vmatprep.subr.bf16.mxu0 0
      %1371 = vmatpush1.bf16.msra.mxu0 %v1349
      %1372 = vmatprep.subr.bf16.mxu0 0
      %1373 = vmatpush1.bf16.msra.mxu0 %v1350
      %1374 = vmatprep.subr.bf16.mxu0 0
      %1375 = vmatpush1.bf16.msra.mxu0 %v1351
      %1376 = vmatprep.subr.bf16.mxu0 0
      %1377 = vmatpush1.bf16.msra.mxu0 0
      %1378 = vmatprep.subr.bf16.mxu0 0
      %1379 = vmatpush1.bf16.msra.mxu0 0
      %1380 = vmatprep.subr.bf16.mxu0 0
      %1381 = vmatpush1.bf16.msra.mxu0 0
      %1382 = vmatprep.subr.bf16.mxu0 0
      %1383 = vmatpush1.bf16.msra.mxu0 0
      %1384 = vmatprep.subr.bf16.mxu0 0
      %1385 = vmatpush1.bf16.msra.mxu0 0
      %1386 = vmatprep.subr.bf16.mxu0 0
      %1387 = vmatpush1.bf16.msra.mxu0 0
      %1388 = vmatprep.subr.bf16.mxu0 0
      %1389 = vmatpush1.bf16.msra.mxu0 0
      %1390 = vmatprep.subr.bf16.mxu0 0
      %1391 = vmatpush1.bf16.msra.mxu0 0
      %1392 = vmatprep.mubr.bf16.mxu0 0
      %1393 = vmatmul.mubr.bf16.gmra.mrb[0].mxu0 %v1304
      %v1394 = vpop.f32.mrb[0].mxu0
      %v1395 = vadd.f32 0.0, %v1394
      %v1396 = vpop.f32.mrb[0].mxu0
      %v1397 = vpop.f32.mrb[0].mxu0
      %v1398 = vadd.f32 0.0, %v1397
      %v1399 = vpop.f32.mrb[0].mxu0
      %1400 = vmatprep.mubr.bf16.mxu0 0
      %1401 = vmatmul.mubr.bf16.gmra.mrb[0].mxu0 %v1305
      %v1402 = vpop.f32.mrb[0].mxu0
      %v1403 = vadd.f32 0.0, %v1402
      %v1404 = vpop.f32.mrb[0].mxu0
      %v1405 = vpop.f32.mrb[0].mxu0
      %v1406 = vadd.f32 0.0, %v1405
      %v1407 = vpop.f32.mrb[0].mxu0
      %1408 = vmatprep.mubr.bf16.mxu0 0
      %1409 = vmatmul.mubr.bf16.gmra.mrb[0].mxu0 %v1306
      %v1410 = vpop.f32.mrb[0].mxu0
      %v1411 = vadd.f32 0.0, %v1410
      %v1412 = vpop.f32.mrb[0].mxu0
      %v1413 = vpop.f32.mrb[0].mxu0
      %v1414 = vadd.f32 0.0, %v1413
      %v1415 = vpop.f32.mrb[0].mxu0
      %1416 = vmatprep.mubr.bf16.mxu0 0
      %1417 = vmatmul.mubr.bf16.gmra.mrb[0].mxu0 %v1307
      %v1418 = vpop.f32.mrb[0].mxu0
      %v1419 = vadd.f32 0.0, %v1418
      %v1420 = vpop.f32.mrb[0].mxu0
      %v1421 = vpop.f32.mrb[0].mxu0
      %v1422 = vadd.f32 0.0, %v1421
      %v1423 = vpop.f32.mrb[0].mxu0
      %1424 = vdwg.mxu0
      %v1425 = vadd.f32 %v1143, %v1395
      %v1426 = vadd.f32 %v1144, %v1398
      %v1427 = vadd.f32 %v1145, %v1403
      %v1428 = vadd.f32 %v1146, %v1406
      %v1429 = vadd.f32 %v1147, %v1411
      %v1430 = vadd.f32 %v1148, %v1414
      %v1431 = vadd.f32 %v1149, %v1419
      %v1432 = vadd.f32 %v1150, %v1422
      %v1433 = vld [vmem:[%s275 + $0xc] sm:$0xf]
      %v1434 = vld [vmem:[%s275 + $0x2c] sm:$0xf]
      %v1435 = vld [vmem:[%s275 + $0x4c] sm:$0xf]
      %v1436 = vld [vmem:[%s275 + $0x6c] sm:$0xf]
      %v1437 = vld [vmem:[%s275 + $0x8c] sm:$0xf]
      %v1438 = vld [vmem:[%s275 + $0xac] sm:$0xf]
      %v1439 = vld [vmem:[%s275 + $0xcc] sm:$0xf]
      %v1440 = vld [vmem:[%s275 + $0xec] sm:$0xf]
      %v1441 = vunpack.c.l.bf16 %v1433
      %v1442 = vunpack.c.l.bf16 %v1434
      %v1443 = vunpack.c.l.bf16 %v1435
      %v1444 = vunpack.c.l.bf16 %v1436
      %v1445 = vunpack.c.l.bf16 %v1437
      %v1446 = vunpack.c.l.bf16 %v1438
      %v1447 = vunpack.c.l.bf16 %v1439
      %v1448 = vunpack.c.l.bf16 %v1440
      %v1449 = vmul.f32 %v1441, %v296
      %v1450 = vmul.f32 %v1442, %v296
      %v1451 = vmul.f32 %v1443, %v296
      %v1452 = vmul.f32 %v1444, %v296
      %v1453 = vmul.f32 %v1445, %v296
      %v1454 = vmul.f32 %v1446, %v296
      %v1455 = vmul.f32 %v1447, %v296
      %v1456 = vmul.f32 %v1448, %v296
      %v1457 = vadd.f32 %v1449, %v310
      %v1458 = vadd.f32 %v1450, %v310
      %v1459 = vadd.f32 %v1451, %v310
      %v1460 = vadd.f32 %v1452, %v310
      %v1461 = vadd.f32 %v1453, %v310
      %v1462 = vadd.f32 %v1454, %v310
      %v1463 = vadd.f32 %v1455, %v310
      %v1464 = vadd.f32 %v1456, %v310
      %v1465 = vmax.f32 %v1457, 0.0
      %v1466 = vmax.f32 %v1458, 0.0
      %v1467 = vmax.f32 %v1459, 0.0
      %v1468 = vmax.f32 %v1460, 0.0
      %v1469 = vmax.f32 %v1461, 0.0
      %v1470 = vmax.f32 %v1462, 0.0
      %v1471 = vmax.f32 %v1463, 0.0
      %v1472 = vmax.f32 %v1464, 0.0
      %vm1473 = vmand %vm1215, %vm468
      %vm1474 = vmand %vm1216, %vm468
      %vm1475 = vmand %vm1217, %vm468
      %vm1476 = vmand %vm1218, %vm468
      %vm1477 = vmand %vm1219, %vm468
      %vm1478 = vmand %vm1220, %vm468
      %vm1479 = vmand %vm1221, %vm468
      %vm1480 = vmand %vm1222, %vm468
      %vm1481 = vmand %vm1473, %vm477
      %vm1482 = vmand %vm1474, %vm477
      %vm1483 = vmand %vm1475, %vm477
      %vm1484 = vmand %vm1476, %vm477
      %vm1485 = vmand %vm1477, %vm477
      %vm1486 = vmand %vm1478, %vm477
      %vm1487 = vmand %vm1479, %vm477
      %vm1488 = vmand %vm1480, %vm477
      %v1489 = vsel %vm1481, 1, 0
      %v1490 = vsel %vm1482, 1, 0
      %v1491 = vsel %vm1483, 1, 0
      %v1492 = vsel %vm1484, 1, 0
      %v1493 = vsel %vm1485, 1, 0
      %v1494 = vsel %vm1486, 1, 0
      %v1495 = vsel %vm1487, 1, 0
      %v1496 = vsel %vm1488, 1, 0
      %vm1497 = vcmp.eq.s32.totalorder %v1489, 1
      %vm1498 = vcmp.eq.s32.totalorder %v1490, 1
      %vm1499 = vcmp.eq.s32.totalorder %v1491, 1
      %vm1500 = vcmp.eq.s32.totalorder %v1492, 1
      %vm1501 = vcmp.eq.s32.totalorder %v1493, 1
      %vm1502 = vcmp.eq.s32.totalorder %v1494, 1
      %vm1503 = vcmp.eq.s32.totalorder %v1495, 1
      %vm1504 = vcmp.eq.s32.totalorder %v1496, 1
      %v1505 = vsel %vm1497, %v1465, 0.0
      %v1506 = vsel %vm1498, %v1466, 0.0
      %v1507 = vsel %vm1499, %v1467, 0.0
      %v1508 = vsel %vm1500, %v1468, 0.0
      %v1509 = vsel %vm1501, %v1469, 0.0
      %v1510 = vsel %vm1502, %v1470, 0.0
      %v1511 = vsel %vm1503, %v1471, 0.0
      %v1512 = vsel %vm1504, %v1472, 0.0
      %v1513 = vpack.c.bf16 %v1505, %v1505
      %v1514 = vpack.c.bf16 %v1506, %v1506
      %v1515 = vpack.c.bf16 %v1507, %v1507
      %v1516 = vpack.c.bf16 %v1508, %v1508
      %v1517 = vpack.c.bf16 %v1509, %v1509
      %v1518 = vpack.c.bf16 %v1510, %v1510
      %v1519 = vpack.c.bf16 %v1511, %v1511
      %v1520 = vpack.c.bf16 %v1512, %v1512
      %s1521 = scalar_lea.vmem %s3, 256
      %v1522 = vld [vmem:[%s1521] sm:$0xf]
      %v1523 = vld [vmem:[%s1521 + $0x4] sm:$0xf]
      %v1524 = vld [vmem:[%s1521 + $0x8] sm:$0xf]
      %v1525 = vld [vmem:[%s1521 + $0xc] sm:$0xf]
      %v1526 = vld [vmem:[%s1521 + $0x10] sm:$0xf]
      %v1527 = vld [vmem:[%s1521 + $0x14] sm:$0xf]
      %v1528 = vld [vmem:[%s1521 + $0x18] sm:$0xf]
      %v1529 = vld [vmem:[%s1521 + $0x1c] sm:$0xf]
      %v1530 = vld [vmem:[%s1521 + $0x20] sm:$0xf]
      %v1531 = vld [vmem:[%s1521 + $0x24] sm:$0xf]
      %v1532 = vld [vmem:[%s1521 + $0x28] sm:$0xf]
      %v1533 = vld [vmem:[%s1521 + $0x2c] sm:$0xf]
      %v1534 = vld [vmem:[%s1521 + $0x30] sm:$0xf]
      %v1535 = vld [vmem:[%s1521 + $0x34] sm:$0xf]
      %v1536 = vld [vmem:[%s1521 + $0x38] sm:$0xf]
      %v1537 = vld [vmem:[%s1521 + $0x3c] sm:$0xf]
      %v1546 = vunpack.c.l.b16 %v1513
      %v1547 = vunpack.c.l.b16 %v1514
      %v1548 = vunpack.c.l.b16 %v1515
      %v1549 = vunpack.c.l.b16 %v1516
      %v1550 = vunpack.c.l.b16 %v1517
      %v1551 = vunpack.c.l.b16 %v1518
      %v1552 = vunpack.c.l.b16 %v1519
      %v1553 = vunpack.c.l.b16 %v1520
      %v1554 = vpack.c.b16 %v1547, %v1546
      %v1555 = vpack.c.b16 %v1549, %v1548
      %v1556 = vpack.c.b16 %v1551, %v1550
      %v1557 = vpack.c.b16 %v1553, %v1552
      %v1578 = vunpack.c.l.b16 %v1522
      %v1579 = vunpack.c.l.b16 %v1523
      %v1580 = vunpack.c.l.b16 %v1524
      %v1581 = vunpack.c.l.b16 %v1525
      %v1582 = vunpack.c.l.b16 %v1526
      %v1583 = vunpack.c.l.b16 %v1527
      %v1584 = vunpack.c.l.b16 %v1528
      %v1585 = vunpack.c.l.b16 %v1529
      %v1586 = vunpack.c.l.b16 %v1530
      %v1587 = vunpack.c.l.b16 %v1531
      %v1588 = vunpack.c.l.b16 %v1532
      %v1589 = vunpack.c.l.b16 %v1533
      %v1590 = vunpack.c.l.b16 %v1534
      %v1591 = vunpack.c.l.b16 %v1535
      %v1592 = vunpack.c.l.b16 %v1536
      %v1593 = vunpack.c.l.b16 %v1537
      %v1594 = vpack.c.b16 %v1579, %v1578
      %v1595 = vpack.c.b16 %v1581, %v1580
      %v1596 = vpack.c.b16 %v1583, %v1582
      %v1597 = vpack.c.b16 %v1585, %v1584
      %v1598 = vpack.c.b16 %v1587, %v1586
      %v1599 = vpack.c.b16 %v1589, %v1588
      %v1600 = vpack.c.b16 %v1591, %v1590
      %v1601 = vpack.c.b16 %v1593, %v1592
      %1610 = vmatprep.subr.bf16.mxu0 0
      %1611 = vmatpush1.bf16.msra.mxu0 %v1594
      %1612 = vmatprep.subr.bf16.mxu0 0
      %1613 = vmatpush1.bf16.msra.mxu0 %v1595
      %1614 = vmatprep.subr.bf16.mxu0 0
      %1615 = vmatpush1.bf16.msra.mxu0 %v1596
      %1616 = vmatprep.subr.bf16.mxu0 0
      %1617 = vmatpush1.bf16.msra.mxu0 %v1597
      %1618 = vmatprep.subr.bf16.mxu0 0
      %1619 = vmatpush1.bf16.msra.mxu0 %v1598
      %1620 = vmatprep.subr.bf16.mxu0 0
      %1621 = vmatpush1.bf16.msra.mxu0 %v1599
      %1622 = vmatprep.subr.bf16.mxu0 0
      %1623 = vmatpush1.bf16.msra.mxu0 %v1600
      %1624 = vmatprep.subr.bf16.mxu0 0
      %1625 = vmatpush1.bf16.msra.mxu0 %v1601
      %1626 = vmatprep.subr.bf16.mxu0 0
      %1627 = vmatpush1.bf16.msra.mxu0 0
      %1628 = vmatprep.subr.bf16.mxu0 0
      %1629 = vmatpush1.bf16.msra.mxu0 0
      %1630 = vmatprep.subr.bf16.mxu0 0
      %1631 = vmatpush1.bf16.msra.mxu0 0
      %1632 = vmatprep.subr.bf16.mxu0 0
      %1633 = vmatpush1.bf16.msra.mxu0 0
      %1634 = vmatprep.subr.bf16.mxu0 0
      %1635 = vmatpush1.bf16.msra.mxu0 0
      %1636 = vmatprep.subr.bf16.mxu0 0
      %1637 = vmatpush1.bf16.msra.mxu0 0
      %1638 = vmatprep.subr.bf16.mxu0 0
      %1639 = vmatpush1.bf16.msra.mxu0 0
      %1640 = vmatprep.subr.bf16.mxu0 0
      %1641 = vmatpush1.bf16.msra.mxu0 0
      %1642 = vmatprep.mubr.bf16.mxu0 0
      %1643 = vmatmul.mubr.bf16.gmra.mrb[0].mxu0 %v1554
      %v1644 = vpop.f32.mrb[0].mxu0
      %v1645 = vadd.f32 0.0, %v1644
      %v1646 = vpop.f32.mrb[0].mxu0
      %v1647 = vpop.f32.mrb[0].mxu0
      %v1648 = vadd.f32 0.0, %v1647
      %v1649 = vpop.f32.mrb[0].mxu0
      %1650 = vmatprep.mubr.bf16.mxu0 0
      %1651 = vmatmul.mubr.bf16.gmra.mrb[0].mxu0 %v1555
      %v1652 = vpop.f32.mrb[0].mxu0
      %v1653 = vadd.f32 0.0, %v1652
      %v1654 = vpop.f32.mrb[0].mxu0
      %v1655 = vpop.f32.mrb[0].mxu0
      %v1656 = vadd.f32 0.0, %v1655
      %v1657 = vpop.f32.mrb[0].mxu0
      %1658 = vmatprep.mubr.bf16.mxu0 0
      %1659 = vmatmul.mubr.bf16.gmra.mrb[0].mxu0 %v1556
      %v1660 = vpop.f32.mrb[0].mxu0
      %v1661 = vadd.f32 0.0, %v1660
      %v1662 = vpop.f32.mrb[0].mxu0
      %v1663 = vpop.f32.mrb[0].mxu0
      %v1664 = vadd.f32 0.0, %v1663
      %v1665 = vpop.f32.mrb[0].mxu0
      %1666 = vmatprep.mubr.bf16.mxu0 0
      %1667 = vmatmul.mubr.bf16.gmra.mrb[0].mxu0 %v1557
      %v1668 = vpop.f32.mrb[0].mxu0
      %v1669 = vadd.f32 0.0, %v1668
      %v1670 = vpop.f32.mrb[0].mxu0
      %v1671 = vpop.f32.mrb[0].mxu0
      %v1672 = vadd.f32 0.0, %v1671
      %v1673 = vpop.f32.mrb[0].mxu0
      %1674 = vdwg.mxu0
      %v1675 = vadd.f32 %v1425, %v1645
      %v1676 = vadd.f32 %v1426, %v1648
      %v1677 = vadd.f32 %v1427, %v1653
      %v1678 = vadd.f32 %v1428, %v1656
      %v1679 = vadd.f32 %v1429, %v1661
      %v1680 = vadd.f32 %v1430, %v1664
      %v1681 = vadd.f32 %v1431, %v1669
      %v1682 = vadd.f32 %v1432, %v1672
      %v1683 = vld [vmem:[%s275 + $0x8] sm:$0xf]
      %v1684 = vld [vmem:[%s275 + $0x18] sm:$0x1]
      %v1685 = vld [vmem:[%s275 + $0x28] sm:$0xf]
      %v1686 = vld [vmem:[%s275 + $0x38] sm:$0x1]
      %v1687 = vld [vmem:[%s275 + $0x48] sm:$0xf]
      %v1688 = vld [vmem:[%s275 + $0x58] sm:$0x1]
      %v1689 = vld [vmem:[%s275 + $0x68] sm:$0xf]
      %v1690 = vld [vmem:[%s275 + $0x78] sm:$0x1]
      %v1691 = vld [vmem:[%s275 + $0x88] sm:$0xf]
      %v1692 = vld [vmem:[%s275 + $0x98] sm:$0x1]
      %v1693 = vld [vmem:[%s275 + $0xa8] sm:$0xf]
      %v1694 = vld [vmem:[%s275 + $0xb8] sm:$0x1]
      %v1695 = vld [vmem:[%s275 + $0xc8] sm:$0xf]
      %v1696 = vld [vmem:[%s275 + $0xd8] sm:$0x1]
      %v1697 = vld [vmem:[%s275 + $0xe8] sm:$0xf]
      %v1698 = vld [vmem:[%s275 + $0xf8] sm:$0x1]
      %v1699 = vunpack.c.l.bf16 %v1683
      %v1700 = vunpack.c.l.bf16 %v1684
      %v1701 = vunpack.c.l.bf16 %v1685
      %v1702 = vunpack.c.l.bf16 %v1686
      %v1703 = vunpack.c.l.bf16 %v1687
      %v1704 = vunpack.c.l.bf16 %v1688
      %v1705 = vunpack.c.l.bf16 %v1689
      %v1706 = vunpack.c.l.bf16 %v1690
      %v1707 = vunpack.c.l.bf16 %v1691
      %v1708 = vunpack.c.l.bf16 %v1692
      %v1709 = vunpack.c.l.bf16 %v1693
      %v1710 = vunpack.c.l.bf16 %v1694
      %v1711 = vunpack.c.l.bf16 %v1695
      %v1712 = vunpack.c.l.bf16 %v1696
      %v1713 = vunpack.c.l.bf16 %v1697
      %v1714 = vunpack.c.l.bf16 %v1698
      %v1715 = vmul.f32 %v1699, %v296
      %v1716 = vmul.f32 %v1700, %v296
      %v1717 = vmul.f32 %v1701, %v296
      %v1718 = vmul.f32 %v1702, %v296
      %v1719 = vmul.f32 %v1703, %v296
      %v1720 = vmul.f32 %v1704, %v296
      %v1721 = vmul.f32 %v1705, %v296
      %v1722 = vmul.f32 %v1706, %v296
      %v1723 = vmul.f32 %v1707, %v296
      %v1724 = vmul.f32 %v1708, %v296
      %v1725 = vmul.f32 %v1709, %v296
      %v1726 = vmul.f32 %v1710, %v296
      %v1727 = vmul.f32 %v1711, %v296
      %v1728 = vmul.f32 %v1712, %v296
      %v1729 = vmul.f32 %v1713, %v296
      %v1730 = vmul.f32 %v1714, %v296
      %v1731 = vadd.f32 %v1715, %v310
      %v1732 = vadd.f32 %v1716, %v310
      %v1733 = vadd.f32 %v1717, %v310
      %v1734 = vadd.f32 %v1718, %v310
      %v1735 = vadd.f32 %v1719, %v310
      %v1736 = vadd.f32 %v1720, %v310
      %v1737 = vadd.f32 %v1721, %v310
      %v1738 = vadd.f32 %v1722, %v310
      %v1739 = vadd.f32 %v1723, %v310
      %v1740 = vadd.f32 %v1724, %v310
      %v1741 = vadd.f32 %v1725, %v310
      %v1742 = vadd.f32 %v1726, %v310
      %v1743 = vadd.f32 %v1727, %v310
      %v1744 = vadd.f32 %v1728, %v310
      %v1745 = vadd.f32 %v1729, %v310
      %v1746 = vadd.f32 %v1730, %v310
      %v1747 = vmax.f32 %v1731, 0.0
      %v1748 = vmax.f32 %v1732, 0.0
      %v1749 = vmax.f32 %v1733, 0.0
      %v1750 = vmax.f32 %v1734, 0.0
      %v1751 = vmax.f32 %v1735, 0.0
      %v1752 = vmax.f32 %v1736, 0.0
      %v1753 = vmax.f32 %v1737, 0.0
      %v1754 = vmax.f32 %v1738, 0.0
      %v1755 = vmax.f32 %v1739, 0.0
      %v1756 = vmax.f32 %v1740, 0.0
      %v1757 = vmax.f32 %v1741, 0.0
      %v1758 = vmax.f32 %v1742, 0.0
      %v1759 = vmax.f32 %v1743, 0.0
      %v1760 = vmax.f32 %v1744, 0.0
      %v1761 = vmax.f32 %v1745, 0.0
      %v1762 = vmax.f32 %v1746, 0.0
      %vm1763 = vmand %vm1215, %vm890
      %vm1764 = vmand %vm1216, %vm890
      %vm1765 = vmand %vm1217, %vm890
      %vm1766 = vmand %vm1218, %vm890
      %vm1767 = vmand %vm1219, %vm890
      %vm1768 = vmand %vm1220, %vm890
      %vm1769 = vmand %vm1221, %vm890
      %vm1770 = vmand %vm1222, %vm890
      %vm1771 = vmand %vm1763, %vm899
      %vm1772 = vmand %vm1764, %vm899
      %vm1773 = vmand %vm1765, %vm899
      %vm1774 = vmand %vm1766, %vm899
      %vm1775 = vmand %vm1767, %vm899
      %vm1776 = vmand %vm1768, %vm899
      %vm1777 = vmand %vm1769, %vm899
      %vm1778 = vmand %vm1770, %vm899
      %v1779 = vsel %vm1771, 1, 0
      %v1780 = vsel %vm1772, 1, 0
      %v1781 = vsel %vm1773, 1, 0
      %v1782 = vsel %vm1774, 1, 0
      %v1783 = vsel %vm1775, 1, 0
      %v1784 = vsel %vm1776, 1, 0
      %v1785 = vsel %vm1777, 1, 0
      %v1786 = vsel %vm1778, 1, 0
      %vm1787 = vcmp.eq.s32.totalorder %v1779, 1
      %vm1788 = vcmp.eq.s32.totalorder %v1780, 1
      %vm1789 = vcmp.eq.s32.totalorder %v1781, 1
      %vm1790 = vcmp.eq.s32.totalorder %v1782, 1
      %vm1791 = vcmp.eq.s32.totalorder %v1783, 1
      %vm1792 = vcmp.eq.s32.totalorder %v1784, 1
      %vm1793 = vcmp.eq.s32.totalorder %v1785, 1
      %vm1794 = vcmp.eq.s32.totalorder %v1786, 1
      %v1811 = vrot.slane %v1747, 1
      %v1812 = vrot.slane %v1748, 1
      %v1813 = vsel %vm940, %v1811, %v1812
      %v1814 = vrot.slane %v1749, 1
      %v1815 = vrot.slane %v1750, 1
      %v1816 = vsel %vm940, %v1814, %v1815
      %v1817 = vrot.slane %v1751, 1
      %v1818 = vrot.slane %v1752, 1
      %v1819 = vsel %vm940, %v1817, %v1818
      %v1820 = vrot.slane %v1753, 1
      %v1821 = vrot.slane %v1754, 1
      %v1822 = vsel %vm940, %v1820, %v1821
      %v1823 = vrot.slane %v1755, 1
      %v1824 = vrot.slane %v1756, 1
      %v1825 = vsel %vm940, %v1823, %v1824
      %v1826 = vrot.slane %v1757, 1
      %v1827 = vrot.slane %v1758, 1
      %v1828 = vsel %vm940, %v1826, %v1827
      %v1829 = vrot.slane %v1759, 1
      %v1830 = vrot.slane %v1760, 1
      %v1831 = vsel %vm940, %v1829, %v1830
      %v1832 = vrot.slane %v1761, 1
      %v1833 = vrot.slane %v1762, 1
      %v1834 = vsel %vm940, %v1832, %v1833
      %v1843 = vsel %vm1787, %v1813, 0.0
      %v1844 = vsel %vm1788, %v1816, 0.0
      %v1845 = vsel %vm1789, %v1819, 0.0
      %v1846 = vsel %vm1790, %v1822, 0.0
      %v1847 = vsel %vm1791, %v1825, 0.0
      %v1848 = vsel %vm1792, %v1828, 0.0
      %v1849 = vsel %vm1793, %v1831, 0.0
      %v1850 = vsel %vm1794, %v1834, 0.0
      %v1851 = vpack.c.bf16 %v1843, %v1843
      %v1852 = vpack.c.bf16 %v1844, %v1844
      %v1853 = vpack.c.bf16 %v1845, %v1845
      %v1854 = vpack.c.bf16 %v1846, %v1846
      %v1855 = vpack.c.bf16 %v1847, %v1847
      %v1856 = vpack.c.bf16 %v1848, %v1848
      %v1857 = vpack.c.bf16 %v1849, %v1849
      %v1858 = vpack.c.bf16 %v1850, %v1850
      %s1859 = scalar_lea.vmem %s3, 320
      %v1860 = vld [vmem:[%s1859] sm:$0xf]
      %v1861 = vld [vmem:[%s1859 + $0x4] sm:$0xf]
      %v1862 = vld [vmem:[%s1859 + $0x8] sm:$0xf]
      %v1863 = vld [vmem:[%s1859 + $0xc] sm:$0xf]
      %v1864 = vld [vmem:[%s1859 + $0x10] sm:$0xf]
      %v1865 = vld [vmem:[%s1859 + $0x14] sm:$0xf]
      %v1866 = vld [vmem:[%s1859 + $0x18] sm:$0xf]
      %v1867 = vld [vmem:[%s1859 + $0x1c] sm:$0xf]
      %v1868 = vld [vmem:[%s1859 + $0x20] sm:$0xf]
      %v1869 = vld [vmem:[%s1859 + $0x24] sm:$0xf]
      %v1870 = vld [vmem:[%s1859 + $0x28] sm:$0xf]
      %v1871 = vld [vmem:[%s1859 + $0x2c] sm:$0xf]
      %v1872 = vld [vmem:[%s1859 + $0x30] sm:$0xf]
      %v1873 = vld [vmem:[%s1859 + $0x34] sm:$0xf]
      %v1874 = vld [vmem:[%s1859 + $0x38] sm:$0xf]
      %v1875 = vld [vmem:[%s1859 + $0x3c] sm:$0xf]
      %v1884 = vunpack.c.l.b16 %v1851
      %v1885 = vunpack.c.l.b16 %v1852
      %v1886 = vunpack.c.l.b16 %v1853
      %v1887 = vunpack.c.l.b16 %v1854
      %v1888 = vunpack.c.l.b16 %v1855
      %v1889 = vunpack.c.l.b16 %v1856
      %v1890 = vunpack.c.l.b16 %v1857
      %v1891 = vunpack.c.l.b16 %v1858
      %v1892 = vpack.c.b16 %v1885, %v1884
      %v1893 = vpack.c.b16 %v1887, %v1886
      %v1894 = vpack.c.b16 %v1889, %v1888
      %v1895 = vpack.c.b16 %v1891, %v1890
      %v1916 = vunpack.c.l.b16 %v1860
      %v1917 = vunpack.c.l.b16 %v1861
      %v1918 = vunpack.c.l.b16 %v1862
      %v1919 = vunpack.c.l.b16 %v1863
      %v1920 = vunpack.c.l.b16 %v1864
      %v1921 = vunpack.c.l.b16 %v1865
      %v1922 = vunpack.c.l.b16 %v1866
      %v1923 = vunpack.c.l.b16 %v1867
      %v1924 = vunpack.c.l.b16 %v1868
      %v1925 = vunpack.c.l.b16 %v1869
      %v1926 = vunpack.c.l.b16 %v1870
      %v1927 = vunpack.c.l.b16 %v1871
      %v1928 = vunpack.c.l.b16 %v1872
      %v1929 = vunpack.c.l.b16 %v1873
      %v1930 = vunpack.c.l.b16 %v1874
      %v1931 = vunpack.c.l.b16 %v1875
      %v1932 = vpack.c.b16 %v1917, %v1916
      %v1933 = vpack.c.b16 %v1919, %v1918
      %v1934 = vpack.c.b16 %v1921, %v1920
      %v1935 = vpack.c.b16 %v1923, %v1922
      %v1936 = vpack.c.b16 %v1925, %v1924
      %v1937 = vpack.c.b16 %v1927, %v1926
      %v1938 = vpack.c.b16 %v1929, %v1928
      %v1939 = vpack.c.b16 %v1931, %v1930
      %1948 = vmatprep.subr.bf16.mxu0 0
      %1949 = vmatpush1.bf16.msra.mxu0 %v1932
      %1950 = vmatprep.subr.bf16.mxu0 0
      %1951 = vmatpush1.bf16.msra.mxu0 %v1933
      %1952 = vmatprep.subr.bf16.mxu0 0
      %1953 = vmatpush1.bf16.msra.mxu0 %v1934
      %1954 = vmatprep.subr.bf16.mxu0 0
      %1955 = vmatpush1.bf16.msra.mxu0 %v1935
      %1956 = vmatprep.subr.bf16.mxu0 0
      %1957 = vmatpush1.bf16.msra.mxu0 %v1936
      %1958 = vmatprep.subr.bf16.mxu0 0
      %1959 = vmatpush1.bf16.msra.mxu0 %v1937
      %1960 = vmatprep.subr.bf16.mxu0 0
      %1961 = vmatpush1.bf16.msra.mxu0 %v1938
      %1962 = vmatprep.subr.bf16.mxu0 0
      %1963 = vmatpush1.bf16.msra.mxu0 %v1939
      %1964 = vmatprep.subr.bf16.mxu0 0
      %1965 = vmatpush1.bf16.msra.mxu0 0
      %1966 = vmatprep.subr.bf16.mxu0 0
      %1967 = vmatpush1.bf16.msra.mxu0 0
      %1968 = vmatprep.subr.bf16.mxu0 0
      %1969 = vmatpush1.bf16.msra.mxu0 0
      %1970 = vmatprep.subr.bf16.mxu0 0
      %1971 = vmatpush1.bf16.msra.mxu0 0
      %1972 = vmatprep.subr.bf16.mxu0 0
      %1973 = vmatpush1.bf16.msra.mxu0 0
      %1974 = vmatprep.subr.bf16.mxu0 0
      %1975 = vmatpush1.bf16.msra.mxu0 0
      %1976 = vmatprep.subr.bf16.mxu0 0
      %1977 = vmatpush1.bf16.msra.mxu0 0
      %1978 = vmatprep.subr.bf16.mxu0 0
      %1979 = vmatpush1.bf16.msra.mxu0 0
      %1980 = vmatprep.mubr.bf16.mxu0 0
      %1981 = vmatmul.mubr.bf16.gmra.mrb[0].mxu0 %v1892
      %v1982 = vpop.f32.mrb[0].mxu0
      %v1983 = vadd.f32 0.0, %v1982
      %v1984 = vpop.f32.mrb[0].mxu0
      %v1985 = vpop.f32.mrb[0].mxu0
      %v1986 = vadd.f32 0.0, %v1985
      %v1987 = vpop.f32.mrb[0].mxu0
      %1988 = vmatprep.mubr.bf16.mxu0 0
      %1989 = vmatmul.mubr.bf16.gmra.mrb[0].mxu0 %v1893
      %v1990 = vpop.f32.mrb[0].mxu0
      %v1991 = vadd.f32 0.0, %v1990
      %v1992 = vpop.f32.mrb[0].mxu0
      %v1993 = vpop.f32.mrb[0].mxu0
      %v1994 = vadd.f32 0.0, %v1993
      %v1995 = vpop.f32.mrb[0].mxu0
      %1996 = vmatprep.mubr.bf16.mxu0 0
      %1997 = vmatmul.mubr.bf16.gmra.mrb[0].mxu0 %v1894
      %v1998 = vpop.f32.mrb[0].mxu0
      %v1999 = vadd.f32 0.0, %v1998
      %v2000 = vpop.f32.mrb[0].mxu0
      %v2001 = vpop.f32.mrb[0].mxu0
      %v2002 = vadd.f32 0.0, %v2001
      %v2003 = vpop.f32.mrb[0].mxu0
      %2004 = vmatprep.mubr.bf16.mxu0 0
      %2005 = vmatmul.mubr.bf16.gmra.mrb[0].mxu0 %v1895
      %v2006 = vpop.f32.mrb[0].mxu0
      %v2007 = vadd.f32 0.0, %v2006
      %v2008 = vpop.f32.mrb[0].mxu0
      %v2009 = vpop.f32.mrb[0].mxu0
      %v2010 = vadd.f32 0.0, %v2009
      %v2011 = vpop.f32.mrb[0].mxu0
      %2012 = vdwg.mxu0
      %v2013 = vadd.f32 %v1675, %v1983
      %v2014 = vadd.f32 %v1676, %v1986
      %v2015 = vadd.f32 %v1677, %v1991
      %v2016 = vadd.f32 %v1678, %v1994
      %v2017 = vadd.f32 %v1679, %v1999
      %v2018 = vadd.f32 %v1680, %v2002
      %v2019 = vadd.f32 %v1681, %v2007
      %v2020 = vadd.f32 %v1682, %v2010
      %s2021 = sadd.s32 %s260, 1
      %s2022 = smul.u32 %s2021, 8
      %s2023 = smul.addr %s2022, 4
      %s2024 = scalar_lea.vmem %s244, %s2023
      %v2025 = vld [vmem:[%s2024] sm:$0xf]
      %v2026 = vld [vmem:[%s2024 + $0x20] sm:$0xf]
      %v2027 = vld [vmem:[%s2024 + $0x40] sm:$0xf]
      %v2028 = vld [vmem:[%s2024 + $0x60] sm:$0xf]
      %v2029 = vld [vmem:[%s2024 + $0x80] sm:$0xf]
      %v2030 = vld [vmem:[%s2024 + $0xa0] sm:$0xf]
      %v2031 = vld [vmem:[%s2024 + $0xc0] sm:$0xf]
      %v2032 = vld [vmem:[%s2024 + $0xe0] sm:$0xf]
      %v2033 = vunpack.c.l.bf16 %v2025
      %v2034 = vunpack.c.l.bf16 %v2026
      %v2035 = vunpack.c.l.bf16 %v2027
      %v2036 = vunpack.c.l.bf16 %v2028
      %v2037 = vunpack.c.l.bf16 %v2029
      %v2038 = vunpack.c.l.bf16 %v2030
      %v2039 = vunpack.c.l.bf16 %v2031
      %v2040 = vunpack.c.l.bf16 %v2032
      %v2041 = vmul.f32 %v2033, %v296
      %v2042 = vmul.f32 %v2034, %v296
      %v2043 = vmul.f32 %v2035, %v296
      %v2044 = vmul.f32 %v2036, %v296
      %v2045 = vmul.f32 %v2037, %v296
      %v2046 = vmul.f32 %v2038, %v296
      %v2047 = vmul.f32 %v2039, %v296
      %v2048 = vmul.f32 %v2040, %v296
      %v2049 = vadd.f32 %v2041, %v310
      %v2050 = vadd.f32 %v2042, %v310
      %v2051 = vadd.f32 %v2043, %v310
      %v2052 = vadd.f32 %v2044, %v310
      %v2053 = vadd.f32 %v2045, %v310
      %v2054 = vadd.f32 %v2046, %v310
      %v2055 = vadd.f32 %v2047, %v310
      %v2056 = vadd.f32 %v2048, %v310
      %v2057 = vmax.f32 %v2049, 0.0
      %v2058 = vmax.f32 %v2050, 0.0
      %v2059 = vmax.f32 %v2051, 0.0
      %v2060 = vmax.f32 %v2052, 0.0
      %v2061 = vmax.f32 %v2053, 0.0
      %v2062 = vmax.f32 %v2054, 0.0
      %v2063 = vmax.f32 %v2055, 0.0
      %v2064 = vmax.f32 %v2056, 0.0
      %v2065 = vadd.s32 %v328, 2
      %v2066 = vadd.s32 %v329, 2
      %v2067 = vadd.s32 %v330, 2
      %v2068 = vadd.s32 %v331, 2
      %v2069 = vadd.s32 %v332, 2
      %v2070 = vadd.s32 %v333, 2
      %v2071 = vadd.s32 %v334, 2
      %v2072 = vadd.s32 %v335, 2
      %vm2073 = vcmp.ge.s32.totalorder %v2065, 1
      %vm2074 = vcmp.ge.s32.totalorder %v2066, 1
      %vm2075 = vcmp.ge.s32.totalorder %v2067, 1
      %vm2076 = vcmp.ge.s32.totalorder %v2068, 1
      %vm2077 = vcmp.ge.s32.totalorder %v2069, 1
      %vm2078 = vcmp.ge.s32.totalorder %v2070, 1
      %vm2079 = vcmp.ge.s32.totalorder %v2071, 1
      %vm2080 = vcmp.ge.s32.totalorder %v2072, 1
      %vm2081 = vcmp.le.s32.totalorder %v2065, 16
      %vm2082 = vcmp.le.s32.totalorder %v2066, 16
      %vm2083 = vcmp.le.s32.totalorder %v2067, 16
      %vm2084 = vcmp.le.s32.totalorder %v2068, 16
      %vm2085 = vcmp.le.s32.totalorder %v2069, 16
      %vm2086 = vcmp.le.s32.totalorder %v2070, 16
      %vm2087 = vcmp.le.s32.totalorder %v2071, 16
      %vm2088 = vcmp.le.s32.totalorder %v2072, 16
      %vm2089 = vmand %vm2073, %vm2081
      %vm2090 = vmand %vm2074, %vm2082
      %vm2091 = vmand %vm2075, %vm2083
      %vm2092 = vmand %vm2076, %vm2084
      %vm2093 = vmand %vm2077, %vm2085
      %vm2094 = vmand %vm2078, %vm2086
      %vm2095 = vmand %vm2079, %vm2087
      %vm2096 = vmand %vm2080, %vm2088
      %vm2097 = vmand %vm2089, %vm361
      %vm2098 = vmand %vm2090, %vm361
      %vm2099 = vmand %vm2091, %vm361
      %vm2100 = vmand %vm2092, %vm361
      %vm2101 = vmand %vm2093, %vm361
      %vm2102 = vmand %vm2094, %vm361
      %vm2103 = vmand %vm2095, %vm361
      %vm2104 = vmand %vm2096, %vm361
      %vm2105 = vmand %vm2097, %vm370
      %vm2106 = vmand %vm2098, %vm370
      %vm2107 = vmand %vm2099, %vm370
      %vm2108 = vmand %vm2100, %vm370
      %vm2109 = vmand %vm2101, %vm370
      %vm2110 = vmand %vm2102, %vm370
      %vm2111 = vmand %vm2103, %vm370
      %vm2112 = vmand %vm2104, %vm370
      %v2113 = vsel %vm2105, 1, 0
      %v2114 = vsel %vm2106, 1, 0
      %v2115 = vsel %vm2107, 1, 0
      %v2116 = vsel %vm2108, 1, 0
      %v2117 = vsel %vm2109, 1, 0
      %v2118 = vsel %vm2110, 1, 0
      %v2119 = vsel %vm2111, 1, 0
      %v2120 = vsel %vm2112, 1, 0
      %vm2121 = vcmp.eq.s32.totalorder %v2113, 1
      %vm2122 = vcmp.eq.s32.totalorder %v2114, 1
      %vm2123 = vcmp.eq.s32.totalorder %v2115, 1
      %vm2124 = vcmp.eq.s32.totalorder %v2116, 1
      %vm2125 = vcmp.eq.s32.totalorder %v2117, 1
      %vm2126 = vcmp.eq.s32.totalorder %v2118, 1
      %vm2127 = vcmp.eq.s32.totalorder %v2119, 1
      %vm2128 = vcmp.eq.s32.totalorder %v2120, 1
      %v2129 = vsel %vm2121, %v2057, 0.0
      %v2130 = vsel %vm2122, %v2058, 0.0
      %v2131 = vsel %vm2123, %v2059, 0.0
      %v2132 = vsel %vm2124, %v2060, 0.0
      %v2133 = vsel %vm2125, %v2061, 0.0
      %v2134 = vsel %vm2126, %v2062, 0.0
      %v2135 = vsel %vm2127, %v2063, 0.0
      %v2136 = vsel %vm2128, %v2064, 0.0
      %v2137 = vpack.c.bf16 %v2129, %v2129
      %v2138 = vpack.c.bf16 %v2130, %v2130
      %v2139 = vpack.c.bf16 %v2131, %v2131
      %v2140 = vpack.c.bf16 %v2132, %v2132
      %v2141 = vpack.c.bf16 %v2133, %v2133
      %v2142 = vpack.c.bf16 %v2134, %v2134
      %v2143 = vpack.c.bf16 %v2135, %v2135
      %v2144 = vpack.c.bf16 %v2136, %v2136
      %s2145 = scalar_lea.vmem %s3, 384
      %v2146 = vld [vmem:[%s2145] sm:$0xf]
      %v2147 = vld [vmem:[%s2145 + $0x4] sm:$0xf]
      %v2148 = vld [vmem:[%s2145 + $0x8] sm:$0xf]
      %v2149 = vld [vmem:[%s2145 + $0xc] sm:$0xf]
      %v2150 = vld [vmem:[%s2145 + $0x10] sm:$0xf]
      %v2151 = vld [vmem:[%s2145 + $0x14] sm:$0xf]
      %v2152 = vld [vmem:[%s2145 + $0x18] sm:$0xf]
      %v2153 = vld [vmem:[%s2145 + $0x1c] sm:$0xf]
      %v2154 = vld [vmem:[%s2145 + $0x20] sm:$0xf]
      %v2155 = vld [vmem:[%s2145 + $0x24] sm:$0xf]
      %v2156 = vld [vmem:[%s2145 + $0x28] sm:$0xf]
      %v2157 = vld [vmem:[%s2145 + $0x2c] sm:$0xf]
      %v2158 = vld [vmem:[%s2145 + $0x30] sm:$0xf]
      %v2159 = vld [vmem:[%s2145 + $0x34] sm:$0xf]
      %v2160 = vld [vmem:[%s2145 + $0x38] sm:$0xf]
      %v2161 = vld [vmem:[%s2145 + $0x3c] sm:$0xf]
      %v2170 = vunpack.c.l.b16 %v2137
      %v2171 = vunpack.c.l.b16 %v2138
      %v2172 = vunpack.c.l.b16 %v2139
      %v2173 = vunpack.c.l.b16 %v2140
      %v2174 = vunpack.c.l.b16 %v2141
      %v2175 = vunpack.c.l.b16 %v2142
      %v2176 = vunpack.c.l.b16 %v2143
      %v2177 = vunpack.c.l.b16 %v2144
      %v2178 = vpack.c.b16 %v2171, %v2170
      %v2179 = vpack.c.b16 %v2173, %v2172
      %v2180 = vpack.c.b16 %v2175, %v2174
      %v2181 = vpack.c.b16 %v2177, %v2176
      %v2202 = vunpack.c.l.b16 %v2146
      %v2203 = vunpack.c.l.b16 %v2147
      %v2204 = vunpack.c.l.b16 %v2148
      %v2205 = vunpack.c.l.b16 %v2149
      %v2206 = vunpack.c.l.b16 %v2150
      %v2207 = vunpack.c.l.b16 %v2151
      %v2208 = vunpack.c.l.b16 %v2152
      %v2209 = vunpack.c.l.b16 %v2153
      %v2210 = vunpack.c.l.b16 %v2154
      %v2211 = vunpack.c.l.b16 %v2155
      %v2212 = vunpack.c.l.b16 %v2156
      %v2213 = vunpack.c.l.b16 %v2157
      %v2214 = vunpack.c.l.b16 %v2158
      %v2215 = vunpack.c.l.b16 %v2159
      %v2216 = vunpack.c.l.b16 %v2160
      %v2217 = vunpack.c.l.b16 %v2161
      %v2218 = vpack.c.b16 %v2203, %v2202
      %v2219 = vpack.c.b16 %v2205, %v2204
      %v2220 = vpack.c.b16 %v2207, %v2206
      %v2221 = vpack.c.b16 %v2209, %v2208
      %v2222 = vpack.c.b16 %v2211, %v2210
      %v2223 = vpack.c.b16 %v2213, %v2212
      %v2224 = vpack.c.b16 %v2215, %v2214
      %v2225 = vpack.c.b16 %v2217, %v2216
      %2234 = vmatprep.subr.bf16.mxu0 0
      %2235 = vmatpush1.bf16.msra.mxu0 %v2218
      %2236 = vmatprep.subr.bf16.mxu0 0
      %2237 = vmatpush1.bf16.msra.mxu0 %v2219
      %2238 = vmatprep.subr.bf16.mxu0 0
      %2239 = vmatpush1.bf16.msra.mxu0 %v2220
      %2240 = vmatprep.subr.bf16.mxu0 0
      %2241 = vmatpush1.bf16.msra.mxu0 %v2221
      %2242 = vmatprep.subr.bf16.mxu0 0
      %2243 = vmatpush1.bf16.msra.mxu0 %v2222
      %2244 = vmatprep.subr.bf16.mxu0 0
      %2245 = vmatpush1.bf16.msra.mxu0 %v2223
      %2246 = vmatprep.subr.bf16.mxu0 0
      %2247 = vmatpush1.bf16.msra.mxu0 %v2224
      %2248 = vmatprep.subr.bf16.mxu0 0
      %2249 = vmatpush1.bf16.msra.mxu0 %v2225
      %2250 = vmatprep.subr.bf16.mxu0 0
      %2251 = vmatpush1.bf16.msra.mxu0 0
      %2252 = vmatprep.subr.bf16.mxu0 0
      %2253 = vmatpush1.bf16.msra.mxu0 0
      %2254 = vmatprep.subr.bf16.mxu0 0
      %2255 = vmatpush1.bf16.msra.mxu0 0
      %2256 = vmatprep.subr.bf16.mxu0 0
      %2257 = vmatpush1.bf16.msra.mxu0 0
      %2258 = vmatprep.subr.bf16.mxu0 0
      %2259 = vmatpush1.bf16.msra.mxu0 0
      %2260 = vmatprep.subr.bf16.mxu0 0
      %2261 = vmatpush1.bf16.msra.mxu0 0
      %2262 = vmatprep.subr.bf16.mxu0 0
      %2263 = vmatpush1.bf16.msra.mxu0 0
      %2264 = vmatprep.subr.bf16.mxu0 0
      %2265 = vmatpush1.bf16.msra.mxu0 0
      %2266 = vmatprep.mubr.bf16.mxu0 0
      %2267 = vmatmul.mubr.bf16.gmra.mrb[0].mxu0 %v2178
      %v2268 = vpop.f32.mrb[0].mxu0
      %v2269 = vadd.f32 0.0, %v2268
      %v2270 = vpop.f32.mrb[0].mxu0
      %v2271 = vpop.f32.mrb[0].mxu0
      %v2272 = vadd.f32 0.0, %v2271
      %v2273 = vpop.f32.mrb[0].mxu0
      %2274 = vmatprep.mubr.bf16.mxu0 0
      %2275 = vmatmul.mubr.bf16.gmra.mrb[0].mxu0 %v2179
      %v2276 = vpop.f32.mrb[0].mxu0
      %v2277 = vadd.f32 0.0, %v2276
      %v2278 = vpop.f32.mrb[0].mxu0
      %v2279 = vpop.f32.mrb[0].mxu0
      %v2280 = vadd.f32 0.0, %v2279
      %v2281 = vpop.f32.mrb[0].mxu0
      %2282 = vmatprep.mubr.bf16.mxu0 0
      %2283 = vmatmul.mubr.bf16.gmra.mrb[0].mxu0 %v2180
      %v2284 = vpop.f32.mrb[0].mxu0
      %v2285 = vadd.f32 0.0, %v2284
      %v2286 = vpop.f32.mrb[0].mxu0
      %v2287 = vpop.f32.mrb[0].mxu0
      %v2288 = vadd.f32 0.0, %v2287
      %v2289 = vpop.f32.mrb[0].mxu0
      %2290 = vmatprep.mubr.bf16.mxu0 0
      %2291 = vmatmul.mubr.bf16.gmra.mrb[0].mxu0 %v2181
      %v2292 = vpop.f32.mrb[0].mxu0
      %v2293 = vadd.f32 0.0, %v2292
      %v2294 = vpop.f32.mrb[0].mxu0
      %v2295 = vpop.f32.mrb[0].mxu0
      %v2296 = vadd.f32 0.0, %v2295
      %v2297 = vpop.f32.mrb[0].mxu0
      %2298 = vdwg.mxu0
      %v2299 = vadd.f32 %v2013, %v2269
      %v2300 = vadd.f32 %v2014, %v2272
      %v2301 = vadd.f32 %v2015, %v2277
      %v2302 = vadd.f32 %v2016, %v2280
      %v2303 = vadd.f32 %v2017, %v2285
      %v2304 = vadd.f32 %v2018, %v2288
      %v2305 = vadd.f32 %v2019, %v2293
      %v2306 = vadd.f32 %v2020, %v2296
      %v2307 = vld [vmem:[%s2024 + $0x4] sm:$0xf]
      %v2308 = vld [vmem:[%s2024 + $0x24] sm:$0xf]
      %v2309 = vld [vmem:[%s2024 + $0x44] sm:$0xf]
      %v2310 = vld [vmem:[%s2024 + $0x64] sm:$0xf]
      %v2311 = vld [vmem:[%s2024 + $0x84] sm:$0xf]
      %v2312 = vld [vmem:[%s2024 + $0xa4] sm:$0xf]
      %v2313 = vld [vmem:[%s2024 + $0xc4] sm:$0xf]
      %v2314 = vld [vmem:[%s2024 + $0xe4] sm:$0xf]
      %v2315 = vunpack.c.l.bf16 %v2307
      %v2316 = vunpack.c.l.bf16 %v2308
      %v2317 = vunpack.c.l.bf16 %v2309
      %v2318 = vunpack.c.l.bf16 %v2310
      %v2319 = vunpack.c.l.bf16 %v2311
      %v2320 = vunpack.c.l.bf16 %v2312
      %v2321 = vunpack.c.l.bf16 %v2313
      %v2322 = vunpack.c.l.bf16 %v2314
      %v2323 = vmul.f32 %v2315, %v296
      %v2324 = vmul.f32 %v2316, %v296
      %v2325 = vmul.f32 %v2317, %v296
      %v2326 = vmul.f32 %v2318, %v296
      %v2327 = vmul.f32 %v2319, %v296
      %v2328 = vmul.f32 %v2320, %v296
      %v2329 = vmul.f32 %v2321, %v296
      %v2330 = vmul.f32 %v2322, %v296
      %v2331 = vadd.f32 %v2323, %v310
      %v2332 = vadd.f32 %v2324, %v310
      %v2333 = vadd.f32 %v2325, %v310
      %v2334 = vadd.f32 %v2326, %v310
      %v2335 = vadd.f32 %v2327, %v310
      %v2336 = vadd.f32 %v2328, %v310
      %v2337 = vadd.f32 %v2329, %v310
      %v2338 = vadd.f32 %v2330, %v310
      %v2339 = vmax.f32 %v2331, 0.0
      %v2340 = vmax.f32 %v2332, 0.0
      %v2341 = vmax.f32 %v2333, 0.0
      %v2342 = vmax.f32 %v2334, 0.0
      %v2343 = vmax.f32 %v2335, 0.0
      %v2344 = vmax.f32 %v2336, 0.0
      %v2345 = vmax.f32 %v2337, 0.0
      %v2346 = vmax.f32 %v2338, 0.0
      %vm2347 = vmand %vm2089, %vm468
      %vm2348 = vmand %vm2090, %vm468
      %vm2349 = vmand %vm2091, %vm468
      %vm2350 = vmand %vm2092, %vm468
      %vm2351 = vmand %vm2093, %vm468
      %vm2352 = vmand %vm2094, %vm468
      %vm2353 = vmand %vm2095, %vm468
      %vm2354 = vmand %vm2096, %vm468
      %vm2355 = vmand %vm2347, %vm477
      %vm2356 = vmand %vm2348, %vm477
      %vm2357 = vmand %vm2349, %vm477
      %vm2358 = vmand %vm2350, %vm477
      %vm2359 = vmand %vm2351, %vm477
      %vm2360 = vmand %vm2352, %vm477
      %vm2361 = vmand %vm2353, %vm477
      %vm2362 = vmand %vm2354, %vm477
      %v2363 = vsel %vm2355, 1, 0
      %v2364 = vsel %vm2356, 1, 0
      %v2365 = vsel %vm2357, 1, 0
      %v2366 = vsel %vm2358, 1, 0
      %v2367 = vsel %vm2359, 1, 0
      %v2368 = vsel %vm2360, 1, 0
      %v2369 = vsel %vm2361, 1, 0
      %v2370 = vsel %vm2362, 1, 0
      %vm2371 = vcmp.eq.s32.totalorder %v2363, 1
      %vm2372 = vcmp.eq.s32.totalorder %v2364, 1
      %vm2373 = vcmp.eq.s32.totalorder %v2365, 1
      %vm2374 = vcmp.eq.s32.totalorder %v2366, 1
      %vm2375 = vcmp.eq.s32.totalorder %v2367, 1
      %vm2376 = vcmp.eq.s32.totalorder %v2368, 1
      %vm2377 = vcmp.eq.s32.totalorder %v2369, 1
      %vm2378 = vcmp.eq.s32.totalorder %v2370, 1
      %v2379 = vsel %vm2371, %v2339, 0.0
      %v2380 = vsel %vm2372, %v2340, 0.0
      %v2381 = vsel %vm2373, %v2341, 0.0
      %v2382 = vsel %vm2374, %v2342, 0.0
      %v2383 = vsel %vm2375, %v2343, 0.0
      %v2384 = vsel %vm2376, %v2344, 0.0
      %v2385 = vsel %vm2377, %v2345, 0.0
      %v2386 = vsel %vm2378, %v2346, 0.0
      %v2387 = vpack.c.bf16 %v2379, %v2379
      %v2388 = vpack.c.bf16 %v2380, %v2380
      %v2389 = vpack.c.bf16 %v2381, %v2381
      %v2390 = vpack.c.bf16 %v2382, %v2382
      %v2391 = vpack.c.bf16 %v2383, %v2383
      %v2392 = vpack.c.bf16 %v2384, %v2384
      %v2393 = vpack.c.bf16 %v2385, %v2385
      %v2394 = vpack.c.bf16 %v2386, %v2386
      %s2395 = scalar_lea.vmem %s3, 448
      %v2396 = vld [vmem:[%s2395] sm:$0xf]
      %v2397 = vld [vmem:[%s2395 + $0x4] sm:$0xf]
      %v2398 = vld [vmem:[%s2395 + $0x8] sm:$0xf]
      %v2399 = vld [vmem:[%s2395 + $0xc] sm:$0xf]
      %v2400 = vld [vmem:[%s2395 + $0x10] sm:$0xf]
      %v2401 = vld [vmem:[%s2395 + $0x14] sm:$0xf]
      %v2402 = vld [vmem:[%s2395 + $0x18] sm:$0xf]
      %v2403 = vld [vmem:[%s2395 + $0x1c] sm:$0xf]
      %v2404 = vld [vmem:[%s2395 + $0x20] sm:$0xf]
      %v2405 = vld [vmem:[%s2395 + $0x24] sm:$0xf]
      %v2406 = vld [vmem:[%s2395 + $0x28] sm:$0xf]
      %v2407 = vld [vmem:[%s2395 + $0x2c] sm:$0xf]
      %v2408 = vld [vmem:[%s2395 + $0x30] sm:$0xf]
      %v2409 = vld [vmem:[%s2395 + $0x34] sm:$0xf]
      %v2410 = vld [vmem:[%s2395 + $0x38] sm:$0xf]
      %v2411 = vld [vmem:[%s2395 + $0x3c] sm:$0xf]
      %v2420 = vunpack.c.l.b16 %v2387
      %v2421 = vunpack.c.l.b16 %v2388
      %v2422 = vunpack.c.l.b16 %v2389
      %v2423 = vunpack.c.l.b16 %v2390
      %v2424 = vunpack.c.l.b16 %v2391
      %v2425 = vunpack.c.l.b16 %v2392
      %v2426 = vunpack.c.l.b16 %v2393
      %v2427 = vunpack.c.l.b16 %v2394
      %v2428 = vpack.c.b16 %v2421, %v2420
      %v2429 = vpack.c.b16 %v2423, %v2422
      %v2430 = vpack.c.b16 %v2425, %v2424
      %v2431 = vpack.c.b16 %v2427, %v2426
      %v2452 = vunpack.c.l.b16 %v2396
      %v2453 = vunpack.c.l.b16 %v2397
      %v2454 = vunpack.c.l.b16 %v2398
      %v2455 = vunpack.c.l.b16 %v2399
      %v2456 = vunpack.c.l.b16 %v2400
      %v2457 = vunpack.c.l.b16 %v2401
      %v2458 = vunpack.c.l.b16 %v2402
      %v2459 = vunpack.c.l.b16 %v2403
      %v2460 = vunpack.c.l.b16 %v2404
      %v2461 = vunpack.c.l.b16 %v2405
      %v2462 = vunpack.c.l.b16 %v2406
      %v2463 = vunpack.c.l.b16 %v2407
      %v2464 = vunpack.c.l.b16 %v2408
      %v2465 = vunpack.c.l.b16 %v2409
      %v2466 = vunpack.c.l.b16 %v2410
      %v2467 = vunpack.c.l.b16 %v2411
      %v2468 = vpack.c.b16 %v2453, %v2452
      %v2469 = vpack.c.b16 %v2455, %v2454
      %v2470 = vpack.c.b16 %v2457, %v2456
      %v2471 = vpack.c.b16 %v2459, %v2458
      %v2472 = vpack.c.b16 %v2461, %v2460
      %v2473 = vpack.c.b16 %v2463, %v2462
      %v2474 = vpack.c.b16 %v2465, %v2464
      %v2475 = vpack.c.b16 %v2467, %v2466
      %2484 = vmatprep.subr.bf16.mxu0 0
      %2485 = vmatpush1.bf16.msra.mxu0 %v2468
      %2486 = vmatprep.subr.bf16.mxu0 0
      %2487 = vmatpush1.bf16.msra.mxu0 %v2469
      %2488 = vmatprep.subr.bf16.mxu0 0
      %2489 = vmatpush1.bf16.msra.mxu0 %v2470
      %2490 = vmatprep.subr.bf16.mxu0 0
      %2491 = vmatpush1.bf16.msra.mxu0 %v2471
      %2492 = vmatprep.subr.bf16.mxu0 0
      %2493 = vmatpush1.bf16.msra.mxu0 %v2472
      %2494 = vmatprep.subr.bf16.mxu0 0
      %2495 = vmatpush1.bf16.msra.mxu0 %v2473
      %2496 = vmatprep.subr.bf16.mxu0 0
      %2497 = vmatpush1.bf16.msra.mxu0 %v2474
      %2498 = vmatprep.subr.bf16.mxu0 0
      %2499 = vmatpush1.bf16.msra.mxu0 %v2475
      %2500 = vmatprep.subr.bf16.mxu0 0
      %2501 = vmatpush1.bf16.msra.mxu0 0
      %2502 = vmatprep.subr.bf16.mxu0 0
      %2503 = vmatpush1.bf16.msra.mxu0 0
      %2504 = vmatprep.subr.bf16.mxu0 0
      %2505 = vmatpush1.bf16.msra.mxu0 0
      %2506 = vmatprep.subr.bf16.mxu0 0
      %2507 = vmatpush1.bf16.msra.mxu0 0
      %2508 = vmatprep.subr.bf16.mxu0 0
      %2509 = vmatpush1.bf16.msra.mxu0 0
      %2510 = vmatprep.subr.bf16.mxu0 0
      %2511 = vmatpush1.bf16.msra.mxu0 0
      %2512 = vmatprep.subr.bf16.mxu0 0
      %2513 = vmatpush1.bf16.msra.mxu0 0
      %2514 = vmatprep.subr.bf16.mxu0 0
      %2515 = vmatpush1.bf16.msra.mxu0 0
      %2516 = vmatprep.mubr.bf16.mxu0 0
      %2517 = vmatmul.mubr.bf16.gmra.mrb[0].mxu0 %v2428
      %v2518 = vpop.f32.mrb[0].mxu0
      %v2519 = vadd.f32 0.0, %v2518
      %v2520 = vpop.f32.mrb[0].mxu0
      %v2521 = vpop.f32.mrb[0].mxu0
      %v2522 = vadd.f32 0.0, %v2521
      %v2523 = vpop.f32.mrb[0].mxu0
      %2524 = vmatprep.mubr.bf16.mxu0 0
      %2525 = vmatmul.mubr.bf16.gmra.mrb[0].mxu0 %v2429
      %v2526 = vpop.f32.mrb[0].mxu0
      %v2527 = vadd.f32 0.0, %v2526
      %v2528 = vpop.f32.mrb[0].mxu0
      %v2529 = vpop.f32.mrb[0].mxu0
      %v2530 = vadd.f32 0.0, %v2529
      %v2531 = vpop.f32.mrb[0].mxu0
      %2532 = vmatprep.mubr.bf16.mxu0 0
      %2533 = vmatmul.mubr.bf16.gmra.mrb[0].mxu0 %v2430
      %v2534 = vpop.f32.mrb[0].mxu0
      %v2535 = vadd.f32 0.0, %v2534
      %v2536 = vpop.f32.mrb[0].mxu0
      %v2537 = vpop.f32.mrb[0].mxu0
      %v2538 = vadd.f32 0.0, %v2537
      %v2539 = vpop.f32.mrb[0].mxu0
      %2540 = vmatprep.mubr.bf16.mxu0 0
      %2541 = vmatmul.mubr.bf16.gmra.mrb[0].mxu0 %v2431
      %v2542 = vpop.f32.mrb[0].mxu0
      %v2543 = vadd.f32 0.0, %v2542
      %v2544 = vpop.f32.mrb[0].mxu0
      %v2545 = vpop.f32.mrb[0].mxu0
      %v2546 = vadd.f32 0.0, %v2545
      %v2547 = vpop.f32.mrb[0].mxu0
      %2548 = vdwg.mxu0
      %v2549 = vadd.f32 %v2299, %v2519
      %v2550 = vadd.f32 %v2300, %v2522
      %v2551 = vadd.f32 %v2301, %v2527
      %v2552 = vadd.f32 %v2302, %v2530
      %v2553 = vadd.f32 %v2303, %v2535
      %v2554 = vadd.f32 %v2304, %v2538
      %v2555 = vadd.f32 %v2305, %v2543
      %v2556 = vadd.f32 %v2306, %v2546
      %v2557 = vld [vmem:[%s2024] sm:$0xf]
      %v2558 = vld [vmem:[%s2024 + $0x10] sm:$0x1]
      %v2559 = vld [vmem:[%s2024 + $0x20] sm:$0xf]
      %v2560 = vld [vmem:[%s2024 + $0x30] sm:$0x1]
      %v2561 = vld [vmem:[%s2024 + $0x40] sm:$0xf]
      %v2562 = vld [vmem:[%s2024 + $0x50] sm:$0x1]
      %v2563 = vld [vmem:[%s2024 + $0x60] sm:$0xf]
      %v2564 = vld [vmem:[%s2024 + $0x70] sm:$0x1]
      %v2565 = vld [vmem:[%s2024 + $0x80] sm:$0xf]
      %v2566 = vld [vmem:[%s2024 + $0x90] sm:$0x1]
      %v2567 = vld [vmem:[%s2024 + $0xa0] sm:$0xf]
      %v2568 = vld [vmem:[%s2024 + $0xb0] sm:$0x1]
      %v2569 = vld [vmem:[%s2024 + $0xc0] sm:$0xf]
      %v2570 = vld [vmem:[%s2024 + $0xd0] sm:$0x1]
      %v2571 = vld [vmem:[%s2024 + $0xe0] sm:$0xf]
      %v2572 = vld [vmem:[%s2024 + $0xf0] sm:$0x1]
      %v2573 = vunpack.c.l.bf16 %v2557
      %v2574 = vunpack.c.l.bf16 %v2558
      %v2575 = vunpack.c.l.bf16 %v2559
      %v2576 = vunpack.c.l.bf16 %v2560
      %v2577 = vunpack.c.l.bf16 %v2561
      %v2578 = vunpack.c.l.bf16 %v2562
      %v2579 = vunpack.c.l.bf16 %v2563
      %v2580 = vunpack.c.l.bf16 %v2564
      %v2581 = vunpack.c.l.bf16 %v2565
      %v2582 = vunpack.c.l.bf16 %v2566
      %v2583 = vunpack.c.l.bf16 %v2567
      %v2584 = vunpack.c.l.bf16 %v2568
      %v2585 = vunpack.c.l.bf16 %v2569
      %v2586 = vunpack.c.l.bf16 %v2570
      %v2587 = vunpack.c.l.bf16 %v2571
      %v2588 = vunpack.c.l.bf16 %v2572
      %v2589 = vmul.f32 %v2573, %v296
      %v2590 = vmul.f32 %v2574, %v296
      %v2591 = vmul.f32 %v2575, %v296
      %v2592 = vmul.f32 %v2576, %v296
      %v2593 = vmul.f32 %v2577, %v296
      %v2594 = vmul.f32 %v2578, %v296
      %v2595 = vmul.f32 %v2579, %v296
      %v2596 = vmul.f32 %v2580, %v296
      %v2597 = vmul.f32 %v2581, %v296
      %v2598 = vmul.f32 %v2582, %v296
      %v2599 = vmul.f32 %v2583, %v296
      %v2600 = vmul.f32 %v2584, %v296
      %v2601 = vmul.f32 %v2585, %v296
      %v2602 = vmul.f32 %v2586, %v296
      %v2603 = vmul.f32 %v2587, %v296
      %v2604 = vmul.f32 %v2588, %v296
      %v2605 = vadd.f32 %v2589, %v310
      %v2606 = vadd.f32 %v2590, %v310
      %v2607 = vadd.f32 %v2591, %v310
      %v2608 = vadd.f32 %v2592, %v310
      %v2609 = vadd.f32 %v2593, %v310
      %v2610 = vadd.f32 %v2594, %v310
      %v2611 = vadd.f32 %v2595, %v310
      %v2612 = vadd.f32 %v2596, %v310
      %v2613 = vadd.f32 %v2597, %v310
      %v2614 = vadd.f32 %v2598, %v310
      %v2615 = vadd.f32 %v2599, %v310
      %v2616 = vadd.f32 %v2600, %v310
      %v2617 = vadd.f32 %v2601, %v310
      %v2618 = vadd.f32 %v2602, %v310
      %v2619 = vadd.f32 %v2603, %v310
      %v2620 = vadd.f32 %v2604, %v310
      %v2621 = vmax.f32 %v2605, 0.0
      %v2622 = vmax.f32 %v2606, 0.0
      %v2623 = vmax.f32 %v2607, 0.0
      %v2624 = vmax.f32 %v2608, 0.0
      %v2625 = vmax.f32 %v2609, 0.0
      %v2626 = vmax.f32 %v2610, 0.0
      %v2627 = vmax.f32 %v2611, 0.0
      %v2628 = vmax.f32 %v2612, 0.0
      %v2629 = vmax.f32 %v2613, 0.0
      %v2630 = vmax.f32 %v2614, 0.0
      %v2631 = vmax.f32 %v2615, 0.0
      %v2632 = vmax.f32 %v2616, 0.0
      %v2633 = vmax.f32 %v2617, 0.0
      %v2634 = vmax.f32 %v2618, 0.0
      %v2635 = vmax.f32 %v2619, 0.0
      %v2636 = vmax.f32 %v2620, 0.0
      %vm2637 = vmand %vm2089, %vm890
      %vm2638 = vmand %vm2090, %vm890
      %vm2639 = vmand %vm2091, %vm890
      %vm2640 = vmand %vm2092, %vm890
      %vm2641 = vmand %vm2093, %vm890
      %vm2642 = vmand %vm2094, %vm890
      %vm2643 = vmand %vm2095, %vm890
      %vm2644 = vmand %vm2096, %vm890
      %vm2645 = vmand %vm2637, %vm899
      %vm2646 = vmand %vm2638, %vm899
      %vm2647 = vmand %vm2639, %vm899
      %vm2648 = vmand %vm2640, %vm899
      %vm2649 = vmand %vm2641, %vm899
      %vm2650 = vmand %vm2642, %vm899
      %vm2651 = vmand %vm2643, %vm899
      %vm2652 = vmand %vm2644, %vm899
      %v2653 = vsel %vm2645, 1, 0
      %v2654 = vsel %vm2646, 1, 0
      %v2655 = vsel %vm2647, 1, 0
      %v2656 = vsel %vm2648, 1, 0
      %v2657 = vsel %vm2649, 1, 0
      %v2658 = vsel %vm2650, 1, 0
      %v2659 = vsel %vm2651, 1, 0
      %v2660 = vsel %vm2652, 1, 0
      %vm2661 = vcmp.eq.s32.totalorder %v2653, 1
      %vm2662 = vcmp.eq.s32.totalorder %v2654, 1
      %vm2663 = vcmp.eq.s32.totalorder %v2655, 1
      %vm2664 = vcmp.eq.s32.totalorder %v2656, 1
      %vm2665 = vcmp.eq.s32.totalorder %v2657, 1
      %vm2666 = vcmp.eq.s32.totalorder %v2658, 1
      %vm2667 = vcmp.eq.s32.totalorder %v2659, 1
      %vm2668 = vcmp.eq.s32.totalorder %v2660, 1
      %v2685 = vrot.slane %v2621, 1
      %v2686 = vrot.slane %v2622, 1
      %v2687 = vsel %vm940, %v2685, %v2686
      %v2688 = vrot.slane %v2623, 1
      %v2689 = vrot.slane %v2624, 1
      %v2690 = vsel %vm940, %v2688, %v2689
      %v2691 = vrot.slane %v2625, 1
      %v2692 = vrot.slane %v2626, 1
      %v2693 = vsel %vm940, %v2691, %v2692
      %v2694 = vrot.slane %v2627, 1
      %v2695 = vrot.slane %v2628, 1
      %v2696 = vsel %vm940, %v2694, %v2695
      %v2697 = vrot.slane %v2629, 1
      %v2698 = vrot.slane %v2630, 1
      %v2699 = vsel %vm940, %v2697, %v2698
      %v2700 = vrot.slane %v2631, 1
      %v2701 = vrot.slane %v2632, 1
      %v2702 = vsel %vm940, %v2700, %v2701
      %v2703 = vrot.slane %v2633, 1
      %v2704 = vrot.slane %v2634, 1
      %v2705 = vsel %vm940, %v2703, %v2704
      %v2706 = vrot.slane %v2635, 1
      %v2707 = vrot.slane %v2636, 1
      %v2708 = vsel %vm940, %v2706, %v2707
      %v2717 = vsel %vm2661, %v2687, 0.0
      %v2718 = vsel %vm2662, %v2690, 0.0
      %v2719 = vsel %vm2663, %v2693, 0.0
      %v2720 = vsel %vm2664, %v2696, 0.0
      %v2721 = vsel %vm2665, %v2699, 0.0
      %v2722 = vsel %vm2666, %v2702, 0.0
      %v2723 = vsel %vm2667, %v2705, 0.0
      %v2724 = vsel %vm2668, %v2708, 0.0
      %v2725 = vpack.c.bf16 %v2717, %v2717
      %v2726 = vpack.c.bf16 %v2718, %v2718
      %v2727 = vpack.c.bf16 %v2719, %v2719
      %v2728 = vpack.c.bf16 %v2720, %v2720
      %v2729 = vpack.c.bf16 %v2721, %v2721
      %v2730 = vpack.c.bf16 %v2722, %v2722
      %v2731 = vpack.c.bf16 %v2723, %v2723
      %v2732 = vpack.c.bf16 %v2724, %v2724
      %s2733 = scalar_lea.vmem %s3, 512
      %v2734 = vld [vmem:[%s2733] sm:$0xf]
      %v2735 = vld [vmem:[%s2733 + $0x4] sm:$0xf]
      %v2736 = vld [vmem:[%s2733 + $0x8] sm:$0xf]
      %v2737 = vld [vmem:[%s2733 + $0xc] sm:$0xf]
      %v2738 = vld [vmem:[%s2733 + $0x10] sm:$0xf]
      %v2739 = vld [vmem:[%s2733 + $0x14] sm:$0xf]
      %v2740 = vld [vmem:[%s2733 + $0x18] sm:$0xf]
      %v2741 = vld [vmem:[%s2733 + $0x1c] sm:$0xf]
      %v2742 = vld [vmem:[%s2733 + $0x20] sm:$0xf]
      %v2743 = vld [vmem:[%s2733 + $0x24] sm:$0xf]
      %v2744 = vld [vmem:[%s2733 + $0x28] sm:$0xf]
      %v2745 = vld [vmem:[%s2733 + $0x2c] sm:$0xf]
      %v2746 = vld [vmem:[%s2733 + $0x30] sm:$0xf]
      %v2747 = vld [vmem:[%s2733 + $0x34] sm:$0xf]
      %v2748 = vld [vmem:[%s2733 + $0x38] sm:$0xf]
      %v2749 = vld [vmem:[%s2733 + $0x3c] sm:$0xf]
      %v2758 = vunpack.c.l.b16 %v2725
      %v2759 = vunpack.c.l.b16 %v2726
      %v2760 = vunpack.c.l.b16 %v2727
      %v2761 = vunpack.c.l.b16 %v2728
      %v2762 = vunpack.c.l.b16 %v2729
      %v2763 = vunpack.c.l.b16 %v2730
      %v2764 = vunpack.c.l.b16 %v2731
      %v2765 = vunpack.c.l.b16 %v2732
      %v2766 = vpack.c.b16 %v2759, %v2758
      %v2767 = vpack.c.b16 %v2761, %v2760
      %v2768 = vpack.c.b16 %v2763, %v2762
      %v2769 = vpack.c.b16 %v2765, %v2764
      %v2790 = vunpack.c.l.b16 %v2734
      %v2791 = vunpack.c.l.b16 %v2735
      %v2792 = vunpack.c.l.b16 %v2736
      %v2793 = vunpack.c.l.b16 %v2737
      %v2794 = vunpack.c.l.b16 %v2738
      %v2795 = vunpack.c.l.b16 %v2739
      %v2796 = vunpack.c.l.b16 %v2740
      %v2797 = vunpack.c.l.b16 %v2741
      %v2798 = vunpack.c.l.b16 %v2742
      %v2799 = vunpack.c.l.b16 %v2743
      %v2800 = vunpack.c.l.b16 %v2744
      %v2801 = vunpack.c.l.b16 %v2745
      %v2802 = vunpack.c.l.b16 %v2746
      %v2803 = vunpack.c.l.b16 %v2747
      %v2804 = vunpack.c.l.b16 %v2748
      %v2805 = vunpack.c.l.b16 %v2749
      %v2806 = vpack.c.b16 %v2791, %v2790
      %v2807 = vpack.c.b16 %v2793, %v2792
      %v2808 = vpack.c.b16 %v2795, %v2794
      %v2809 = vpack.c.b16 %v2797, %v2796
      %v2810 = vpack.c.b16 %v2799, %v2798
      %v2811 = vpack.c.b16 %v2801, %v2800
      %v2812 = vpack.c.b16 %v2803, %v2802
      %v2813 = vpack.c.b16 %v2805, %v2804
      %2822 = vmatprep.subr.bf16.mxu0 0
      %2823 = vmatpush1.bf16.msra.mxu0 %v2806
      %2824 = vmatprep.subr.bf16.mxu0 0
      %2825 = vmatpush1.bf16.msra.mxu0 %v2807
      %2826 = vmatprep.subr.bf16.mxu0 0
      %2827 = vmatpush1.bf16.msra.mxu0 %v2808
      %2828 = vmatprep.subr.bf16.mxu0 0
      %2829 = vmatpush1.bf16.msra.mxu0 %v2809
      %2830 = vmatprep.subr.bf16.mxu0 0
      %2831 = vmatpush1.bf16.msra.mxu0 %v2810
      %2832 = vmatprep.subr.bf16.mxu0 0
      %2833 = vmatpush1.bf16.msra.mxu0 %v2811
      %2834 = vmatprep.subr.bf16.mxu0 0
      %2835 = vmatpush1.bf16.msra.mxu0 %v2812
      %2836 = vmatprep.subr.bf16.mxu0 0
      %2837 = vmatpush1.bf16.msra.mxu0 %v2813
      %2838 = vmatprep.subr.bf16.mxu0 0
      %2839 = vmatpush1.bf16.msra.mxu0 0
      %2840 = vmatprep.subr.bf16.mxu0 0
      %2841 = vmatpush1.bf16.msra.mxu0 0
      %2842 = vmatprep.subr.bf16.mxu0 0
      %2843 = vmatpush1.bf16.msra.mxu0 0
      %2844 = vmatprep.subr.bf16.mxu0 0
      %2845 = vmatpush1.bf16.msra.mxu0 0
      %2846 = vmatprep.subr.bf16.mxu0 0
      %2847 = vmatpush1.bf16.msra.mxu0 0
      %2848 = vmatprep.subr.bf16.mxu0 0
      %2849 = vmatpush1.bf16.msra.mxu0 0
      %2850 = vmatprep.subr.bf16.mxu0 0
      %2851 = vmatpush1.bf16.msra.mxu0 0
      %2852 = vmatprep.subr.bf16.mxu0 0
      %2853 = vmatpush1.bf16.msra.mxu0 0
      %2854 = vmatprep.mubr.bf16.mxu0 0
      %2855 = vmatmul.mubr.bf16.gmra.mrb[0].mxu0 %v2766
      %v2856 = vpop.f32.mrb[0].mxu0
      %v2857 = vadd.f32 0.0, %v2856
      %v2858 = vpop.f32.mrb[0].mxu0
      %v2859 = vpop.f32.mrb[0].mxu0
      %v2860 = vadd.f32 0.0, %v2859
      %v2861 = vpop.f32.mrb[0].mxu0
      %2862 = vmatprep.mubr.bf16.mxu0 0
      %2863 = vmatmul.mubr.bf16.gmra.mrb[0].mxu0 %v2767
      %v2864 = vpop.f32.mrb[0].mxu0
      %v2865 = vadd.f32 0.0, %v2864
      %v2866 = vpop.f32.mrb[0].mxu0
      %v2867 = vpop.f32.mrb[0].mxu0
      %v2868 = vadd.f32 0.0, %v2867
      %v2869 = vpop.f32.mrb[0].mxu0
      %2870 = vmatprep.mubr.bf16.mxu0 0
      %2871 = vmatmul.mubr.bf16.gmra.mrb[0].mxu0 %v2768
      %v2872 = vpop.f32.mrb[0].mxu0
      %v2873 = vadd.f32 0.0, %v2872
      %v2874 = vpop.f32.mrb[0].mxu0
      %v2875 = vpop.f32.mrb[0].mxu0
      %v2876 = vadd.f32 0.0, %v2875
      %v2877 = vpop.f32.mrb[0].mxu0
      %2878 = vmatprep.mubr.bf16.mxu0 0
      %2879 = vmatmul.mubr.bf16.gmra.mrb[0].mxu0 %v2769
      %v2880 = vpop.f32.mrb[0].mxu0
      %v2881 = vadd.f32 0.0, %v2880
      %v2882 = vpop.f32.mrb[0].mxu0
      %v2883 = vpop.f32.mrb[0].mxu0
      %v2884 = vadd.f32 0.0, %v2883
      %v2885 = vpop.f32.mrb[0].mxu0
      %2886 = vdwg.mxu0
      %v2887 = vadd.f32 %v2549, %v2857
      %v2888 = vadd.f32 %v2550, %v2860
      %v2889 = vadd.f32 %v2551, %v2865
      %v2890 = vadd.f32 %v2552, %v2868
      %v2891 = vadd.f32 %v2553, %v2873
      %v2892 = vadd.f32 %v2554, %v2876
      %v2893 = vadd.f32 %v2555, %v2881
      %v2894 = vadd.f32 %v2556, %v2884
      %v2895 = vpack.c.bf16 %v2888, %v2887
      %v2896 = vpack.c.bf16 %v2890, %v2889
      %v2897 = vpack.c.bf16 %v2892, %v2891
      %v2898 = vpack.c.bf16 %v2894, %v2893
      %v2903 = vunpack.c.l.b16 %v2895
      %v2904 = vunpack.c.h.b16 %v2895
      %v2905 = vunpack.c.l.b16 %v2896
      %v2906 = vunpack.c.h.b16 %v2896
      %v2907 = vunpack.c.l.b16 %v2897
      %v2908 = vunpack.c.h.b16 %v2897
      %v2909 = vunpack.c.l.b16 %v2898
      %v2910 = vunpack.c.h.b16 %v2898
      %v2911 = vpack.c.b16 %v2903, %v2903
      %v2912 = vpack.c.b16 %v2904, %v2904
      %v2913 = vpack.c.b16 %v2905, %v2905
      %v2914 = vpack.c.b16 %v2906, %v2906
      %v2915 = vpack.c.b16 %v2907, %v2907
      %v2916 = vpack.c.b16 %v2908, %v2908
      %v2917 = vpack.c.b16 %v2909, %v2909
      %v2918 = vpack.c.b16 %v2910, %v2910
      %2927 = vst [vmem:[%s250] sm:$0xf] %v2911
      %2928 = vst [vmem:[%s250 + $0x4] sm:$0xf] %v2912
      %2929 = vst [vmem:[%s250 + $0x8] sm:$0xf] %v2913
      %2930 = vst [vmem:[%s250 + $0xc] sm:$0xf] %v2914
      %2931 = vst [vmem:[%s250 + $0x10] sm:$0xf] %v2915
      %2932 = vst [vmem:[%s250 + $0x14] sm:$0xf] %v2916
      %2933 = vst [vmem:[%s250 + $0x18] sm:$0xf] %v2917
      %2934 = vst [vmem:[%s250 + $0x1c] sm:$0xf] %v2918
      %v2935 = vadd.f32 %v2887, %v2888
      %v2936 = vadd.f32 %v2935, %v2889
      %v2937 = vadd.f32 %v2936, %v2890
      %v2938 = vadd.f32 %v2937, %v2891
      %v2939 = vadd.f32 %v2938, %v2892
      %v2940 = vadd.f32 %v2939, %v2893
      %v2941 = vadd.f32 %v2940, %v2894
      %v2942 = vrot.slane %v2941, 4
      %v2943 = vadd.f32 %v2941, %v2942
      %v2944 = vrot.slane %v2943, 2
      %v2945 = vadd.f32 %v2943, %v2944
      %v2946 = vrot.slane %v2945, 1
      %v2947 = vadd.f32 %v2945, %v2946
      %v2948 = vmul.f32 %v2887, %v2887
      %v2949 = vmul.f32 %v2888, %v2888
      %v2950 = vmul.f32 %v2889, %v2889
      %v2951 = vmul.f32 %v2890, %v2890
      %v2952 = vmul.f32 %v2891, %v2891
      %v2953 = vmul.f32 %v2892, %v2892
      %v2954 = vmul.f32 %v2893, %v2893
      %v2955 = vmul.f32 %v2894, %v2894
      %v2956 = vadd.f32 %v2948, %v2949
      %v2957 = vadd.f32 %v2956, %v2950
      %v2958 = vadd.f32 %v2957, %v2951
      %v2959 = vadd.f32 %v2958, %v2952
      %v2960 = vadd.f32 %v2959, %v2953
      %v2961 = vadd.f32 %v2960, %v2954
      %v2962 = vadd.f32 %v2961, %v2955
      %v2963 = vrot.slane %v2962, 4
      %v2964 = vadd.f32 %v2962, %v2963
      %v2965 = vrot.slane %v2964, 2
      %v2966 = vadd.f32 %v2964, %v2965
      %v2967 = vrot.slane %v2966, 1
      %v2968 = vadd.f32 %v2966, %v2967
      %vm2969 = vcmp.eq.s32.totalorder %v272, 0
      %vm2970 = vcmp.eq.s32.totalorder %v272, 1
      %v2971 = vsel %vm2970, %v2968, 0.0
      %v2972 = vsel %vm2969, %v2947, %v2971
      %2973 = vst [vmem:[%s257] sm:$0xff] %v2972
      %s2974 = sadd.s32 %s21, %s22
      %s2975 = smul.u32 8, %s2974
      %p2976 = scmp.lt.s32.totalorder %s2975, 15
      %s2977 = scalar_select %p2976, %s2975, 15
      %s2978 = smul.addr %s2977, 4
      %s2979 = scalar_lea.vmem %s4, %s2978
      %s2980 = sadd.s32 %s21, %s22
      %p2981 = scmp.lt.s32.totalorder %s2980, 1
      %s2982 = scalar_select %p2981, %s2980, 1
      %s2983 = smul.addr %s2982, 8
      %s2984 = scalar_lea.vmem %s5, %s2983
      // Predicated region
      $region37: #{bottleneck_forward.6} parent=35 // pred_check
        %p2985 = pneg %p138
      $region38: #{bottleneck_forward.6} parent=35 // pred_check_branch
        %2987 = sbr.rel (%p2985) target = $region40
      $region39: #{bottleneck_forward.6} parent=35 // pred_region
        %s2988 = sadd.s32 %s21, %s22
        %s2989 = smul.u32 8, %s2988
      $region40: #{bottleneck_forward.6} parent=35 // pred_fallthru
        _
      // Predicated region
      $region41: #{bottleneck_forward.6} parent=35 // pred_check
        %p2990 = pneg %p166
      $region42: #{bottleneck_forward.6} parent=35 // pred_check_branch
        %2992 = sbr.rel (%p2990) target = $region44
      $region43: #{bottleneck_forward.6} parent=35 // pred_region
        %s2993 = sadd.s32 %s21, %s22
      $region44: #{bottleneck_forward.6} parent=35 // pred_fallthru
        _
    $region36: #{bottleneck_forward.6} parent=5 // pred_fallthru
      _
    %p2994 = scmp.le.s32.totalorder 2, %s12
    // Predicated region
    $region45: #{bottleneck_forward.6} parent=5 // pred_check
      %p2995 = pneg %p2994
    $region46: #{bottleneck_forward.6} parent=5 // pred_check_branch
      %2997 = sbr.rel (%p2995) target = $region48
    $region47: #{bottleneck_forward.6} parent=5 // pred_region
      %s2998 = ssub.s32 %s12, 2
      // Predicated region
      $region49: #{bottleneck_forward.6} parent=47 // pred_check
        %p2999 = pneg %p144
      $region50: #{bottleneck_forward.6} parent=47 // pred_check_branch
        %3001 = sbr.rel (%p2999) target = $region52
      $region51: #{bottleneck_forward.6} parent=47 // pred_region
        %s3002 = sadd.s32 %s23, %s24
        %s3003 = smul.u32 8, %s3002
        %p3004 = scmp.lt.s32.totalorder %s3003, 15
        %s3005 = scalar_select %p3004, %s3003, 15
        %s3006 = smul.addr %s3005, 4
        %s3007 = scalar_lea.vmem %s4, %s3006
      $region52: #{bottleneck_forward.6} parent=47 // pred_fallthru
        _
      // Predicated region
      $region53: #{bottleneck_forward.6} parent=47 // pred_check
        %p3008 = pneg %p172
      $region54: #{bottleneck_forward.6} parent=47 // pred_check_branch
        %3010 = sbr.rel (%p3008) target = $region56
      $region55: #{bottleneck_forward.6} parent=47 // pred_region
        %s3011 = sadd.s32 %s23, %s24
        %p3012 = scmp.lt.s32.totalorder %s3011, 1
        %s3013 = scalar_select %p3012, %s3011, 1
        %s3014 = smul.addr %s3013, 8
        %s3015 = scalar_lea.vmem %s5, %s3014
      $region56: #{bottleneck_forward.6} parent=47 // pred_fallthru
        _
    $region48: #{bottleneck_forward.6} parent=5 // pred_fallthru
      _
  $region6: #{bottleneck_forward.6} parent=0 // loop_footer
    %s16 = sadd.s32 1, %s12
  $region7: #{bottleneck_forward.6} parent=0 // loop_footer_branch
    %11 = sbr.rel target = $region3
  $region8: #{bottleneck_forward.6} parent=0 // loop_exit
    _

// kernel: bottleneck_forward.8
$region0: #{bottleneck_forward.8}
  #allocation0 [shape = 'u32[]', space=smem, size = 0x4, offset = 0x4, fixed_abs, tag = 'smem constant byte address 0x4 - core index']
  #allocation1 [shape = 'u32[144,128]{1,0:T(1,128)}', space=vmem, size = 0x12000, scoped, tag = 'internal scratch']
  %s0 = inlined_call_operand.vmem [shape: bf16[128,128], index: 0, kind: input, shape index: {}]
  %s1 = inlined_call_operand.vmem [shape: bf16[128,128], index: 1, kind: input, shape index: {}]
  %s2 = inlined_call_operand.vmem [shape: bf16[128,128], index: 2, kind: output, shape index: {0}]
  %s3 = inlined_call_operand.vmem [shape: f32[8,128], index: 3, kind: output, shape index: {1}]
  %4 = xla_tuple %s2, %s3
  %s5 = sld [smem:[#allocation0]]
  $region26: #{bottleneck_forward.8} parent=0
    _
  %s7 = ssub.s32 1, %s5
  %s8 = scalar_select 0, %s7, %s5
  // Predicated region
  $region2: #{bottleneck_forward.8} parent=0 // pred_check
    _
  $region3: #{bottleneck_forward.8} parent=0 // pred_check_branch
    %10 = sbr.rel (0) target = $region5
  $region4: #{bottleneck_forward.8} parent=0 // pred_region
    _
  $region5: #{bottleneck_forward.8} parent=0 // pred_fallthru
    _
  // Predicated region
  $region6: #{bottleneck_forward.8} parent=0 // pred_check
    _
  $region7: #{bottleneck_forward.8} parent=0 // pred_check_branch
    %12 = sbr.rel (0) target = $region9
  $region8: #{bottleneck_forward.8} parent=0 // pred_region
    _
  $region9: #{bottleneck_forward.8} parent=0 // pred_fallthru
    _
  %v14 = vld [vmem:[%s0] sm:$0xf]
  %v15 = vld [vmem:[%s0 + $0x4] sm:$0xf]
  %v16 = vld [vmem:[%s0 + $0x8] sm:$0xf]
  %v17 = vld [vmem:[%s0 + $0xc] sm:$0xf]
  %v18 = vld [vmem:[%s0 + $0x10] sm:$0xf]
  %v19 = vld [vmem:[%s0 + $0x14] sm:$0xf]
  %v20 = vld [vmem:[%s0 + $0x18] sm:$0xf]
  %v21 = vld [vmem:[%s0 + $0x1c] sm:$0xf]
  %v22 = vld [vmem:[%s0 + $0x20] sm:$0xf]
  %v23 = vld [vmem:[%s0 + $0x24] sm:$0xf]
  %v24 = vld [vmem:[%s0 + $0x28] sm:$0xf]
  %v25 = vld [vmem:[%s0 + $0x2c] sm:$0xf]
  %v26 = vld [vmem:[%s0 + $0x30] sm:$0xf]
  %v27 = vld [vmem:[%s0 + $0x34] sm:$0xf]
  %v28 = vld [vmem:[%s0 + $0x38] sm:$0xf]
  %v29 = vld [vmem:[%s0 + $0x3c] sm:$0xf]
  %v30 = vld [vmem:[%s1] sm:$0xf]
  %v31 = vld [vmem:[%s1 + $0x4] sm:$0xf]
  %v32 = vld [vmem:[%s1 + $0x8] sm:$0xf]
  %v33 = vld [vmem:[%s1 + $0xc] sm:$0xf]
  %v34 = vld [vmem:[%s1 + $0x10] sm:$0xf]
  %v35 = vld [vmem:[%s1 + $0x14] sm:$0xf]
  %v36 = vld [vmem:[%s1 + $0x18] sm:$0xf]
  %v37 = vld [vmem:[%s1 + $0x1c] sm:$0xf]
  %v38 = vld [vmem:[%s1 + $0x20] sm:$0xf]
  %v39 = vld [vmem:[%s1 + $0x24] sm:$0xf]
  %v40 = vld [vmem:[%s1 + $0x28] sm:$0xf]
  %v41 = vld [vmem:[%s1 + $0x2c] sm:$0xf]
  %v42 = vld [vmem:[%s1 + $0x30] sm:$0xf]
  %v43 = vld [vmem:[%s1 + $0x34] sm:$0xf]
  %v44 = vld [vmem:[%s1 + $0x38] sm:$0xf]
  %v45 = vld [vmem:[%s1 + $0x3c] sm:$0xf]
  %v62 = vunpack.c.l.b16 %v14
  %v63 = vunpack.c.l.b16 %v15
  %v64 = vunpack.c.l.b16 %v16
  %v65 = vunpack.c.l.b16 %v17
  %v66 = vunpack.c.l.b16 %v18
  %v67 = vunpack.c.l.b16 %v19
  %v68 = vunpack.c.l.b16 %v20
  %v69 = vunpack.c.l.b16 %v21
  %v70 = vunpack.c.l.b16 %v22
  %v71 = vunpack.c.l.b16 %v23
  %v72 = vunpack.c.l.b16 %v24
  %v73 = vunpack.c.l.b16 %v25
  %v74 = vunpack.c.l.b16 %v26
  %v75 = vunpack.c.l.b16 %v27
  %v76 = vunpack.c.l.b16 %v28
  %v77 = vunpack.c.l.b16 %v29
  %v78 = vpack.c.b16 %v63, %v62
  %v79 = vpack.c.b16 %v65, %v64
  %v80 = vpack.c.b16 %v67, %v66
  %v81 = vpack.c.b16 %v69, %v68
  %v82 = vpack.c.b16 %v71, %v70
  %v83 = vpack.c.b16 %v73, %v72
  %v84 = vpack.c.b16 %v75, %v74
  %v85 = vpack.c.b16 %v77, %v76
  %v110 = vunpack.c.l.b16 %v30
  %v111 = vunpack.c.l.b16 %v31
  %v112 = vunpack.c.l.b16 %v32
  %v113 = vunpack.c.l.b16 %v33
  %v114 = vunpack.c.l.b16 %v34
  %v115 = vunpack.c.l.b16 %v35
  %v116 = vunpack.c.l.b16 %v36
  %v117 = vunpack.c.l.b16 %v37
  %v118 = vunpack.c.l.b16 %v38
  %v119 = vunpack.c.l.b16 %v39
  %v120 = vunpack.c.l.b16 %v40
  %v121 = vunpack.c.l.b16 %v41
  %v122 = vunpack.c.l.b16 %v42
  %v123 = vunpack.c.l.b16 %v43
  %v124 = vunpack.c.l.b16 %v44
  %v125 = vunpack.c.l.b16 %v45
  %v126 = vpack.c.b16 %v111, %v110
  %v127 = vpack.c.b16 %v113, %v112
  %v128 = vpack.c.b16 %v115, %v114
  %v129 = vpack.c.b16 %v117, %v116
  %v130 = vpack.c.b16 %v119, %v118
  %v131 = vpack.c.b16 %v121, %v120
  %v132 = vpack.c.b16 %v123, %v122
  %v133 = vpack.c.b16 %v125, %v124
  %142 = vmatprep.subr.bf16.mxu0 0
  %143 = vmatpush1.bf16.msra.mxu0 %v126
  %144 = vmatprep.subr.bf16.mxu0 0
  %145 = vmatpush1.bf16.msra.mxu0 %v127
  %146 = vmatprep.subr.bf16.mxu0 0
  %147 = vmatpush1.bf16.msra.mxu0 %v128
  %148 = vmatprep.subr.bf16.mxu0 0
  %149 = vmatpush1.bf16.msra.mxu0 %v129
  %150 = vmatprep.subr.bf16.mxu0 0
  %151 = vmatpush1.bf16.msra.mxu0 %v130
  %152 = vmatprep.subr.bf16.mxu0 0
  %153 = vmatpush1.bf16.msra.mxu0 %v131
  %154 = vmatprep.subr.bf16.mxu0 0
  %155 = vmatpush1.bf16.msra.mxu0 %v132
  %156 = vmatprep.subr.bf16.mxu0 0
  %157 = vmatpush1.bf16.msra.mxu0 %v133
  %158 = vmatprep.subr.bf16.mxu0 0
  %159 = vmatpush1.bf16.msra.mxu0 0
  %160 = vmatprep.subr.bf16.mxu0 0
  %161 = vmatpush1.bf16.msra.mxu0 0
  %162 = vmatprep.subr.bf16.mxu0 0
  %163 = vmatpush1.bf16.msra.mxu0 0
  %164 = vmatprep.subr.bf16.mxu0 0
  %165 = vmatpush1.bf16.msra.mxu0 0
  %166 = vmatprep.subr.bf16.mxu0 0
  %167 = vmatpush1.bf16.msra.mxu0 0
  %168 = vmatprep.subr.bf16.mxu0 0
  %169 = vmatpush1.bf16.msra.mxu0 0
  %170 = vmatprep.subr.bf16.mxu0 0
  %171 = vmatpush1.bf16.msra.mxu0 0
  %172 = vmatprep.subr.bf16.mxu0 0
  %173 = vmatpush1.bf16.msra.mxu0 0
  %174 = vmatprep.mubr.bf16.mxu0 0
  %175 = vmatmul.mubr.bf16.gmra.mrb[0].mxu0 %v78
  %v176 = vpop.f32.mrb[0].mxu0
  %v177 = vadd.f32 0.0, %v176
  %v178 = vpop.f32.mrb[0].mxu0
  %v179 = vpop.f32.mrb[0].mxu0
  %v180 = vadd.f32 0.0, %v179
  %v181 = vpop.f32.mrb[0].mxu0
  %182 = vmatprep.mubr.bf16.mxu0 0
  %183 = vmatmul.mubr.bf16.gmra.mrb[0].mxu0 %v79
  %v184 = vpop.f32.mrb[0].mxu0
  %v185 = vadd.f32 0.0, %v184
  %v186 = vpop.f32.mrb[0].mxu0
  %v187 = vpop.f32.mrb[0].mxu0
  %v188 = vadd.f32 0.0, %v187
  %v189 = vpop.f32.mrb[0].mxu0
  %190 = vmatprep.mubr.bf16.mxu0 0
  %191 = vmatmul.mubr.bf16.gmra.mrb[0].mxu0 %v80
  %v192 = vpop.f32.mrb[0].mxu0
  %v193 = vadd.f32 0.0, %v192
  %v194 = vpop.f32.mrb[0].mxu0
  %v195 = vpop.f32.mrb[0].mxu0
  %v196 = vadd.f32 0.0, %v195
  %v197 = vpop.f32.mrb[0].mxu0
  %198 = vmatprep.mubr.bf16.mxu0 0
  %199 = vmatmul.mubr.bf16.gmra.mrb[0].mxu0 %v81
  %v200 = vpop.f32.mrb[0].mxu0
  %v201 = vadd.f32 0.0, %v200
  %v202 = vpop.f32.mrb[0].mxu0
  %v203 = vpop.f32.mrb[0].mxu0
  %v204 = vadd.f32 0.0, %v203
  %v205 = vpop.f32.mrb[0].mxu0
  %206 = vmatprep.mubr.bf16.mxu0 0
  %207 = vmatmul.mubr.bf16.gmra.mrb[0].mxu0 %v82
  %v208 = vpop.f32.mrb[0].mxu0
  %v209 = vadd.f32 0.0, %v208
  %v210 = vpop.f32.mrb[0].mxu0
  %v211 = vpop.f32.mrb[0].mxu0
  %v212 = vadd.f32 0.0, %v211
  %v213 = vpop.f32.mrb[0].mxu0
  %214 = vmatprep.mubr.bf16.mxu0 0
  %215 = vmatmul.mubr.bf16.gmra.mrb[0].mxu0 %v83
  %v216 = vpop.f32.mrb[0].mxu0
  %v217 = vadd.f32 0.0, %v216
  %v218 = vpop.f32.mrb[0].mxu0
  %v219 = vpop.f32.mrb[0].mxu0
  %v220 = vadd.f32 0.0, %v219
  %v221 = vpop.f32.mrb[0].mxu0
  %222 = vmatprep.mubr.bf16.mxu0 0
  %223 = vmatmul.mubr.bf16.gmra.mrb[0].mxu0 %v84
  %v224 = vpop.f32.mrb[0].mxu0
  %v225 = vadd.f32 0.0, %v224
  %v226 = vpop.f32.mrb[0].mxu0
  %v227 = vpop.f32.mrb[0].mxu0
  %v228 = vadd.f32 0.0, %v227
  %v229 = vpop.f32.mrb[0].mxu0
  %230 = vmatprep.mubr.bf16.mxu0 0
  %231 = vmatmul.mubr.bf16.gmra.mrb[0].mxu0 %v85
  %v232 = vpop.f32.mrb[0].mxu0
  %v233 = vadd.f32 0.0, %v232
  %v234 = vpop.f32.mrb[0].mxu0
  %v235 = vpop.f32.mrb[0].mxu0
  %v236 = vadd.f32 0.0, %v235
  %v237 = vpop.f32.mrb[0].mxu0
  %238 = vdwg.mxu0
  %v239 = vpack.c.bf16 %v180, %v177
  %v240 = vpack.c.bf16 %v188, %v185
  %v241 = vpack.c.bf16 %v196, %v193
  %v242 = vpack.c.bf16 %v204, %v201
  %v243 = vpack.c.bf16 %v212, %v209
  %v244 = vpack.c.bf16 %v220, %v217
  %v245 = vpack.c.bf16 %v228, %v225
  %v246 = vpack.c.bf16 %v236, %v233
  %v255 = vunpack.c.l.b16 %v239
  %v256 = vunpack.c.h.b16 %v239
  %v257 = vunpack.c.l.b16 %v240
  %v258 = vunpack.c.h.b16 %v240
  %v259 = vunpack.c.l.b16 %v241
  %v260 = vunpack.c.h.b16 %v241
  %v261 = vunpack.c.l.b16 %v242
  %v262 = vunpack.c.h.b16 %v242
  %v263 = vunpack.c.l.b16 %v243
  %v264 = vunpack.c.h.b16 %v243
  %v265 = vunpack.c.l.b16 %v244
  %v266 = vunpack.c.h.b16 %v244
  %v267 = vunpack.c.l.b16 %v245
  %v268 = vunpack.c.h.b16 %v245
  %v269 = vunpack.c.l.b16 %v246
  %v270 = vunpack.c.h.b16 %v246
  %v271 = vpack.c.b16 %v255, %v255
  %v272 = vpack.c.b16 %v256, %v256
  %v273 = vpack.c.b16 %v257, %v257
  %v274 = vpack.c.b16 %v258, %v258
  %v275 = vpack.c.b16 %v259, %v259
  %v276 = vpack.c.b16 %v260, %v260
  %v277 = vpack.c.b16 %v261, %v261
  %v278 = vpack.c.b16 %v262, %v262
  %v279 = vpack.c.b16 %v263, %v263
  %v280 = vpack.c.b16 %v264, %v264
  %v281 = vpack.c.b16 %v265, %v265
  %v282 = vpack.c.b16 %v266, %v266
  %v283 = vpack.c.b16 %v267, %v267
  %v284 = vpack.c.b16 %v268, %v268
  %v285 = vpack.c.b16 %v269, %v269
  %v286 = vpack.c.b16 %v270, %v270
  %303 = vst [vmem:[%s2] sm:$0xf] %v271
  %304 = vst [vmem:[%s2 + $0x4] sm:$0xf] %v272
  %305 = vst [vmem:[%s2 + $0x8] sm:$0xf] %v273
  %306 = vst [vmem:[%s2 + $0xc] sm:$0xf] %v274
  %307 = vst [vmem:[%s2 + $0x10] sm:$0xf] %v275
  %308 = vst [vmem:[%s2 + $0x14] sm:$0xf] %v276
  %309 = vst [vmem:[%s2 + $0x18] sm:$0xf] %v277
  %310 = vst [vmem:[%s2 + $0x1c] sm:$0xf] %v278
  %311 = vst [vmem:[%s2 + $0x20] sm:$0xf] %v279
  %312 = vst [vmem:[%s2 + $0x24] sm:$0xf] %v280
  %313 = vst [vmem:[%s2 + $0x28] sm:$0xf] %v281
  %314 = vst [vmem:[%s2 + $0x2c] sm:$0xf] %v282
  %315 = vst [vmem:[%s2 + $0x30] sm:$0xf] %v283
  %316 = vst [vmem:[%s2 + $0x34] sm:$0xf] %v284
  %317 = vst [vmem:[%s2 + $0x38] sm:$0xf] %v285
  %318 = vst [vmem:[%s2 + $0x3c] sm:$0xf] %v286
  %v319 = vadd.f32 %v177, %v180
  %v320 = vadd.f32 %v319, %v185
  %v321 = vadd.f32 %v320, %v188
  %v322 = vadd.f32 %v321, %v193
  %v323 = vadd.f32 %v322, %v196
  %v324 = vadd.f32 %v323, %v201
  %v325 = vadd.f32 %v324, %v204
  %v326 = vadd.f32 %v325, %v209
  %v327 = vadd.f32 %v326, %v212
  %v328 = vadd.f32 %v327, %v217
  %v329 = vadd.f32 %v328, %v220
  %v330 = vadd.f32 %v329, %v225
  %v331 = vadd.f32 %v330, %v228
  %v332 = vadd.f32 %v331, %v233
  %v333 = vadd.f32 %v332, %v236
  %v334 = vrot.slane %v333, 4
  %v335 = vadd.f32 %v333, %v334
  %v336 = vrot.slane %v335, 2
  %v337 = vadd.f32 %v335, %v336
  %v338 = vrot.slane %v337, 1
  %v339 = vadd.f32 %v337, %v338
  %v340 = vmul.f32 %v177, %v177
  %v341 = vmul.f32 %v180, %v180
  %v342 = vmul.f32 %v185, %v185
  %v343 = vmul.f32 %v188, %v188
  %v344 = vmul.f32 %v193, %v193
  %v345 = vmul.f32 %v196, %v196
  %v346 = vmul.f32 %v201, %v201
  %v347 = vmul.f32 %v204, %v204
  %v348 = vmul.f32 %v209, %v209
  %v349 = vmul.f32 %v212, %v212
  %v350 = vmul.f32 %v217, %v217
  %v351 = vmul.f32 %v220, %v220
  %v352 = vmul.f32 %v225, %v225
  %v353 = vmul.f32 %v228, %v228
  %v354 = vmul.f32 %v233, %v233
  %v355 = vmul.f32 %v236, %v236
  %v356 = vadd.f32 %v340, %v341
  %v357 = vadd.f32 %v356, %v342
  %v358 = vadd.f32 %v357, %v343
  %v359 = vadd.f32 %v358, %v344
  %v360 = vadd.f32 %v359, %v345
  %v361 = vadd.f32 %v360, %v346
  %v362 = vadd.f32 %v361, %v347
  %v363 = vadd.f32 %v362, %v348
  %v364 = vadd.f32 %v363, %v349
  %v365 = vadd.f32 %v364, %v350
  %v366 = vadd.f32 %v365, %v351
  %v367 = vadd.f32 %v366, %v352
  %v368 = vadd.f32 %v367, %v353
  %v369 = vadd.f32 %v368, %v354
  %v370 = vadd.f32 %v369, %v355
  %v371 = vrot.slane %v370, 4
  %v372 = vadd.f32 %v370, %v371
  %v373 = vrot.slane %v372, 2
  %v374 = vadd.f32 %v372, %v373
  %v375 = vrot.slane %v374, 1
  %v376 = vadd.f32 %v374, %v375
  %v377 = vlaneseq
  %v378 = vshrl.u32 %v377, 7
  %vm379 = vcmp.eq.s32.totalorder %v378, 0
  %vm380 = vcmp.eq.s32.totalorder %v378, 1
  %v381 = vsel %vm380, %v376, 0.0
  %v382 = vsel %vm379, %v339, %v381
  %383 = vst [vmem:[%s3] sm:$0xff] %v382
  // Predicated region
  $region10: #{bottleneck_forward.8} parent=0 // pred_check
    _
  $region11: #{bottleneck_forward.8} parent=0 // pred_check_branch
    %385 = sbr.rel (0) target = $region13
  $region12: #{bottleneck_forward.8} parent=0 // pred_region
    _
  $region13: #{bottleneck_forward.8} parent=0 // pred_fallthru
    _
  // Predicated region
  $region14: #{bottleneck_forward.8} parent=0 // pred_check
    _
  $region15: #{bottleneck_forward.8} parent=0 // pred_check_branch
    %387 = sbr.rel (0) target = $region17
  $region16: #{bottleneck_forward.8} parent=0 // pred_region
    _
  $region17: #{bottleneck_forward.8} parent=0 // pred_fallthru
    _
  // Predicated region
  $region18: #{bottleneck_forward.8} parent=0 // pred_check
    _
  $region19: #{bottleneck_forward.8} parent=0 // pred_check_branch
    %389 = sbr.rel (0) target = $region21
  $region20: #{bottleneck_forward.8} parent=0 // pred_region
    _
  $region21: #{bottleneck_forward.8} parent=0 // pred_fallthru
    _
  // Predicated region
  $region22: #{bottleneck_forward.8} parent=0 // pred_check
    _
  $region23: #{bottleneck_forward.8} parent=0 // pred_check_branch
    %391 = sbr.rel (0) target = $region25
  $region24: #{bottleneck_forward.8} parent=0 // pred_region
    _
  $region25: #{bottleneck_forward.8} parent=0 // pred_fallthru
    _

// kernel: bottleneck_forward.9
$region0: #{bottleneck_forward.9}
  #allocation0 [shape = 'u32[]', space=smem, size = 0x4, offset = 0x4, fixed_abs, tag = 'smem constant byte address 0x4 - core index']
  #allocation1 [shape = 'u32[144,128]{1,0:T(1,128)}', space=vmem, size = 0x12000, scoped, tag = 'internal scratch']
  %s0 = inlined_call_operand.vmem [shape: bf16[128,128], index: 0, kind: input, shape index: {}]
  %s1 = inlined_call_operand.vmem [shape: f32[1,128], index: 1, kind: input, shape index: {}]
  %s2 = inlined_call_operand.vmem [shape: f32[1,128], index: 2, kind: input, shape index: {}]
  %s3 = inlined_call_operand.vmem [shape: bf16[128,128], index: 3, kind: input, shape index: {}]
  %s4 = inlined_call_operand.vmem [shape: f32[1,128], index: 4, kind: input, shape index: {}]
  %s5 = inlined_call_operand.vmem [shape: f32[1,128], index: 5, kind: input, shape index: {}]
  %s6 = inlined_call_operand.hbm [shape: f32[128,128], index: 6, kind: output, shape index: {}]
  %s7 = sld [smem:[#allocation0]]
  $region34: #{bottleneck_forward.9} parent=0
    _
  %s9 = ssub.s32 1, %s7
  %s10 = scalar_select 0, %s9, %s7
  $region1: #{bottleneck_forward.9} parent=0
    #allocation2 [shape = 'u8[65536]{0}', space=vmem, size = 0x10000, scoped, tag = 'output window, operand 0, single buffered']
    #allocation3 [shape = 's32[1]{0}', space=sflag, size = 0x4, scoped, tag = 'scoped memory for bottleneck_forward.9']
    %11 = vsyncpa [#allocation3], 0
    // Predicated region
    $region2: #{bottleneck_forward.9} parent=1 // pred_check
      _
    $region3: #{bottleneck_forward.9} parent=1 // pred_check_branch
      %13 = sbr.rel (0) target = $region5
    $region4: #{bottleneck_forward.9} parent=1 // pred_region
      _
    $region5: #{bottleneck_forward.9} parent=1 // pred_fallthru
      _
    // Predicated region
    $region6: #{bottleneck_forward.9} parent=1 // pred_check
      _
    $region7: #{bottleneck_forward.9} parent=1 // pred_check_branch
      %15 = sbr.rel (0) target = $region9
    $region8: #{bottleneck_forward.9} parent=1 // pred_region
      _
    $region9: #{bottleneck_forward.9} parent=1 // pred_fallthru
      _
    // Predicated region
    $region10: #{bottleneck_forward.9} parent=1 // pred_check
      _
    $region11: #{bottleneck_forward.9} parent=1 // pred_check_branch
      %17 = sbr.rel (0) target = $region13
    $region12: #{bottleneck_forward.9} parent=1 // pred_region
      _
    $region13: #{bottleneck_forward.9} parent=1 // pred_fallthru
      _
    // Predicated region
    $region14: #{bottleneck_forward.9} parent=1 // pred_check
      _
    $region15: #{bottleneck_forward.9} parent=1 // pred_check_branch
      %19 = sbr.rel (0) target = $region17
    $region16: #{bottleneck_forward.9} parent=1 // pred_region
      _
    $region17: #{bottleneck_forward.9} parent=1 // pred_fallthru
      _
    // Predicated region
    $region18: #{bottleneck_forward.9} parent=1 // pred_check
      _
    $region19: #{bottleneck_forward.9} parent=1 // pred_check_branch
      %21 = sbr.rel (0) target = $region21
    $region20: #{bottleneck_forward.9} parent=1 // pred_region
      _
    $region21: #{bottleneck_forward.9} parent=1 // pred_fallthru
      _
    // Predicated region
    $region22: #{bottleneck_forward.9} parent=1 // pred_check
      _
    $region23: #{bottleneck_forward.9} parent=1 // pred_check_branch
      %23 = sbr.rel (0) target = $region25
    $region24: #{bottleneck_forward.9} parent=1 // pred_region
      _
    $region25: #{bottleneck_forward.9} parent=1 // pred_fallthru
      _
    %v24 = vld [vmem:[%s0] sm:$0xf]
    %v25 = vld [vmem:[%s0 + $0x4] sm:$0xf]
    %v26 = vld [vmem:[%s0 + $0x8] sm:$0xf]
    %v27 = vld [vmem:[%s0 + $0xc] sm:$0xf]
    %v28 = vld [vmem:[%s0 + $0x10] sm:$0xf]
    %v29 = vld [vmem:[%s0 + $0x14] sm:$0xf]
    %v30 = vld [vmem:[%s0 + $0x18] sm:$0xf]
    %v31 = vld [vmem:[%s0 + $0x1c] sm:$0xf]
    %v32 = vld [vmem:[%s0 + $0x20] sm:$0xf]
    %v33 = vld [vmem:[%s0 + $0x24] sm:$0xf]
    %v34 = vld [vmem:[%s0 + $0x28] sm:$0xf]
    %v35 = vld [vmem:[%s0 + $0x2c] sm:$0xf]
    %v36 = vld [vmem:[%s0 + $0x30] sm:$0xf]
    %v37 = vld [vmem:[%s0 + $0x34] sm:$0xf]
    %v38 = vld [vmem:[%s0 + $0x38] sm:$0xf]
    %v39 = vld [vmem:[%s0 + $0x3c] sm:$0xf]
    %v40 = vunpack.c.l.bf16 %v24
    %v41 = vunpack.c.l.bf16 %v25
    %v42 = vunpack.c.l.bf16 %v26
    %v43 = vunpack.c.l.bf16 %v27
    %v44 = vunpack.c.l.bf16 %v28
    %v45 = vunpack.c.l.bf16 %v29
    %v46 = vunpack.c.l.bf16 %v30
    %v47 = vunpack.c.l.bf16 %v31
    %v48 = vunpack.c.l.bf16 %v32
    %v49 = vunpack.c.l.bf16 %v33
    %v50 = vunpack.c.l.bf16 %v34
    %v51 = vunpack.c.l.bf16 %v35
    %v52 = vunpack.c.l.bf16 %v36
    %v53 = vunpack.c.l.bf16 %v37
    %v54 = vunpack.c.l.bf16 %v38
    %v55 = vunpack.c.l.bf16 %v39
    %v56 = vld [vmem:[%s1] sm:$0x1]
    %v58 = vlaneseq
    %v59 = vshrl.u32 %v58, 7
    %v60 = vsub.s32 0, %v59
    %v61 = vrot.slane %v56, %v60
    %v63 = vmul.f32 %v40, %v61
    %v64 = vmul.f32 %v41, %v61
    %v65 = vmul.f32 %v42, %v61
    %v66 = vmul.f32 %v43, %v61
    %v67 = vmul.f32 %v44, %v61
    %v68 = vmul.f32 %v45, %v61
    %v69 = vmul.f32 %v46, %v61
    %v70 = vmul.f32 %v47, %v61
    %v71 = vmul.f32 %v48, %v61
    %v72 = vmul.f32 %v49, %v61
    %v73 = vmul.f32 %v50, %v61
    %v74 = vmul.f32 %v51, %v61
    %v75 = vmul.f32 %v52, %v61
    %v76 = vmul.f32 %v53, %v61
    %v77 = vmul.f32 %v54, %v61
    %v78 = vmul.f32 %v55, %v61
    %v79 = vld [vmem:[%s2] sm:$0x1]
    %v81 = vlaneseq
    %v82 = vshrl.u32 %v81, 7
    %v83 = vsub.s32 0, %v82
    %v84 = vrot.slane %v79, %v83
    %v86 = vadd.f32 %v63, %v84
    %v87 = vadd.f32 %v64, %v84
    %v88 = vadd.f32 %v65, %v84
    %v89 = vadd.f32 %v66, %v84
    %v90 = vadd.f32 %v67, %v84
    %v91 = vadd.f32 %v68, %v84
    %v92 = vadd.f32 %v69, %v84
    %v93 = vadd.f32 %v70, %v84
    %v94 = vadd.f32 %v71, %v84
    %v95 = vadd.f32 %v72, %v84
    %v96 = vadd.f32 %v73, %v84
    %v97 = vadd.f32 %v74, %v84
    %v98 = vadd.f32 %v75, %v84
    %v99 = vadd.f32 %v76, %v84
    %v100 = vadd.f32 %v77, %v84
    %v101 = vadd.f32 %v78, %v84
    %v102 = vld [vmem:[%s3] sm:$0xf]
    %v103 = vld [vmem:[%s3 + $0x4] sm:$0xf]
    %v104 = vld [vmem:[%s3 + $0x8] sm:$0xf]
    %v105 = vld [vmem:[%s3 + $0xc] sm:$0xf]
    %v106 = vld [vmem:[%s3 + $0x10] sm:$0xf]
    %v107 = vld [vmem:[%s3 + $0x14] sm:$0xf]
    %v108 = vld [vmem:[%s3 + $0x18] sm:$0xf]
    %v109 = vld [vmem:[%s3 + $0x1c] sm:$0xf]
    %v110 = vld [vmem:[%s3 + $0x20] sm:$0xf]
    %v111 = vld [vmem:[%s3 + $0x24] sm:$0xf]
    %v112 = vld [vmem:[%s3 + $0x28] sm:$0xf]
    %v113 = vld [vmem:[%s3 + $0x2c] sm:$0xf]
    %v114 = vld [vmem:[%s3 + $0x30] sm:$0xf]
    %v115 = vld [vmem:[%s3 + $0x34] sm:$0xf]
    %v116 = vld [vmem:[%s3 + $0x38] sm:$0xf]
    %v117 = vld [vmem:[%s3 + $0x3c] sm:$0xf]
    %v118 = vunpack.c.l.bf16 %v102
    %v119 = vunpack.c.l.bf16 %v103
    %v120 = vunpack.c.l.bf16 %v104
    %v121 = vunpack.c.l.bf16 %v105
    %v122 = vunpack.c.l.bf16 %v106
    %v123 = vunpack.c.l.bf16 %v107
    %v124 = vunpack.c.l.bf16 %v108
    %v125 = vunpack.c.l.bf16 %v109
    %v126 = vunpack.c.l.bf16 %v110
    %v127 = vunpack.c.l.bf16 %v111
    %v128 = vunpack.c.l.bf16 %v112
    %v129 = vunpack.c.l.bf16 %v113
    %v130 = vunpack.c.l.bf16 %v114
    %v131 = vunpack.c.l.bf16 %v115
    %v132 = vunpack.c.l.bf16 %v116
    %v133 = vunpack.c.l.bf16 %v117
    %v134 = vld [vmem:[%s4] sm:$0x1]
    %v136 = vlaneseq
    %v137 = vshrl.u32 %v136, 7
    %v138 = vsub.s32 0, %v137
    %v139 = vrot.slane %v134, %v138
    %v141 = vmul.f32 %v118, %v139
    %v142 = vmul.f32 %v119, %v139
    %v143 = vmul.f32 %v120, %v139
    %v144 = vmul.f32 %v121, %v139
    %v145 = vmul.f32 %v122, %v139
    %v146 = vmul.f32 %v123, %v139
    %v147 = vmul.f32 %v124, %v139
    %v148 = vmul.f32 %v125, %v139
    %v149 = vmul.f32 %v126, %v139
    %v150 = vmul.f32 %v127, %v139
    %v151 = vmul.f32 %v128, %v139
    %v152 = vmul.f32 %v129, %v139
    %v153 = vmul.f32 %v130, %v139
    %v154 = vmul.f32 %v131, %v139
    %v155 = vmul.f32 %v132, %v139
    %v156 = vmul.f32 %v133, %v139
    %v157 = vld [vmem:[%s5] sm:$0x1]
    %v159 = vlaneseq
    %v160 = vshrl.u32 %v159, 7
    %v161 = vsub.s32 0, %v160
    %v162 = vrot.slane %v157, %v161
    %v164 = vadd.f32 %v141, %v162
    %v165 = vadd.f32 %v142, %v162
    %v166 = vadd.f32 %v143, %v162
    %v167 = vadd.f32 %v144, %v162
    %v168 = vadd.f32 %v145, %v162
    %v169 = vadd.f32 %v146, %v162
    %v170 = vadd.f32 %v147, %v162
    %v171 = vadd.f32 %v148, %v162
    %v172 = vadd.f32 %v149, %v162
    %v173 = vadd.f32 %v150, %v162
    %v174 = vadd.f32 %v151, %v162
    %v175 = vadd.f32 %v152, %v162
    %v176 = vadd.f32 %v153, %v162
    %v177 = vadd.f32 %v154, %v162
    %v178 = vadd.f32 %v155, %v162
    %v179 = vadd.f32 %v156, %v162
    %v180 = vadd.f32 %v86, %v164
    %v181 = vadd.f32 %v87, %v165
    %v182 = vadd.f32 %v88, %v166
    %v183 = vadd.f32 %v89, %v167
    %v184 = vadd.f32 %v90, %v168
    %v185 = vadd.f32 %v91, %v169
    %v186 = vadd.f32 %v92, %v170
    %v187 = vadd.f32 %v93, %v171
    %v188 = vadd.f32 %v94, %v172
    %v189 = vadd.f32 %v95, %v173
    %v190 = vadd.f32 %v96, %v174
    %v191 = vadd.f32 %v97, %v175
    %v192 = vadd.f32 %v98, %v176
    %v193 = vadd.f32 %v99, %v177
    %v194 = vadd.f32 %v100, %v178
    %v195 = vadd.f32 %v101, %v179
    %v196 = vmax.f32 %v180, 0.0
    %v197 = vmax.f32 %v181, 0.0
    %v198 = vmax.f32 %v182, 0.0
    %v199 = vmax.f32 %v183, 0.0
    %v200 = vmax.f32 %v184, 0.0
    %v201 = vmax.f32 %v185, 0.0
    %v202 = vmax.f32 %v186, 0.0
    %v203 = vmax.f32 %v187, 0.0
    %v204 = vmax.f32 %v188, 0.0
    %v205 = vmax.f32 %v189, 0.0
    %v206 = vmax.f32 %v190, 0.0
    %v207 = vmax.f32 %v191, 0.0
    %v208 = vmax.f32 %v192, 0.0
    %v209 = vmax.f32 %v193, 0.0
    %v210 = vmax.f32 %v194, 0.0
    %v211 = vmax.f32 %v195, 0.0
    %212 = vst [vmem:[#allocation2] sm:$0xff] %v196
    %213 = vst [vmem:[#allocation2 + $0x8] sm:$0xff] %v197
    %214 = vst [vmem:[#allocation2 + $0x10] sm:$0xff] %v198
    %215 = vst [vmem:[#allocation2 + $0x18] sm:$0xff] %v199
    %216 = vst [vmem:[#allocation2 + $0x20] sm:$0xff] %v200
    %217 = vst [vmem:[#allocation2 + $0x28] sm:$0xff] %v201
    %218 = vst [vmem:[#allocation2 + $0x30] sm:$0xff] %v202
    %219 = vst [vmem:[#allocation2 + $0x38] sm:$0xff] %v203
    %220 = vst [vmem:[#allocation2 + $0x40] sm:$0xff] %v204
    %221 = vst [vmem:[#allocation2 + $0x48] sm:$0xff] %v205
    %222 = vst [vmem:[#allocation2 + $0x50] sm:$0xff] %v206
    %223 = vst [vmem:[#allocation2 + $0x58] sm:$0xff] %v207
    %224 = vst [vmem:[#allocation2 + $0x60] sm:$0xff] %v208
    %225 = vst [vmem:[#allocation2 + $0x68] sm:$0xff] %v209
    %226 = vst [vmem:[#allocation2 + $0x70] sm:$0xff] %v210
    %227 = vst [vmem:[#allocation2 + $0x78] sm:$0xff] %v211
    // Predicated region
    $region26: #{bottleneck_forward.9} parent=1 // pred_check
      _
    $region27: #{bottleneck_forward.9} parent=1 // pred_check_branch
      %229 = sbr.rel (0) target = $region29
    $region28: #{bottleneck_forward.9} parent=1 // pred_region
      %s231 = ssub.s32 2048, 2048
      %232 = vsyncadd [#allocation3], %s231
      %s233 = sshll.u32 [#allocation2], 4
      %s234 = int_to_ptr.vmem [resolvable:$true] %s233
      %239 = dma.vmem_to_hbm [thread:$0]  %s234, 2048, %s6, [#allocation3], 128, 128, 8
    $region29: #{bottleneck_forward.9} parent=1 // pred_fallthru
      _
    // Predicated region
    $region30: #{bottleneck_forward.9} parent=1 // pred_check
      _
    $region31: #{bottleneck_forward.9} parent=1 // pred_check_branch
      %241 = sbr.rel (0) target = $region33
    $region32: #{bottleneck_forward.9} parent=1 // pred_region
      %242 = dma.done [#allocation3], 2048
    $region33: #{bottleneck_forward.9} parent=1 // pred_fallthru
      _
    %243 = vsyncpa [#allocation3], 1

</llo_original>
